<compile_context>
chip_gen: v6e
topology: v6e:2x2x1
jax: 0.10.0
libtpu: 0.0.40
codegen_flags: <defaults>
</compile_context>

<pallas_src>
import jax
import jax.numpy as jnp
from jax.experimental import pallas as pl
from jax.experimental.pallas import tpu as pltpu

IN_FEATURES = 28 * 28   # 784
HIDDEN = 1000
OUT_FEATURES = 10

HIDDEN_P = 1024         # HIDDEN padded to a multiple of 128
OUT_P = 128             # OUT_FEATURES padded to a multiple of 128


def _round_up(x, m):
    return (x + m - 1) // m * m


def _cdiv(a, b):
    return (a + b - 1) // b


def _net1_kernel(x_ref, w1_ref, b1_ref, w2_ref, b2_ref, o_ref):
    # x arrives as f32; cast to bf16 in-kernel (cheap VPU work hidden under the MXU)
    # so the wrapper never writes a bf16 copy of x back to HBM.
    xb = x_ref[...].astype(jnp.bfloat16)
    # fc1: (TB, 784)bf16 @ (784, 1024)bf16 -> f32 accumulate on the MXU
    h = jnp.dot(xb, w1_ref[...], preferred_element_type=jnp.float32)
    # bias + ReLU in f32 (v5e VPU has no bf16 path)
    h = jnp.maximum(h + b1_ref[...], 0.0)
    # fc2: (TB, 1024)bf16 @ (1024, 128)bf16 -> f32 accumulate
    out = jnp.dot(h.astype(jnp.bfloat16), w2_ref[...],
                  preferred_element_type=jnp.float32)
    o_ref[...] = (out + b2_ref[...]).astype(o_ref.dtype)


def prepare_params(w1, b1, w2, b2):
    """Pad to lane-aligned shapes and cast weights to bf16 (done once, offline).

    Inputs are PyTorch-equivalent math in (in, out) layout:
      w1: (784, 1000) f32, b1: (1, 1000) f32, w2: (1000, 10) f32, b2: (1, 10) f32
    Zero-padded columns of w1 / rows of w2 / bias pads are neutral for the math.
    """
    w1_p = jnp.zeros((IN_FEATURES, HIDDEN_P), jnp.float32).at[:, :HIDDEN].set(w1)
    b1_p = jnp.zeros((1, HIDDEN_P), jnp.float32).at[:, :HIDDEN].set(b1)
    w2_p = jnp.zeros((HIDDEN_P, OUT_P), jnp.float32).at[:HIDDEN, :OUT_FEATURES].set(w2)
    b2_p = jnp.zeros((1, OUT_P), jnp.float32).at[:, :OUT_FEATURES].set(b2)
    return (w1_p.astype(jnp.bfloat16), b1_p,
            w2_p.astype(jnp.bfloat16), b2_p)


@jax.jit
def net1_forward(x, w1_p, b1_p, w2_p, b2_p):
    """x: (B, 1, 28, 28) or (B, 28, 28) f32 -> (B, 10) f32.

    w1_p/b1_p/w2_p/b2_p are the padded/cast params from prepare_params.
    """
    B = x.shape[0]
    x_flat = x.reshape(B, -1)          # Flatten: metadata-only, stays f32
    assert x_flat.shape[1] == IN_FEATURES

    # Batch tile: multiple of 8, capped at 512 (~85% of HBM roofline in measured
    # tile sweeps; ~11 MB VMEM incl. double-buffering at TB=512 with f32 x).
    # Chosen ~ceil(B/2) so the grid has >= 2 steps whenever B > 8 (megacore
    # sharding on v7x) and the edge tile stays balanced. No batch padding:
    # Pallas pads edge-block reads and masks edge-block writes.
    TB = max(8, min(512, _round_up(_cdiv(B, 2), 8)))
    grid = (_cdiv(B, TB),)

    flops = 2 * B * (IN_FEATURES * HIDDEN_P + HIDDEN_P * OUT_P)
    bytes_accessed = (x_flat.size * 4 + w1_p.size * 2 + b1_p.size * 4
                      + w2_p.size * 2 + b2_p.size * 4 + B * OUT_P * 4)

    out_padded = pl.pallas_call(
        _net1_kernel,
        out_shape=jax.ShapeDtypeStruct((B, OUT_P), jnp.float32),
        grid_spec=pltpu.PrefetchScalarGridSpec(
            num_scalar_prefetch=0,
            grid=grid,
            in_specs=[
                # x: one batch tile per grid step (pipelined / double-buffered), f32
                pl.BlockSpec((TB, IN_FEATURES), lambda i: (i, 0)),
                # weights & biases: constant index -> VMEM-resident across steps
                pl.BlockSpec((IN_FEATURES, HIDDEN_P), lambda i: (0, 0)),
                pl.BlockSpec((1, HIDDEN_P), lambda i: (0, 0)),
                pl.BlockSpec((HIDDEN_P, OUT_P), lambda i: (0, 0)),
                pl.BlockSpec((1, OUT_P), lambda i: (0, 0)),
            ],
            out_specs=pl.BlockSpec((TB, OUT_P), lambda i: (i, 0)),
        ),
        compiler_params=pltpu.CompilerParams(
            dimension_semantics=("parallel",),      # megacore sharding on v7x
            vmem_limit_bytes=32 * 1024 * 1024,      # keep TB=512 viable on v5e
        ),
        cost_estimate=pl.CostEstimate(
            flops=flops, transcendentals=0, bytes_accessed=bytes_accessed),
    )(x_flat, w1_p, b1_p, w2_p, b2_p)

    return out_padded[:, :OUT_FEATURES]


def init_params(key):
    """Deterministic synthetic parameters matching nn.Linear shapes.

    PyTorch stores fc1.weight as (1000, 784); we store the transposed
    (784, 1000) layout so the kernel computes x @ W directly.
    """
    k1, k2, k3, k4 = jax.random.split(key, 4)
    bound1 = 1.0 / (IN_FEATURES ** 0.5)
    bound2 = 1.0 / (HIDDEN ** 0.5)
    w1 = jax.random.uniform(k1, (IN_FEATURES, HIDDEN), jnp.float32, -bound1, bound1)
    b1 = jax.random.uniform(k2, (1, HIDDEN), jnp.float32, -bound1, bound1)
    w2 = jax.random.uniform(k3, (HIDDEN, OUT_FEATURES), jnp.float32, -bound2, bound2)
    b2 = jax.random.uniform(k4, (1, OUT_FEATURES), jnp.float32, -bound2, bound2)
    return w1, b1, w2, b2


if __name__ == "__main__":
    key = jax.random.PRNGKey(0)
    k_x, k_p = jax.random.split(key)

    # MNIST-like input, NCHW, small batch
    B = 2
    x = jax.random.normal(k_x, (B, 1, 28, 28), dtype=jnp.float32)
    w1, b1, w2, b2 = init_params(k_p)
    w1_p, b1_p, w2_p, b2_p = prepare_params(w1, b1, w2, b2)

    out = net1_forward(x, w1_p, b1_p, w2_p, b2_p)
    out = jax.block_until_ready(out)
    assert out.shape == (B, OUT_FEATURES)

    x_flat = x.reshape(B, -1)

    # Reference with the same bf16 cast/weights (should match very closely).
    xb = x_flat.astype(jnp.bfloat16)
    h_ref = jnp.maximum(
        jnp.dot(xb, w1_p, preferred_element_type=jnp.float32) + b1_p, 0.0)
    ref_bf16 = (jnp.dot(h_ref.astype(jnp.bfloat16), w2_p,
                        preferred_element_type=jnp.float32) + b2_p)[:, :OUT_FEATURES]
    assert jnp.allclose(out, ref_bf16, atol=1e-2, rtol=1e-2)

    # Full-precision f32 reference (semantics check, looser tolerance for bf16 cast).
    ref_f32 = jnp.maximum(x_flat @ w1 + b1, 0.0) @ w2 + b2
    assert jnp.allclose(out, ref_f32, atol=5e-2, rtol=5e-2)

    print("KERNEL_OK")
</pallas_src>

<mosaic_0001>
module attributes {stable_mosaic.version = 11 : i64} {
  func.func @_net1_kernel(%arg0: i32, %arg1: memref<8x784xf32, #tpu.memory_space<vmem>>, %arg2: memref<784x1024xbf16, #tpu.memory_space<vmem>>, %arg3: memref<1x1024xf32, #tpu.memory_space<vmem>>, %arg4: memref<1024x128xbf16, #tpu.memory_space<vmem>>, %arg5: memref<1x128xf32, #tpu.memory_space<vmem>>, %arg6: memref<8x128xf32, #tpu.memory_space<vmem>>) attributes {dimension_semantics = [#tpu.dimension_semantics<parallel>], iteration_bounds = array<i64: 1>, scalar_prefetch = 0 : i64, scratch_operands = 0 : i64, tpu.core_type = #tpu.core_type<tc>, window_params = [{transform_indices = @transform_0, window_bounds = array<i64: 8, 784>}, {pipeline_mode = #tpu.pipeline_mode<synchronous>, transform_indices = @transform_1, window_bounds = array<i64: 784, 1024>}, {pipeline_mode = #tpu.pipeline_mode<synchronous>, transform_indices = @transform_2, window_bounds = array<i64: 1, 1024>}, {pipeline_mode = #tpu.pipeline_mode<synchronous>, transform_indices = @transform_3, window_bounds = array<i64: 1024, 128>}, {pipeline_mode = #tpu.pipeline_mode<synchronous>, transform_indices = @transform_4, window_bounds = array<i64: 1, 128>}, {transform_indices = @transform_5, window_bounds = array<i64: 8, 128>}]} {
    %c0 = arith.constant 0 : index
    %c0_0 = arith.constant 0 : index
    %0 = vector.load %arg1[%c0, %c0_0] : memref<8x784xf32, #tpu.memory_space<vmem>>, vector<8x784xf32>
    %1 = arith.truncf %0 : vector<8x784xf32> to vector<8x784xbf16>
    %c0_1 = arith.constant 0 : index
    %c0_2 = arith.constant 0 : index
    %2 = vector.load %arg2[%c0_1, %c0_2] : memref<784x1024xbf16, #tpu.memory_space<vmem>>, vector<784x1024xbf16>
    %cst = arith.constant dense<0.000000e+00> : vector<8x1024xf32>
    %3 = tpu.matmul %1, %2, %cst {dimension_numbers = #tpu.dot_dimension_numbers<[1], [0], [0], [1], [0, 0, 1, 1], [], []>} : vector<8x784xbf16>, vector<784x1024xbf16>, vector<8x1024xf32> -> vector<8x1024xf32>
    %c0_3 = arith.constant 0 : index
    %c0_4 = arith.constant 0 : index
    %4 = vector.load %arg3[%c0_3, %c0_4] : memref<1x1024xf32, #tpu.memory_space<vmem>>, vector<1x1024xf32>
    %5 = vector.broadcast %4 : vector<1x1024xf32> to vector<8x1024xf32>
    %6 = arith.addf %3, %5 : vector<8x1024xf32>
    %cst_5 = arith.constant 0.000000e+00 : f32
    %7 = vector.broadcast %cst_5 : f32 to vector<8x1024xf32>
    %8 = arith.maximumf %6, %7 : vector<8x1024xf32>
    %9 = arith.truncf %8 : vector<8x1024xf32> to vector<8x1024xbf16>
    %c0_6 = arith.constant 0 : index
    %c0_7 = arith.constant 0 : index
    %10 = vector.load %arg4[%c0_6, %c0_7] : memref<1024x128xbf16, #tpu.memory_space<vmem>>, vector<1024x128xbf16>
    %cst_8 = arith.constant dense<0.000000e+00> : vector<8x128xf32>
    %11 = tpu.matmul %9, %10, %cst_8 {dimension_numbers = #tpu.dot_dimension_numbers<[1], [0], [0], [1], [0, 0, 1, 1], [], []>} : vector<8x1024xbf16>, vector<1024x128xbf16>, vector<8x128xf32> -> vector<8x128xf32>
    %c0_9 = arith.constant 0 : index
    %c0_10 = arith.constant 0 : index
    %12 = vector.load %arg5[%c0_9, %c0_10] : memref<1x128xf32, #tpu.memory_space<vmem>>, vector<1x128xf32>
    %13 = vector.broadcast %12 : vector<1x128xf32> to vector<8x128xf32>
    %14 = arith.addf %11, %13 : vector<8x128xf32>
    %c0_11 = arith.constant 0 : index
    %c0_12 = arith.constant 0 : index
    %15 = vector.load %arg6[%c0_11, %c0_12] : memref<8x128xf32, #tpu.memory_space<vmem>>, vector<8x128xf32>
    tpu.vector_store %arg6[%c0_11, %c0_12], %14 {strides = array<i32>} : memref<8x128xf32, #tpu.memory_space<vmem>>, vector<8x128xf32>,
    return
  }
  func.func @transform_0(%arg0: i32) -> (i32, i32) {
    %c0_i32 = arith.constant 0 : i32
    %c0_i32_0 = arith.constant 0 : i32
    return %arg0, %c0_i32 : i32, i32
  }
  func.func @transform_1(%arg0: i32) -> (i32, i32) {
    %c0_i32 = arith.constant 0 : i32
    %c0_i32_0 = arith.constant 0 : i32
    %c0_i32_1 = arith.constant 0 : i32
    return %c0_i32, %c0_i32_0 : i32, i32
  }
  func.func @transform_2(%arg0: i32) -> (i32, i32) {
    %c0_i32 = arith.constant 0 : i32
    %c0_i32_0 = arith.constant 0 : i32
    %c0_i32_1 = arith.constant 0 : i32
    return %c0_i32, %c0_i32_0 : i32, i32
  }
  func.func @transform_3(%arg0: i32) -> (i32, i32) {
    %c0_i32 = arith.constant 0 : i32
    %c0_i32_0 = arith.constant 0 : i32
    %c0_i32_1 = arith.constant 0 : i32
    return %c0_i32, %c0_i32_0 : i32, i32
  }
  func.func @transform_4(%arg0: i32) -> (i32, i32) {
    %c0_i32 = arith.constant 0 : i32
    %c0_i32_0 = arith.constant 0 : i32
    %c0_i32_1 = arith.constant 0 : i32
    return %c0_i32, %c0_i32_0 : i32, i32
  }
  func.func @transform_5(%arg0: i32) -> (i32, i32) {
    %c0_i32 = arith.constant 0 : i32
    %c0_i32_0 = arith.constant 0 : i32
    return %arg0, %c0_i32 : i32, i32
  }
}

</mosaic_0001>

<llo_original>
// kernel: net1_forward.1
$region0: #{net1_forward.1}
  #allocation0 [shape = 'u32[]', space=smem, size = 0x4, offset = 0x4, fixed_abs, tag = 'smem constant byte address 0x4 - core index']
  #allocation1 [shape = 'u32[144,128]{1,0:T(1,128)}', space=vmem, size = 0x12000, scoped, tag = 'internal scratch']
  %s0 = inlined_call_operand.vmem [shape: f32[2,784], index: 0, kind: input, shape index: {}]
  %s1 = inlined_call_operand.hbm [shape: bf16[784,1024], index: 1, kind: input, shape index: {}]
  %s2 = inlined_call_operand.hbm [shape: f32[1,1024], index: 2, kind: input, shape index: {}]
  %s3 = inlined_call_operand.hbm [shape: bf16[1024,128], index: 3, kind: input, shape index: {}]
  %s4 = inlined_call_operand.hbm [shape: f32[1,128], index: 4, kind: input, shape index: {}]
  %s5 = inlined_call_operand.hbm [shape: f32[2,128], index: 5, kind: output, shape index: {}]
  %s6 = sld [smem:[#allocation0]]
  $region46: #{net1_forward.1} parent=0
    _
  %s8 = ssub.s32 1, %s6
  %s9 = scalar_select 0, %s8, %s6
  $region1: #{net1_forward.1} parent=0
    #allocation2 [shape = 'u8[1605632]{0}', space=vmem, size = 0x188000, scoped, tag = 'input window, operand 1, single buffered']
    #allocation3 [shape = 's32[1]{0}', space=sflag, size = 0x4, scoped, tag = 'scoped memory for net1_forward.1']
    #allocation4 [shape = 's32[1]{0}', space=sflag, size = 0x4, scoped, tag = 'scoped memory for net1_forward.1']
    #allocation5 [shape = 'u8[4096]{0}', space=vmem, size = 0x1000, scoped, tag = 'input window, operand 2, single buffered']
    #allocation6 [shape = 's32[1]{0}', space=sflag, size = 0x4, scoped, tag = 'scoped memory for net1_forward.1']
    #allocation7 [shape = 'u8[262144]{0}', space=vmem, size = 0x40000, scoped, tag = 'input window, operand 3, single buffered']
    #allocation8 [shape = 'u8[512]{0}', space=vmem, size = 0x400, scoped, tag = 'input window, operand 4, single buffered']
    #allocation9 [shape = 's32[1]{0}', space=sflag, size = 0x4, scoped, tag = 'scoped memory for net1_forward.1']
    #allocation10 [shape = 'u8[4096]{0}', space=vmem, size = 0x1000, scoped, tag = 'output window, operand 0, single buffered']
    %10 = vsyncpa [#allocation3], 0
    %11 = vsyncpa [#allocation6], 0
    %12 = vsyncpa [#allocation9], 0
    %13 = vsyncpa [#allocation4], 0
    // Predicated region
    $region2: #{net1_forward.1} parent=1 // pred_check
      _
    $region3: #{net1_forward.1} parent=1 // pred_check_branch
      %15 = sbr.rel (0) target = $region5
    $region4: #{net1_forward.1} parent=1 // pred_region
      _
    $region5: #{net1_forward.1} parent=1 // pred_fallthru
      _
    // Predicated region
    $region6: #{net1_forward.1} parent=1 // pred_check
      _
    $region7: #{net1_forward.1} parent=1 // pred_check_branch
      %17 = sbr.rel (0) target = $region9
    $region8: #{net1_forward.1} parent=1 // pred_region
      %s19 = ssub.s32 50176, 50176
      %20 = vsyncadd [#allocation3], %s19
      %s21 = sshll.u32 [#allocation2], 4
      %s22 = int_to_ptr.vmem [resolvable:$true] %s21
      %27 = dma.hbm_to_vmem [thread:$0]  %s1, 50176, %s22, [#allocation3], 512, 512, 32
    $region9: #{net1_forward.1} parent=1 // pred_fallthru
      _
    // Predicated region
    $region10: #{net1_forward.1} parent=1 // pred_check
      _
    $region11: #{net1_forward.1} parent=1 // pred_check_branch
      %29 = sbr.rel (0) target = $region13
    $region12: #{net1_forward.1} parent=1 // pred_region
      %s31 = ssub.s32 128, 128
      %32 = vsyncadd [#allocation6], %s31
      %s34 = sshll.u32 [#allocation5], 4
      %s35 = int_to_ptr.vmem [resolvable:$true] %s34
      %37 = dma.hbm_to_vmem [thread:$0]  %s2, 128, %s35, [#allocation6]
    $region13: #{net1_forward.1} parent=1 // pred_fallthru
      _
    // Predicated region
    $region14: #{net1_forward.1} parent=1 // pred_check
      _
    $region15: #{net1_forward.1} parent=1 // pred_check_branch
      %39 = sbr.rel (0) target = $region17
    $region16: #{net1_forward.1} parent=1 // pred_region
      %s41 = ssub.s32 8192, 8192
      %42 = vsyncadd [#allocation6], %s41
      %s43 = sshll.u32 [#allocation7], 4
      %s44 = int_to_ptr.vmem [resolvable:$true] %s43
      %49 = dma.hbm_to_vmem [thread:$0]  %s3, 8192, %s44, [#allocation6], 64, 64, 4
    $region17: #{net1_forward.1} parent=1 // pred_fallthru
      _
    // Predicated region
    $region18: #{net1_forward.1} parent=1 // pred_check
      _
    $region19: #{net1_forward.1} parent=1 // pred_check_branch
      %51 = sbr.rel (0) target = $region21
    $region20: #{net1_forward.1} parent=1 // pred_region
      %s53 = ssub.s32 16, 16
      %54 = vsyncadd [#allocation9], %s53
      %s56 = sshll.u32 [#allocation8], 4
      %s57 = int_to_ptr.vmem [resolvable:$true] %s56
      %59 = dma.hbm_to_vmem [thread:$0]  %s4, 16, %s57, [#allocation9]
    $region21: #{net1_forward.1} parent=1 // pred_fallthru
      _
    // Predicated region
    $region22: #{net1_forward.1} parent=1 // pred_check
      _
    $region23: #{net1_forward.1} parent=1 // pred_check_branch
      %61 = sbr.rel (0) target = $region25
    $region24: #{net1_forward.1} parent=1 // pred_region
      %62 = dma.done [#allocation3], 50176
    $region25: #{net1_forward.1} parent=1 // pred_fallthru
      _
    // Predicated region
    $region26: #{net1_forward.1} parent=1 // pred_check
      _
    $region27: #{net1_forward.1} parent=1 // pred_check_branch
      %64 = sbr.rel (0) target = $region29
    $region28: #{net1_forward.1} parent=1 // pred_region
      %65 = dma.done [#allocation6], 128
    $region29: #{net1_forward.1} parent=1 // pred_fallthru
      _
    // Predicated region
    $region30: #{net1_forward.1} parent=1 // pred_check
      _
    $region31: #{net1_forward.1} parent=1 // pred_check_branch
      %67 = sbr.rel (0) target = $region33
    $region32: #{net1_forward.1} parent=1 // pred_region
      %68 = dma.done [#allocation6], 8192
    $region33: #{net1_forward.1} parent=1 // pred_fallthru
      _
    // Predicated region
    $region34: #{net1_forward.1} parent=1 // pred_check
      _
    $region35: #{net1_forward.1} parent=1 // pred_check_branch
      %70 = sbr.rel (0) target = $region37
    $region36: #{net1_forward.1} parent=1 // pred_region
      %71 = dma.done [#allocation9], 16
    $region37: #{net1_forward.1} parent=1 // pred_fallthru
      _
    %v73 = vld [vmem:[%s0] sm:$0xff]
    %v74 = vld [vmem:[%s0 + $0x8] sm:$0x3f]
    %v75 = vld [vmem:[%s0 + $0xe] sm:$0xff]
    %v76 = vld [vmem:[%s0 + $0x16] sm:$0x3f]
    %v77 = vld [vmem:[%s0 + $0x1c] sm:$0xff]
    %v78 = vld [vmem:[%s0 + $0x24] sm:$0x3f]
    %v79 = vld [vmem:[%s0 + $0x2a] sm:$0xff]
    %v80 = vld [vmem:[%s0 + $0x32] sm:$0x3f]
    %v89 = vcombine.low %v73, %v75
    %v90 = vcombine.high %v73, %v75
    %v91 = vcombine.low %v77, %v79
    %v92 = vcombine.high %v77, %v79
    %v94 = vunpack.c.l.s4 1983009808
    %v95 = vunpack.c.0.s8 %v94
    %v96 = vlaneseq
    %v97 = vshrl.u32 %v96, 7
    %v98 = vsub.s32 %v95, %v97
    %v99 = vrot.slane %v89, %v98
    %v101 = vunpack.c.l.s4 1983009808
    %v102 = vunpack.c.0.s8 %v101
    %v103 = vlaneseq
    %v104 = vshrl.u32 %v103, 7
    %v105 = vsub.s32 %v102, %v104
    %v106 = vrot.slane %v90, %v105
    %v108 = vunpack.c.l.s4 1983009808
    %v109 = vunpack.c.0.s8 %v108
    %v110 = vlaneseq
    %v111 = vshrl.u32 %v110, 7
    %v112 = vsub.s32 %v109, %v111
    %v113 = vrot.slane %v91, %v112
    %v115 = vunpack.c.l.s4 1983009808
    %v116 = vunpack.c.0.s8 %v115
    %v117 = vlaneseq
    %v118 = vshrl.u32 %v117, 7
    %v119 = vsub.s32 %v116, %v118
    %v120 = vrot.slane %v92, %v119
    %v121 = vcombine.low %v99, %v113
    %v122 = vcombine.high %v99, %v113
    %v123 = vcombine.low %v106, %v120
    %v124 = vcombine.high %v106, %v120
    %v125 = vcombine.low %v74, %v76
    %v126 = vcombine.high %v74, %v76
    %v127 = vcombine.low %v78, %v80
    %v128 = vcombine.high %v78, %v80
    %v130 = vunpack.c.l.s4 1983009808
    %v131 = vunpack.c.0.s8 %v130
    %v132 = vlaneseq
    %v133 = vshrl.u32 %v132, 7
    %v134 = vsub.s32 %v131, %v133
    %v135 = vrot.slane %v125, %v134
    %v137 = vunpack.c.l.s4 1983009808
    %v138 = vunpack.c.0.s8 %v137
    %v139 = vlaneseq
    %v140 = vshrl.u32 %v139, 7
    %v141 = vsub.s32 %v138, %v140
    %v142 = vrot.slane %v126, %v141
    %v144 = vunpack.c.l.s4 1983009808
    %v145 = vunpack.c.0.s8 %v144
    %v146 = vlaneseq
    %v147 = vshrl.u32 %v146, 7
    %v148 = vsub.s32 %v145, %v147
    %v149 = vrot.slane %v127, %v148
    %v151 = vunpack.c.l.s4 1983009808
    %v152 = vunpack.c.0.s8 %v151
    %v153 = vlaneseq
    %v154 = vshrl.u32 %v153, 7
    %v155 = vsub.s32 %v152, %v154
    %v156 = vrot.slane %v128, %v155
    %v157 = vcombine.low %v135, %v149
    %v158 = vcombine.high %v135, %v149
    %v159 = vcombine.low %v142, %v156
    %v167 = vpack.c.bf16 %v121, %v121
    %v168 = vpack.c.bf16 %v122, %v122
    %v169 = vpack.c.bf16 %v123, %v123
    %v170 = vpack.c.bf16 %v124, %v124
    %v171 = vpack.c.bf16 %v157, %v157
    %v172 = vpack.c.bf16 %v158, %v158
    %v173 = vpack.c.bf16 %v159, %v159
    %v174 = vld [vmem:[#allocation2] sm:$0xff]
    %v175 = vld [vmem:[#allocation2 + $0x8] sm:$0xff]
    %v176 = vld [vmem:[#allocation2 + $0x10] sm:$0xff]
    %v177 = vld [vmem:[#allocation2 + $0x18] sm:$0xff]
    %v178 = vld [vmem:[#allocation2 + $0x20] sm:$0xff]
    %v179 = vld [vmem:[#allocation2 + $0x28] sm:$0xff]
    %v180 = vld [vmem:[#allocation2 + $0x30] sm:$0xff]
    %v181 = vld [vmem:[#allocation2 + $0x38] sm:$0xff]
    %v182 = vld [vmem:[#allocation2 + $0x40] sm:$0xff]
    %v183 = vld [vmem:[#allocation2 + $0x48] sm:$0xff]
    %v184 = vld [vmem:[#allocation2 + $0x50] sm:$0xff]
    %v185 = vld [vmem:[#allocation2 + $0x58] sm:$0xff]
    %v186 = vld [vmem:[#allocation2 + $0x60] sm:$0xff]
    %v187 = vld [vmem:[#allocation2 + $0x68] sm:$0xff]
    %v188 = vld [vmem:[#allocation2 + $0x70] sm:$0xff]
    %v189 = vld [vmem:[#allocation2 + $0x78] sm:$0xff]
    %v190 = vld [vmem:[#allocation2 + $0x80] sm:$0xff]
    %v191 = vld [vmem:[#allocation2 + $0x88] sm:$0xff]
    %v192 = vld [vmem:[#allocation2 + $0x90] sm:$0xff]
    %v193 = vld [vmem:[#allocation2 + $0x98] sm:$0xff]
    %v194 = vld [vmem:[#allocation2 + $0xa0] sm:$0xff]
    %v195 = vld [vmem:[#allocation2 + $0xa8] sm:$0xff]
    %v196 = vld [vmem:[#allocation2 + $0xb0] sm:$0xff]
    %v197 = vld [vmem:[#allocation2 + $0xb8] sm:$0xff]
    %v198 = vld [vmem:[#allocation2 + $0xc0] sm:$0xff]
    %v199 = vld [vmem:[#allocation2 + $0xc8] sm:$0xff]
    %v200 = vld [vmem:[#allocation2 + $0xd0] sm:$0xff]
    %v201 = vld [vmem:[#allocation2 + $0xd8] sm:$0xff]
    %v202 = vld [vmem:[#allocation2 + $0xe0] sm:$0xff]
    %v203 = vld [vmem:[#allocation2 + $0xe8] sm:$0xff]
    %v204 = vld [vmem:[#allocation2 + $0xf0] sm:$0xff]
    %v205 = vld [vmem:[#allocation2 + $0xf8] sm:$0xff]
    %v206 = vld [vmem:[#allocation2 + $0x100] sm:$0xff]
    %v207 = vld [vmem:[#allocation2 + $0x108] sm:$0xff]
    %v208 = vld [vmem:[#allocation2 + $0x110] sm:$0xff]
    %v209 = vld [vmem:[#allocation2 + $0x118] sm:$0xff]
    %v210 = vld [vmem:[#allocation2 + $0x120] sm:$0xff]
    %v211 = vld [vmem:[#allocation2 + $0x128] sm:$0xff]
    %v212 = vld [vmem:[#allocation2 + $0x130] sm:$0xff]
    %v213 = vld [vmem:[#allocation2 + $0x138] sm:$0xff]
    %v214 = vld [vmem:[#allocation2 + $0x140] sm:$0xff]
    %v215 = vld [vmem:[#allocation2 + $0x148] sm:$0xff]
    %v216 = vld [vmem:[#allocation2 + $0x150] sm:$0xff]
    %v217 = vld [vmem:[#allocation2 + $0x158] sm:$0xff]
    %v218 = vld [vmem:[#allocation2 + $0x160] sm:$0xff]
    %v219 = vld [vmem:[#allocation2 + $0x168] sm:$0xff]
    %v220 = vld [vmem:[#allocation2 + $0x170] sm:$0xff]
    %v221 = vld [vmem:[#allocation2 + $0x178] sm:$0xff]
    %v222 = vld [vmem:[#allocation2 + $0x180] sm:$0xff]
    %v223 = vld [vmem:[#allocation2 + $0x188] sm:$0xff]
    %v224 = vld [vmem:[#allocation2 + $0x190] sm:$0xff]
    %v225 = vld [vmem:[#allocation2 + $0x198] sm:$0xff]
    %v226 = vld [vmem:[#allocation2 + $0x1a0] sm:$0xff]
    %v227 = vld [vmem:[#allocation2 + $0x1a8] sm:$0xff]
    %v228 = vld [vmem:[#allocation2 + $0x1b0] sm:$0xff]
    %v229 = vld [vmem:[#allocation2 + $0x1b8] sm:$0xff]
    %v230 = vld [vmem:[#allocation2 + $0x1c0] sm:$0xff]
    %v231 = vld [vmem:[#allocation2 + $0x1c8] sm:$0xff]
    %v232 = vld [vmem:[#allocation2 + $0x1d0] sm:$0xff]
    %v233 = vld [vmem:[#allocation2 + $0x1d8] sm:$0xff]
    %v234 = vld [vmem:[#allocation2 + $0x1e0] sm:$0xff]
    %v235 = vld [vmem:[#allocation2 + $0x1e8] sm:$0xff]
    %v236 = vld [vmem:[#allocation2 + $0x1f0] sm:$0xff]
    %v237 = vld [vmem:[#allocation2 + $0x1f8] sm:$0xff]
    %v238 = vld [vmem:[#allocation2 + $0x200] sm:$0xff]
    %v239 = vld [vmem:[#allocation2 + $0x208] sm:$0xff]
    %v240 = vld [vmem:[#allocation2 + $0x210] sm:$0xff]
    %v241 = vld [vmem:[#allocation2 + $0x218] sm:$0xff]
    %v242 = vld [vmem:[#allocation2 + $0x220] sm:$0xff]
    %v243 = vld [vmem:[#allocation2 + $0x228] sm:$0xff]
    %v244 = vld [vmem:[#allocation2 + $0x230] sm:$0xff]
    %v245 = vld [vmem:[#allocation2 + $0x238] sm:$0xff]
    %v246 = vld [vmem:[#allocation2 + $0x240] sm:$0xff]
    %v247 = vld [vmem:[#allocation2 + $0x248] sm:$0xff]
    %v248 = vld [vmem:[#allocation2 + $0x250] sm:$0xff]
    %v249 = vld [vmem:[#allocation2 + $0x258] sm:$0xff]
    %v250 = vld [vmem:[#allocation2 + $0x260] sm:$0xff]
    %v251 = vld [vmem:[#allocation2 + $0x268] sm:$0xff]
    %v252 = vld [vmem:[#allocation2 + $0x270] sm:$0xff]
    %v253 = vld [vmem:[#allocation2 + $0x278] sm:$0xff]
    %v254 = vld [vmem:[#allocation2 + $0x280] sm:$0xff]
    %v255 = vld [vmem:[#allocation2 + $0x288] sm:$0xff]
    %v256 = vld [vmem:[#allocation2 + $0x290] sm:$0xff]
    %v257 = vld [vmem:[#allocation2 + $0x298] sm:$0xff]
    %v258 = vld [vmem:[#allocation2 + $0x2a0] sm:$0xff]
    %v259 = vld [vmem:[#allocation2 + $0x2a8] sm:$0xff]
    %v260 = vld [vmem:[#allocation2 + $0x2b0] sm:$0xff]
    %v261 = vld [vmem:[#allocation2 + $0x2b8] sm:$0xff]
    %v262 = vld [vmem:[#allocation2 + $0x2c0] sm:$0xff]
    %v263 = vld [vmem:[#allocation2 + $0x2c8] sm:$0xff]
    %v264 = vld [vmem:[#allocation2 + $0x2d0] sm:$0xff]
    %v265 = vld [vmem:[#allocation2 + $0x2d8] sm:$0xff]
    %v266 = vld [vmem:[#allocation2 + $0x2e0] sm:$0xff]
    %v267 = vld [vmem:[#allocation2 + $0x2e8] sm:$0xff]
    %v268 = vld [vmem:[#allocation2 + $0x2f0] sm:$0xff]
    %v269 = vld [vmem:[#allocation2 + $0x2f8] sm:$0xff]
    %v270 = vld [vmem:[#allocation2 + $0x300] sm:$0xff]
    %v271 = vld [vmem:[#allocation2 + $0x308] sm:$0xff]
    %v272 = vld [vmem:[#allocation2 + $0x310] sm:$0xff]
    %v273 = vld [vmem:[#allocation2 + $0x318] sm:$0xff]
    %v274 = vld [vmem:[#allocation2 + $0x320] sm:$0xff]
    %v275 = vld [vmem:[#allocation2 + $0x328] sm:$0xff]
    %v276 = vld [vmem:[#allocation2 + $0x330] sm:$0xff]
    %v277 = vld [vmem:[#allocation2 + $0x338] sm:$0xff]
    %v278 = vld [vmem:[#allocation2 + $0x340] sm:$0xff]
    %v279 = vld [vmem:[#allocation2 + $0x348] sm:$0xff]
    %v280 = vld [vmem:[#allocation2 + $0x350] sm:$0xff]
    %v281 = vld [vmem:[#allocation2 + $0x358] sm:$0xff]
    %v282 = vld [vmem:[#allocation2 + $0x360] sm:$0xff]
    %v283 = vld [vmem:[#allocation2 + $0x368] sm:$0xff]
    %v284 = vld [vmem:[#allocation2 + $0x370] sm:$0xff]
    %v285 = vld [vmem:[#allocation2 + $0x378] sm:$0xff]
    %v286 = vld [vmem:[#allocation2 + $0x380] sm:$0xff]
    %v287 = vld [vmem:[#allocation2 + $0x388] sm:$0xff]
    %v288 = vld [vmem:[#allocation2 + $0x390] sm:$0xff]
    %v289 = vld [vmem:[#allocation2 + $0x398] sm:$0xff]
    %v290 = vld [vmem:[#allocation2 + $0x3a0] sm:$0xff]
    %v291 = vld [vmem:[#allocation2 + $0x3a8] sm:$0xff]
    %v292 = vld [vmem:[#allocation2 + $0x3b0] sm:$0xff]
    %v293 = vld [vmem:[#allocation2 + $0x3b8] sm:$0xff]
    %v294 = vld [vmem:[#allocation2 + $0x3c0] sm:$0xff]
    %v295 = vld [vmem:[#allocation2 + $0x3c8] sm:$0xff]
    %v296 = vld [vmem:[#allocation2 + $0x3d0] sm:$0xff]
    %v297 = vld [vmem:[#allocation2 + $0x3d8] sm:$0xff]
    %v298 = vld [vmem:[#allocation2 + $0x3e0] sm:$0xff]
    %v299 = vld [vmem:[#allocation2 + $0x3e8] sm:$0xff]
    %v300 = vld [vmem:[#allocation2 + $0x3f0] sm:$0xff]
    %v301 = vld [vmem:[#allocation2 + $0x3f8] sm:$0xff]
    %v302 = vld [vmem:[#allocation2 + $0x400] sm:$0xff]
    %v303 = vld [vmem:[#allocation2 + $0x408] sm:$0xff]
    %v304 = vld [vmem:[#allocation2 + $0x410] sm:$0xff]
    %v305 = vld [vmem:[#allocation2 + $0x418] sm:$0xff]
    %v306 = vld [vmem:[#allocation2 + $0x420] sm:$0xff]
    %v307 = vld [vmem:[#allocation2 + $0x428] sm:$0xff]
    %v308 = vld [vmem:[#allocation2 + $0x430] sm:$0xff]
    %v309 = vld [vmem:[#allocation2 + $0x438] sm:$0xff]
    %v310 = vld [vmem:[#allocation2 + $0x440] sm:$0xff]
    %v311 = vld [vmem:[#allocation2 + $0x448] sm:$0xff]
    %v312 = vld [vmem:[#allocation2 + $0x450] sm:$0xff]
    %v313 = vld [vmem:[#allocation2 + $0x458] sm:$0xff]
    %v314 = vld [vmem:[#allocation2 + $0x460] sm:$0xff]
    %v315 = vld [vmem:[#allocation2 + $0x468] sm:$0xff]
    %v316 = vld [vmem:[#allocation2 + $0x470] sm:$0xff]
    %v317 = vld [vmem:[#allocation2 + $0x478] sm:$0xff]
    %v318 = vld [vmem:[#allocation2 + $0x480] sm:$0xff]
    %v319 = vld [vmem:[#allocation2 + $0x488] sm:$0xff]
    %v320 = vld [vmem:[#allocation2 + $0x490] sm:$0xff]
    %v321 = vld [vmem:[#allocation2 + $0x498] sm:$0xff]
    %v322 = vld [vmem:[#allocation2 + $0x4a0] sm:$0xff]
    %v323 = vld [vmem:[#allocation2 + $0x4a8] sm:$0xff]
    %v324 = vld [vmem:[#allocation2 + $0x4b0] sm:$0xff]
    %v325 = vld [vmem:[#allocation2 + $0x4b8] sm:$0xff]
    %v326 = vld [vmem:[#allocation2 + $0x4c0] sm:$0xff]
    %v327 = vld [vmem:[#allocation2 + $0x4c8] sm:$0xff]
    %v328 = vld [vmem:[#allocation2 + $0x4d0] sm:$0xff]
    %v329 = vld [vmem:[#allocation2 + $0x4d8] sm:$0xff]
    %v330 = vld [vmem:[#allocation2 + $0x4e0] sm:$0xff]
    %v331 = vld [vmem:[#allocation2 + $0x4e8] sm:$0xff]
    %v332 = vld [vmem:[#allocation2 + $0x4f0] sm:$0xff]
    %v333 = vld [vmem:[#allocation2 + $0x4f8] sm:$0xff]
    %v334 = vld [vmem:[#allocation2 + $0x500] sm:$0xff]
    %v335 = vld [vmem:[#allocation2 + $0x508] sm:$0xff]
    %v336 = vld [vmem:[#allocation2 + $0x510] sm:$0xff]
    %v337 = vld [vmem:[#allocation2 + $0x518] sm:$0xff]
    %v338 = vld [vmem:[#allocation2 + $0x520] sm:$0xff]
    %v339 = vld [vmem:[#allocation2 + $0x528] sm:$0xff]
    %v340 = vld [vmem:[#allocation2 + $0x530] sm:$0xff]
    %v341 = vld [vmem:[#allocation2 + $0x538] sm:$0xff]
    %v342 = vld [vmem:[#allocation2 + $0x540] sm:$0xff]
    %v343 = vld [vmem:[#allocation2 + $0x548] sm:$0xff]
    %v344 = vld [vmem:[#allocation2 + $0x550] sm:$0xff]
    %v345 = vld [vmem:[#allocation2 + $0x558] sm:$0xff]
    %v346 = vld [vmem:[#allocation2 + $0x560] sm:$0xff]
    %v347 = vld [vmem:[#allocation2 + $0x568] sm:$0xff]
    %v348 = vld [vmem:[#allocation2 + $0x570] sm:$0xff]
    %v349 = vld [vmem:[#allocation2 + $0x578] sm:$0xff]
    %v350 = vld [vmem:[#allocation2 + $0x580] sm:$0xff]
    %v351 = vld [vmem:[#allocation2 + $0x588] sm:$0xff]
    %v352 = vld [vmem:[#allocation2 + $0x590] sm:$0xff]
    %v353 = vld [vmem:[#allocation2 + $0x598] sm:$0xff]
    %v354 = vld [vmem:[#allocation2 + $0x5a0] sm:$0xff]
    %v355 = vld [vmem:[#allocation2 + $0x5a8] sm:$0xff]
    %v356 = vld [vmem:[#allocation2 + $0x5b0] sm:$0xff]
    %v357 = vld [vmem:[#allocation2 + $0x5b8] sm:$0xff]
    %v358 = vld [vmem:[#allocation2 + $0x5c0] sm:$0xff]
    %v359 = vld [vmem:[#allocation2 + $0x5c8] sm:$0xff]
    %v360 = vld [vmem:[#allocation2 + $0x5d0] sm:$0xff]
    %v361 = vld [vmem:[#allocation2 + $0x5d8] sm:$0xff]
    %v362 = vld [vmem:[#allocation2 + $0x5e0] sm:$0xff]
    %v363 = vld [vmem:[#allocation2 + $0x5e8] sm:$0xff]
    %v364 = vld [vmem:[#allocation2 + $0x5f0] sm:$0xff]
    %v365 = vld [vmem:[#allocation2 + $0x5f8] sm:$0xff]
    %v366 = vld [vmem:[#allocation2 + $0x600] sm:$0xff]
    %v367 = vld [vmem:[#allocation2 + $0x608] sm:$0xff]
    %v368 = vld [vmem:[#allocation2 + $0x610] sm:$0xff]
    %v369 = vld [vmem:[#allocation2 + $0x618] sm:$0xff]
    %v370 = vld [vmem:[#allocation2 + $0x620] sm:$0xff]
    %v371 = vld [vmem:[#allocation2 + $0x628] sm:$0xff]
    %v372 = vld [vmem:[#allocation2 + $0x630] sm:$0xff]
    %v373 = vld [vmem:[#allocation2 + $0x638] sm:$0xff]
    %v374 = vld [vmem:[#allocation2 + $0x640] sm:$0xff]
    %v375 = vld [vmem:[#allocation2 + $0x648] sm:$0xff]
    %v376 = vld [vmem:[#allocation2 + $0x650] sm:$0xff]
    %v377 = vld [vmem:[#allocation2 + $0x658] sm:$0xff]
    %v378 = vld [vmem:[#allocation2 + $0x660] sm:$0xff]
    %v379 = vld [vmem:[#allocation2 + $0x668] sm:$0xff]
    %v380 = vld [vmem:[#allocation2 + $0x670] sm:$0xff]
    %v381 = vld [vmem:[#allocation2 + $0x678] sm:$0xff]
    %v382 = vld [vmem:[#allocation2 + $0x680] sm:$0xff]
    %v383 = vld [vmem:[#allocation2 + $0x688] sm:$0xff]
    %v384 = vld [vmem:[#allocation2 + $0x690] sm:$0xff]
    %v385 = vld [vmem:[#allocation2 + $0x698] sm:$0xff]
    %v386 = vld [vmem:[#allocation2 + $0x6a0] sm:$0xff]
    %v387 = vld [vmem:[#allocation2 + $0x6a8] sm:$0xff]
    %v388 = vld [vmem:[#allocation2 + $0x6b0] sm:$0xff]
    %v389 = vld [vmem:[#allocation2 + $0x6b8] sm:$0xff]
    %v390 = vld [vmem:[#allocation2 + $0x6c0] sm:$0xff]
    %v391 = vld [vmem:[#allocation2 + $0x6c8] sm:$0xff]
    %v392 = vld [vmem:[#allocation2 + $0x6d0] sm:$0xff]
    %v393 = vld [vmem:[#allocation2 + $0x6d8] sm:$0xff]
    %v394 = vld [vmem:[#allocation2 + $0x6e0] sm:$0xff]
    %v395 = vld [vmem:[#allocation2 + $0x6e8] sm:$0xff]
    %v396 = vld [vmem:[#allocation2 + $0x6f0] sm:$0xff]
    %v397 = vld [vmem:[#allocation2 + $0x6f8] sm:$0xff]
    %v398 = vld [vmem:[#allocation2 + $0x700] sm:$0xff]
    %v399 = vld [vmem:[#allocation2 + $0x708] sm:$0xff]
    %v400 = vld [vmem:[#allocation2 + $0x710] sm:$0xff]
    %v401 = vld [vmem:[#allocation2 + $0x718] sm:$0xff]
    %v402 = vld [vmem:[#allocation2 + $0x720] sm:$0xff]
    %v403 = vld [vmem:[#allocation2 + $0x728] sm:$0xff]
    %v404 = vld [vmem:[#allocation2 + $0x730] sm:$0xff]
    %v405 = vld [vmem:[#allocation2 + $0x738] sm:$0xff]
    %v406 = vld [vmem:[#allocation2 + $0x740] sm:$0xff]
    %v407 = vld [vmem:[#allocation2 + $0x748] sm:$0xff]
    %v408 = vld [vmem:[#allocation2 + $0x750] sm:$0xff]
    %v409 = vld [vmem:[#allocation2 + $0x758] sm:$0xff]
    %v410 = vld [vmem:[#allocation2 + $0x760] sm:$0xff]
    %v411 = vld [vmem:[#allocation2 + $0x768] sm:$0xff]
    %v412 = vld [vmem:[#allocation2 + $0x770] sm:$0xff]
    %v413 = vld [vmem:[#allocation2 + $0x778] sm:$0xff]
    %v414 = vld [vmem:[#allocation2 + $0x780] sm:$0xff]
    %v415 = vld [vmem:[#allocation2 + $0x788] sm:$0xff]
    %v416 = vld [vmem:[#allocation2 + $0x790] sm:$0xff]
    %v417 = vld [vmem:[#allocation2 + $0x798] sm:$0xff]
    %v418 = vld [vmem:[#allocation2 + $0x7a0] sm:$0xff]
    %v419 = vld [vmem:[#allocation2 + $0x7a8] sm:$0xff]
    %v420 = vld [vmem:[#allocation2 + $0x7b0] sm:$0xff]
    %v421 = vld [vmem:[#allocation2 + $0x7b8] sm:$0xff]
    %v422 = vld [vmem:[#allocation2 + $0x7c0] sm:$0xff]
    %v423 = vld [vmem:[#allocation2 + $0x7c8] sm:$0xff]
    %v424 = vld [vmem:[#allocation2 + $0x7d0] sm:$0xff]
    %v425 = vld [vmem:[#allocation2 + $0x7d8] sm:$0xff]
    %v426 = vld [vmem:[#allocation2 + $0x7e0] sm:$0xff]
    %v427 = vld [vmem:[#allocation2 + $0x7e8] sm:$0xff]
    %v428 = vld [vmem:[#allocation2 + $0x7f0] sm:$0xff]
    %v429 = vld [vmem:[#allocation2 + $0x7f8] sm:$0xff]
    %v430 = vld [vmem:[#allocation2 + $0x800] sm:$0xff]
    %v431 = vld [vmem:[#allocation2 + $0x808] sm:$0xff]
    %v432 = vld [vmem:[#allocation2 + $0x810] sm:$0xff]
    %v433 = vld [vmem:[#allocation2 + $0x818] sm:$0xff]
    %v434 = vld [vmem:[#allocation2 + $0x820] sm:$0xff]
    %v435 = vld [vmem:[#allocation2 + $0x828] sm:$0xff]
    %v436 = vld [vmem:[#allocation2 + $0x830] sm:$0xff]
    %v437 = vld [vmem:[#allocation2 + $0x838] sm:$0xff]
    %v438 = vld [vmem:[#allocation2 + $0x840] sm:$0xff]
    %v439 = vld [vmem:[#allocation2 + $0x848] sm:$0xff]
    %v440 = vld [vmem:[#allocation2 + $0x850] sm:$0xff]
    %v441 = vld [vmem:[#allocation2 + $0x858] sm:$0xff]
    %v442 = vld [vmem:[#allocation2 + $0x860] sm:$0xff]
    %v443 = vld [vmem:[#allocation2 + $0x868] sm:$0xff]
    %v444 = vld [vmem:[#allocation2 + $0x870] sm:$0xff]
    %v445 = vld [vmem:[#allocation2 + $0x878] sm:$0xff]
    %v446 = vld [vmem:[#allocation2 + $0x880] sm:$0xff]
    %v447 = vld [vmem:[#allocation2 + $0x888] sm:$0xff]
    %v448 = vld [vmem:[#allocation2 + $0x890] sm:$0xff]
    %v449 = vld [vmem:[#allocation2 + $0x898] sm:$0xff]
    %v450 = vld [vmem:[#allocation2 + $0x8a0] sm:$0xff]
    %v451 = vld [vmem:[#allocation2 + $0x8a8] sm:$0xff]
    %v452 = vld [vmem:[#allocation2 + $0x8b0] sm:$0xff]
    %v453 = vld [vmem:[#allocation2 + $0x8b8] sm:$0xff]
    %v454 = vld [vmem:[#allocation2 + $0x8c0] sm:$0xff]
    %v455 = vld [vmem:[#allocation2 + $0x8c8] sm:$0xff]
    %v456 = vld [vmem:[#allocation2 + $0x8d0] sm:$0xff]
    %v457 = vld [vmem:[#allocation2 + $0x8d8] sm:$0xff]
    %v458 = vld [vmem:[#allocation2 + $0x8e0] sm:$0xff]
    %v459 = vld [vmem:[#allocation2 + $0x8e8] sm:$0xff]
    %v460 = vld [vmem:[#allocation2 + $0x8f0] sm:$0xff]
    %v461 = vld [vmem:[#allocation2 + $0x8f8] sm:$0xff]
    %v462 = vld [vmem:[#allocation2 + $0x900] sm:$0xff]
    %v463 = vld [vmem:[#allocation2 + $0x908] sm:$0xff]
    %v464 = vld [vmem:[#allocation2 + $0x910] sm:$0xff]
    %v465 = vld [vmem:[#allocation2 + $0x918] sm:$0xff]
    %v466 = vld [vmem:[#allocation2 + $0x920] sm:$0xff]
    %v467 = vld [vmem:[#allocation2 + $0x928] sm:$0xff]
    %v468 = vld [vmem:[#allocation2 + $0x930] sm:$0xff]
    %v469 = vld [vmem:[#allocation2 + $0x938] sm:$0xff]
    %v470 = vld [vmem:[#allocation2 + $0x940] sm:$0xff]
    %v471 = vld [vmem:[#allocation2 + $0x948] sm:$0xff]
    %v472 = vld [vmem:[#allocation2 + $0x950] sm:$0xff]
    %v473 = vld [vmem:[#allocation2 + $0x958] sm:$0xff]
    %v474 = vld [vmem:[#allocation2 + $0x960] sm:$0xff]
    %v475 = vld [vmem:[#allocation2 + $0x968] sm:$0xff]
    %v476 = vld [vmem:[#allocation2 + $0x970] sm:$0xff]
    %v477 = vld [vmem:[#allocation2 + $0x978] sm:$0xff]
    %v478 = vld [vmem:[#allocation2 + $0x980] sm:$0xff]
    %v479 = vld [vmem:[#allocation2 + $0x988] sm:$0xff]
    %v480 = vld [vmem:[#allocation2 + $0x990] sm:$0xff]
    %v481 = vld [vmem:[#allocation2 + $0x998] sm:$0xff]
    %v482 = vld [vmem:[#allocation2 + $0x9a0] sm:$0xff]
    %v483 = vld [vmem:[#allocation2 + $0x9a8] sm:$0xff]
    %v484 = vld [vmem:[#allocation2 + $0x9b0] sm:$0xff]
    %v485 = vld [vmem:[#allocation2 + $0x9b8] sm:$0xff]
    %v486 = vld [vmem:[#allocation2 + $0x9c0] sm:$0xff]
    %v487 = vld [vmem:[#allocation2 + $0x9c8] sm:$0xff]
    %v488 = vld [vmem:[#allocation2 + $0x9d0] sm:$0xff]
    %v489 = vld [vmem:[#allocation2 + $0x9d8] sm:$0xff]
    %v490 = vld [vmem:[#allocation2 + $0x9e0] sm:$0xff]
    %v491 = vld [vmem:[#allocation2 + $0x9e8] sm:$0xff]
    %v492 = vld [vmem:[#allocation2 + $0x9f0] sm:$0xff]
    %v493 = vld [vmem:[#allocation2 + $0x9f8] sm:$0xff]
    %v494 = vld [vmem:[#allocation2 + $0xa00] sm:$0xff]
    %v495 = vld [vmem:[#allocation2 + $0xa08] sm:$0xff]
    %v496 = vld [vmem:[#allocation2 + $0xa10] sm:$0xff]
    %v497 = vld [vmem:[#allocation2 + $0xa18] sm:$0xff]
    %v498 = vld [vmem:[#allocation2 + $0xa20] sm:$0xff]
    %v499 = vld [vmem:[#allocation2 + $0xa28] sm:$0xff]
    %v500 = vld [vmem:[#allocation2 + $0xa30] sm:$0xff]
    %v501 = vld [vmem:[#allocation2 + $0xa38] sm:$0xff]
    %v502 = vld [vmem:[#allocation2 + $0xa40] sm:$0xff]
    %v503 = vld [vmem:[#allocation2 + $0xa48] sm:$0xff]
    %v504 = vld [vmem:[#allocation2 + $0xa50] sm:$0xff]
    %v505 = vld [vmem:[#allocation2 + $0xa58] sm:$0xff]
    %v506 = vld [vmem:[#allocation2 + $0xa60] sm:$0xff]
    %v507 = vld [vmem:[#allocation2 + $0xa68] sm:$0xff]
    %v508 = vld [vmem:[#allocation2 + $0xa70] sm:$0xff]
    %v509 = vld [vmem:[#allocation2 + $0xa78] sm:$0xff]
    %v510 = vld [vmem:[#allocation2 + $0xa80] sm:$0xff]
    %v511 = vld [vmem:[#allocation2 + $0xa88] sm:$0xff]
    %v512 = vld [vmem:[#allocation2 + $0xa90] sm:$0xff]
    %v513 = vld [vmem:[#allocation2 + $0xa98] sm:$0xff]
    %v514 = vld [vmem:[#allocation2 + $0xaa0] sm:$0xff]
    %v515 = vld [vmem:[#allocation2 + $0xaa8] sm:$0xff]
    %v516 = vld [vmem:[#allocation2 + $0xab0] sm:$0xff]
    %v517 = vld [vmem:[#allocation2 + $0xab8] sm:$0xff]
    %v518 = vld [vmem:[#allocation2 + $0xac0] sm:$0xff]
    %v519 = vld [vmem:[#allocation2 + $0xac8] sm:$0xff]
    %v520 = vld [vmem:[#allocation2 + $0xad0] sm:$0xff]
    %v521 = vld [vmem:[#allocation2 + $0xad8] sm:$0xff]
    %v522 = vld [vmem:[#allocation2 + $0xae0] sm:$0xff]
    %v523 = vld [vmem:[#allocation2 + $0xae8] sm:$0xff]
    %v524 = vld [vmem:[#allocation2 + $0xaf0] sm:$0xff]
    %v525 = vld [vmem:[#allocation2 + $0xaf8] sm:$0xff]
    %v526 = vld [vmem:[#allocation2 + $0xb00] sm:$0xff]
    %v527 = vld [vmem:[#allocation2 + $0xb08] sm:$0xff]
    %v528 = vld [vmem:[#allocation2 + $0xb10] sm:$0xff]
    %v529 = vld [vmem:[#allocation2 + $0xb18] sm:$0xff]
    %v530 = vld [vmem:[#allocation2 + $0xb20] sm:$0xff]
    %v531 = vld [vmem:[#allocation2 + $0xb28] sm:$0xff]
    %v532 = vld [vmem:[#allocation2 + $0xb30] sm:$0xff]
    %v533 = vld [vmem:[#allocation2 + $0xb38] sm:$0xff]
    %v534 = vld [vmem:[#allocation2 + $0xb40] sm:$0xff]
    %v535 = vld [vmem:[#allocation2 + $0xb48] sm:$0xff]
    %v536 = vld [vmem:[#allocation2 + $0xb50] sm:$0xff]
    %v537 = vld [vmem:[#allocation2 + $0xb58] sm:$0xff]
    %v538 = vld [vmem:[#allocation2 + $0xb60] sm:$0xff]
    %v539 = vld [vmem:[#allocation2 + $0xb68] sm:$0xff]
    %v540 = vld [vmem:[#allocation2 + $0xb70] sm:$0xff]
    %v541 = vld [vmem:[#allocation2 + $0xb78] sm:$0xff]
    %v542 = vld [vmem:[#allocation2 + $0xb80] sm:$0xff]
    %v543 = vld [vmem:[#allocation2 + $0xb88] sm:$0xff]
    %v544 = vld [vmem:[#allocation2 + $0xb90] sm:$0xff]
    %v545 = vld [vmem:[#allocation2 + $0xb98] sm:$0xff]
    %v546 = vld [vmem:[#allocation2 + $0xba0] sm:$0xff]
    %v547 = vld [vmem:[#allocation2 + $0xba8] sm:$0xff]
    %v548 = vld [vmem:[#allocation2 + $0xbb0] sm:$0xff]
    %v549 = vld [vmem:[#allocation2 + $0xbb8] sm:$0xff]
    %v550 = vld [vmem:[#allocation2 + $0xbc0] sm:$0xff]
    %v551 = vld [vmem:[#allocation2 + $0xbc8] sm:$0xff]
    %v552 = vld [vmem:[#allocation2 + $0xbd0] sm:$0xff]
    %v553 = vld [vmem:[#allocation2 + $0xbd8] sm:$0xff]
    %v554 = vld [vmem:[#allocation2 + $0xbe0] sm:$0xff]
    %v555 = vld [vmem:[#allocation2 + $0xbe8] sm:$0xff]
    %v556 = vld [vmem:[#allocation2 + $0xbf0] sm:$0xff]
    %v557 = vld [vmem:[#allocation2 + $0xbf8] sm:$0xff]
    %v558 = vld [vmem:[#allocation2 + $0xc00] sm:$0xff]
    %v559 = vld [vmem:[#allocation2 + $0xc08] sm:$0xff]
    %v560 = vld [vmem:[#allocation2 + $0xc10] sm:$0xff]
    %v561 = vld [vmem:[#allocation2 + $0xc18] sm:$0xff]
    %v562 = vld [vmem:[#allocation2 + $0xc20] sm:$0xff]
    %v563 = vld [vmem:[#allocation2 + $0xc28] sm:$0xff]
    %v564 = vld [vmem:[#allocation2 + $0xc30] sm:$0xff]
    %v565 = vld [vmem:[#allocation2 + $0xc38] sm:$0xff]
    %v566 = vld [vmem:[#allocation5] sm:$0xff]
    %v568 = vlaneseq
    %v569 = vshrl.u32 %v568, 7
    %v570 = vsub.s32 0, %v569
    %v571 = vrot.slane %v566, %v570
    %v572 = vlaneseq
    %v573 = vshrl.u32 %v572, 7
    %v574 = vsub.s32 1, %v573
    %v575 = vrot.slane %v566, %v574
    %v576 = vlaneseq
    %v577 = vshrl.u32 %v576, 7
    %v578 = vsub.s32 2, %v577
    %v579 = vrot.slane %v566, %v578
    %v580 = vlaneseq
    %v581 = vshrl.u32 %v580, 7
    %v582 = vsub.s32 3, %v581
    %v583 = vrot.slane %v566, %v582
    %v584 = vlaneseq
    %v585 = vshrl.u32 %v584, 7
    %v586 = vsub.s32 4, %v585
    %v587 = vrot.slane %v566, %v586
    %v588 = vlaneseq
    %v589 = vshrl.u32 %v588, 7
    %v590 = vsub.s32 5, %v589
    %v591 = vrot.slane %v566, %v590
    %v592 = vlaneseq
    %v593 = vshrl.u32 %v592, 7
    %v594 = vsub.s32 6, %v593
    %v595 = vrot.slane %v566, %v594
    %v596 = vlaneseq
    %v597 = vshrl.u32 %v596, 7
    %v598 = vsub.s32 7, %v597
    %v599 = vrot.slane %v566, %v598
    %v1000 = vunpack.c.l.b16 %v174
    %v1001 = vunpack.c.h.b16 %v174
    %v1002 = vunpack.c.l.b16 %v175
    %v1003 = vunpack.c.h.b16 %v175
    %v1004 = vunpack.c.l.b16 %v176
    %v1005 = vunpack.c.h.b16 %v176
    %v1006 = vunpack.c.l.b16 %v177
    %v1007 = vunpack.c.h.b16 %v177
    %v1008 = vunpack.c.l.b16 %v178
    %v1009 = vunpack.c.h.b16 %v178
    %v1010 = vunpack.c.l.b16 %v179
    %v1011 = vunpack.c.h.b16 %v179
    %v1012 = vunpack.c.l.b16 %v180
    %v1013 = vunpack.c.h.b16 %v180
    %v1014 = vunpack.c.l.b16 %v181
    %v1015 = vunpack.c.h.b16 %v181
    %v1016 = vunpack.c.l.b16 %v182
    %v1017 = vunpack.c.h.b16 %v182
    %v1018 = vunpack.c.l.b16 %v183
    %v1019 = vunpack.c.h.b16 %v183
    %v1020 = vunpack.c.l.b16 %v184
    %v1021 = vunpack.c.h.b16 %v184
    %v1022 = vunpack.c.l.b16 %v185
    %v1023 = vunpack.c.h.b16 %v185
    %v1024 = vunpack.c.l.b16 %v186
    %v1025 = vunpack.c.h.b16 %v186
    %v1026 = vunpack.c.l.b16 %v187
    %v1027 = vunpack.c.h.b16 %v187
    %v1028 = vunpack.c.l.b16 %v188
    %v1029 = vunpack.c.h.b16 %v188
    %v1030 = vunpack.c.l.b16 %v189
    %v1031 = vunpack.c.h.b16 %v189
    %v1032 = vunpack.c.l.b16 %v190
    %v1033 = vunpack.c.h.b16 %v190
    %v1034 = vunpack.c.l.b16 %v191
    %v1035 = vunpack.c.h.b16 %v191
    %v1036 = vunpack.c.l.b16 %v192
    %v1037 = vunpack.c.h.b16 %v192
    %v1038 = vunpack.c.l.b16 %v193
    %v1039 = vunpack.c.h.b16 %v193
    %v1040 = vunpack.c.l.b16 %v194
    %v1041 = vunpack.c.h.b16 %v194
    %v1042 = vunpack.c.l.b16 %v195
    %v1043 = vunpack.c.h.b16 %v195
    %v1044 = vunpack.c.l.b16 %v196
    %v1045 = vunpack.c.h.b16 %v196
    %v1046 = vunpack.c.l.b16 %v197
    %v1047 = vunpack.c.h.b16 %v197
    %v1048 = vunpack.c.l.b16 %v198
    %v1049 = vunpack.c.h.b16 %v198
    %v1050 = vunpack.c.l.b16 %v199
    %v1051 = vunpack.c.h.b16 %v199
    %v1052 = vunpack.c.l.b16 %v200
    %v1053 = vunpack.c.h.b16 %v200
    %v1054 = vunpack.c.l.b16 %v201
    %v1055 = vunpack.c.h.b16 %v201
    %v1056 = vunpack.c.l.b16 %v202
    %v1057 = vunpack.c.h.b16 %v202
    %v1058 = vunpack.c.l.b16 %v203
    %v1059 = vunpack.c.h.b16 %v203
    %v1060 = vunpack.c.l.b16 %v204
    %v1061 = vunpack.c.h.b16 %v204
    %v1062 = vunpack.c.l.b16 %v205
    %v1063 = vunpack.c.h.b16 %v205
    %v1064 = vunpack.c.l.b16 %v206
    %v1065 = vunpack.c.h.b16 %v206
    %v1066 = vunpack.c.l.b16 %v207
    %v1067 = vunpack.c.h.b16 %v207
    %v1068 = vunpack.c.l.b16 %v208
    %v1069 = vunpack.c.h.b16 %v208
    %v1070 = vunpack.c.l.b16 %v209
    %v1071 = vunpack.c.h.b16 %v209
    %v1072 = vunpack.c.l.b16 %v210
    %v1073 = vunpack.c.h.b16 %v210
    %v1074 = vunpack.c.l.b16 %v211
    %v1075 = vunpack.c.h.b16 %v211
    %v1076 = vunpack.c.l.b16 %v212
    %v1077 = vunpack.c.h.b16 %v212
    %v1078 = vunpack.c.l.b16 %v213
    %v1079 = vunpack.c.h.b16 %v213
    %v1080 = vunpack.c.l.b16 %v214
    %v1081 = vunpack.c.h.b16 %v214
    %v1082 = vunpack.c.l.b16 %v215
    %v1083 = vunpack.c.h.b16 %v215
    %v1084 = vunpack.c.l.b16 %v216
    %v1085 = vunpack.c.h.b16 %v216
    %v1086 = vunpack.c.l.b16 %v217
    %v1087 = vunpack.c.h.b16 %v217
    %v1088 = vunpack.c.l.b16 %v218
    %v1089 = vunpack.c.h.b16 %v218
    %v1090 = vunpack.c.l.b16 %v219
    %v1091 = vunpack.c.h.b16 %v219
    %v1092 = vunpack.c.l.b16 %v220
    %v1093 = vunpack.c.h.b16 %v220
    %v1094 = vunpack.c.l.b16 %v221
    %v1095 = vunpack.c.h.b16 %v221
    %v1096 = vunpack.c.l.b16 %v222
    %v1097 = vunpack.c.h.b16 %v222
    %v1098 = vunpack.c.l.b16 %v223
    %v1099 = vunpack.c.h.b16 %v223
    %v1100 = vunpack.c.l.b16 %v224
    %v1101 = vunpack.c.h.b16 %v224
    %v1102 = vunpack.c.l.b16 %v225
    %v1103 = vunpack.c.h.b16 %v225
    %v1104 = vunpack.c.l.b16 %v226
    %v1105 = vunpack.c.h.b16 %v226
    %v1106 = vunpack.c.l.b16 %v227
    %v1107 = vunpack.c.h.b16 %v227
    %v1108 = vunpack.c.l.b16 %v228
    %v1109 = vunpack.c.h.b16 %v228
    %v1110 = vunpack.c.l.b16 %v229
    %v1111 = vunpack.c.h.b16 %v229
    %v1112 = vunpack.c.l.b16 %v230
    %v1113 = vunpack.c.h.b16 %v230
    %v1114 = vunpack.c.l.b16 %v231
    %v1115 = vunpack.c.h.b16 %v231
    %v1116 = vunpack.c.l.b16 %v232
    %v1117 = vunpack.c.h.b16 %v232
    %v1118 = vunpack.c.l.b16 %v233
    %v1119 = vunpack.c.h.b16 %v233
    %v1120 = vunpack.c.l.b16 %v234
    %v1121 = vunpack.c.h.b16 %v234
    %v1122 = vunpack.c.l.b16 %v235
    %v1123 = vunpack.c.h.b16 %v235
    %v1124 = vunpack.c.l.b16 %v236
    %v1125 = vunpack.c.h.b16 %v236
    %v1126 = vunpack.c.l.b16 %v237
    %v1127 = vunpack.c.h.b16 %v237
    %v1128 = vunpack.c.l.b16 %v238
    %v1129 = vunpack.c.h.b16 %v238
    %v1130 = vunpack.c.l.b16 %v239
    %v1131 = vunpack.c.h.b16 %v239
    %v1132 = vunpack.c.l.b16 %v240
    %v1133 = vunpack.c.h.b16 %v240
    %v1134 = vunpack.c.l.b16 %v241
    %v1135 = vunpack.c.h.b16 %v241
    %v1136 = vunpack.c.l.b16 %v242
    %v1137 = vunpack.c.h.b16 %v242
    %v1138 = vunpack.c.l.b16 %v243
    %v1139 = vunpack.c.h.b16 %v243
    %v1140 = vunpack.c.l.b16 %v244
    %v1141 = vunpack.c.h.b16 %v244
    %v1142 = vunpack.c.l.b16 %v245
    %v1143 = vunpack.c.h.b16 %v245
    %v1144 = vunpack.c.l.b16 %v246
    %v1145 = vunpack.c.h.b16 %v246
    %v1146 = vunpack.c.l.b16 %v247
    %v1147 = vunpack.c.h.b16 %v247
    %v1148 = vunpack.c.l.b16 %v248
    %v1149 = vunpack.c.h.b16 %v248
    %v1150 = vunpack.c.l.b16 %v249
    %v1151 = vunpack.c.h.b16 %v249
    %v1152 = vunpack.c.l.b16 %v250
    %v1153 = vunpack.c.h.b16 %v250
    %v1154 = vunpack.c.l.b16 %v251
    %v1155 = vunpack.c.h.b16 %v251
    %v1156 = vunpack.c.l.b16 %v252
    %v1157 = vunpack.c.h.b16 %v252
    %v1158 = vunpack.c.l.b16 %v253
    %v1159 = vunpack.c.h.b16 %v253
    %v1160 = vunpack.c.l.b16 %v254
    %v1161 = vunpack.c.h.b16 %v254
    %v1162 = vunpack.c.l.b16 %v255
    %v1163 = vunpack.c.h.b16 %v255
    %v1164 = vunpack.c.l.b16 %v256
    %v1165 = vunpack.c.h.b16 %v256
    %v1166 = vunpack.c.l.b16 %v257
    %v1167 = vunpack.c.h.b16 %v257
    %v1168 = vunpack.c.l.b16 %v258
    %v1169 = vunpack.c.h.b16 %v258
    %v1170 = vunpack.c.l.b16 %v259
    %v1171 = vunpack.c.h.b16 %v259
    %v1172 = vunpack.c.l.b16 %v260
    %v1173 = vunpack.c.h.b16 %v260
    %v1174 = vunpack.c.l.b16 %v261
    %v1175 = vunpack.c.h.b16 %v261
    %v1176 = vunpack.c.l.b16 %v262
    %v1177 = vunpack.c.h.b16 %v262
    %v1178 = vunpack.c.l.b16 %v263
    %v1179 = vunpack.c.h.b16 %v263
    %v1180 = vunpack.c.l.b16 %v264
    %v1181 = vunpack.c.h.b16 %v264
    %v1182 = vunpack.c.l.b16 %v265
    %v1183 = vunpack.c.h.b16 %v265
    %v1184 = vunpack.c.l.b16 %v266
    %v1185 = vunpack.c.h.b16 %v266
    %v1186 = vunpack.c.l.b16 %v267
    %v1187 = vunpack.c.h.b16 %v267
    %v1188 = vunpack.c.l.b16 %v268
    %v1189 = vunpack.c.h.b16 %v268
    %v1190 = vunpack.c.l.b16 %v269
    %v1191 = vunpack.c.h.b16 %v269
    %v1192 = vunpack.c.l.b16 %v270
    %v1193 = vunpack.c.h.b16 %v270
    %v1194 = vunpack.c.l.b16 %v271
    %v1195 = vunpack.c.h.b16 %v271
    %v1196 = vunpack.c.l.b16 %v272
    %v1197 = vunpack.c.h.b16 %v272
    %v1198 = vunpack.c.l.b16 %v273
    %v1199 = vunpack.c.h.b16 %v273
    %v1200 = vunpack.c.l.b16 %v274
    %v1201 = vunpack.c.h.b16 %v274
    %v1202 = vunpack.c.l.b16 %v275
    %v1203 = vunpack.c.h.b16 %v275
    %v1204 = vunpack.c.l.b16 %v276
    %v1205 = vunpack.c.h.b16 %v276
    %v1206 = vunpack.c.l.b16 %v277
    %v1207 = vunpack.c.h.b16 %v277
    %v1208 = vunpack.c.l.b16 %v278
    %v1209 = vunpack.c.h.b16 %v278
    %v1210 = vunpack.c.l.b16 %v279
    %v1211 = vunpack.c.h.b16 %v279
    %v1212 = vunpack.c.l.b16 %v280
    %v1213 = vunpack.c.h.b16 %v280
    %v1214 = vunpack.c.l.b16 %v281
    %v1215 = vunpack.c.h.b16 %v281
    %v1216 = vunpack.c.l.b16 %v282
    %v1217 = vunpack.c.h.b16 %v282
    %v1218 = vunpack.c.l.b16 %v283
    %v1219 = vunpack.c.h.b16 %v283
    %v1220 = vunpack.c.l.b16 %v284
    %v1221 = vunpack.c.h.b16 %v284
    %v1222 = vunpack.c.l.b16 %v285
    %v1223 = vunpack.c.h.b16 %v285
    %v1224 = vunpack.c.l.b16 %v286
    %v1225 = vunpack.c.h.b16 %v286
    %v1226 = vunpack.c.l.b16 %v287
    %v1227 = vunpack.c.h.b16 %v287
    %v1228 = vunpack.c.l.b16 %v288
    %v1229 = vunpack.c.h.b16 %v288
    %v1230 = vunpack.c.l.b16 %v289
    %v1231 = vunpack.c.h.b16 %v289
    %v1232 = vunpack.c.l.b16 %v290
    %v1233 = vunpack.c.h.b16 %v290
    %v1234 = vunpack.c.l.b16 %v291
    %v1235 = vunpack.c.h.b16 %v291
    %v1236 = vunpack.c.l.b16 %v292
    %v1237 = vunpack.c.h.b16 %v292
    %v1238 = vunpack.c.l.b16 %v293
    %v1239 = vunpack.c.h.b16 %v293
    %v1240 = vunpack.c.l.b16 %v294
    %v1241 = vunpack.c.h.b16 %v294
    %v1242 = vunpack.c.l.b16 %v295
    %v1243 = vunpack.c.h.b16 %v295
    %v1244 = vunpack.c.l.b16 %v296
    %v1245 = vunpack.c.h.b16 %v296
    %v1246 = vunpack.c.l.b16 %v297
    %v1247 = vunpack.c.h.b16 %v297
    %v1248 = vunpack.c.l.b16 %v298
    %v1249 = vunpack.c.h.b16 %v298
    %v1250 = vunpack.c.l.b16 %v299
    %v1251 = vunpack.c.h.b16 %v299
    %v1252 = vunpack.c.l.b16 %v300
    %v1253 = vunpack.c.h.b16 %v300
    %v1254 = vunpack.c.l.b16 %v301
    %v1255 = vunpack.c.h.b16 %v301
    %v1256 = vunpack.c.l.b16 %v302
    %v1257 = vunpack.c.h.b16 %v302
    %v1258 = vunpack.c.l.b16 %v303
    %v1259 = vunpack.c.h.b16 %v303
    %v1260 = vunpack.c.l.b16 %v304
    %v1261 = vunpack.c.h.b16 %v304
    %v1262 = vunpack.c.l.b16 %v305
    %v1263 = vunpack.c.h.b16 %v305
    %v1264 = vunpack.c.l.b16 %v306
    %v1265 = vunpack.c.h.b16 %v306
    %v1266 = vunpack.c.l.b16 %v307
    %v1267 = vunpack.c.h.b16 %v307
    %v1268 = vunpack.c.l.b16 %v308
    %v1269 = vunpack.c.h.b16 %v308
    %v1270 = vunpack.c.l.b16 %v309
    %v1271 = vunpack.c.h.b16 %v309
    %v1272 = vunpack.c.l.b16 %v310
    %v1273 = vunpack.c.h.b16 %v310
    %v1274 = vunpack.c.l.b16 %v311
    %v1275 = vunpack.c.h.b16 %v311
    %v1276 = vunpack.c.l.b16 %v312
    %v1277 = vunpack.c.h.b16 %v312
    %v1278 = vunpack.c.l.b16 %v313
    %v1279 = vunpack.c.h.b16 %v313
    %v1280 = vunpack.c.l.b16 %v314
    %v1281 = vunpack.c.h.b16 %v314
    %v1282 = vunpack.c.l.b16 %v315
    %v1283 = vunpack.c.h.b16 %v315
    %v1284 = vunpack.c.l.b16 %v316
    %v1285 = vunpack.c.h.b16 %v316
    %v1286 = vunpack.c.l.b16 %v317
    %v1287 = vunpack.c.h.b16 %v317
    %v1288 = vunpack.c.l.b16 %v318
    %v1289 = vunpack.c.h.b16 %v318
    %v1290 = vunpack.c.l.b16 %v319
    %v1291 = vunpack.c.h.b16 %v319
    %v1292 = vunpack.c.l.b16 %v320
    %v1293 = vunpack.c.h.b16 %v320
    %v1294 = vunpack.c.l.b16 %v321
    %v1295 = vunpack.c.h.b16 %v321
    %v1296 = vunpack.c.l.b16 %v322
    %v1297 = vunpack.c.h.b16 %v322
    %v1298 = vunpack.c.l.b16 %v323
    %v1299 = vunpack.c.h.b16 %v323
    %v1300 = vunpack.c.l.b16 %v324
    %v1301 = vunpack.c.h.b16 %v324
    %v1302 = vunpack.c.l.b16 %v325
    %v1303 = vunpack.c.h.b16 %v325
    %v1304 = vunpack.c.l.b16 %v326
    %v1305 = vunpack.c.h.b16 %v326
    %v1306 = vunpack.c.l.b16 %v327
    %v1307 = vunpack.c.h.b16 %v327
    %v1308 = vunpack.c.l.b16 %v328
    %v1309 = vunpack.c.h.b16 %v328
    %v1310 = vunpack.c.l.b16 %v329
    %v1311 = vunpack.c.h.b16 %v329
    %v1312 = vunpack.c.l.b16 %v330
    %v1313 = vunpack.c.h.b16 %v330
    %v1314 = vunpack.c.l.b16 %v331
    %v1315 = vunpack.c.h.b16 %v331
    %v1316 = vunpack.c.l.b16 %v332
    %v1317 = vunpack.c.h.b16 %v332
    %v1318 = vunpack.c.l.b16 %v333
    %v1319 = vunpack.c.h.b16 %v333
    %v1320 = vunpack.c.l.b16 %v334
    %v1321 = vunpack.c.h.b16 %v334
    %v1322 = vunpack.c.l.b16 %v335
    %v1323 = vunpack.c.h.b16 %v335
    %v1324 = vunpack.c.l.b16 %v336
    %v1325 = vunpack.c.h.b16 %v336
    %v1326 = vunpack.c.l.b16 %v337
    %v1327 = vunpack.c.h.b16 %v337
    %v1328 = vunpack.c.l.b16 %v338
    %v1329 = vunpack.c.h.b16 %v338
    %v1330 = vunpack.c.l.b16 %v339
    %v1331 = vunpack.c.h.b16 %v339
    %v1332 = vunpack.c.l.b16 %v340
    %v1333 = vunpack.c.h.b16 %v340
    %v1334 = vunpack.c.l.b16 %v341
    %v1335 = vunpack.c.h.b16 %v341
    %v1336 = vunpack.c.l.b16 %v342
    %v1337 = vunpack.c.h.b16 %v342
    %v1338 = vunpack.c.l.b16 %v343
    %v1339 = vunpack.c.h.b16 %v343
    %v1340 = vunpack.c.l.b16 %v344
    %v1341 = vunpack.c.h.b16 %v344
    %v1342 = vunpack.c.l.b16 %v345
    %v1343 = vunpack.c.h.b16 %v345
    %v1344 = vunpack.c.l.b16 %v346
    %v1345 = vunpack.c.h.b16 %v346
    %v1346 = vunpack.c.l.b16 %v347
    %v1347 = vunpack.c.h.b16 %v347
    %v1348 = vunpack.c.l.b16 %v348
    %v1349 = vunpack.c.h.b16 %v348
    %v1350 = vunpack.c.l.b16 %v349
    %v1351 = vunpack.c.h.b16 %v349
    %v1352 = vunpack.c.l.b16 %v350
    %v1353 = vunpack.c.h.b16 %v350
    %v1354 = vunpack.c.l.b16 %v351
    %v1355 = vunpack.c.h.b16 %v351
    %v1356 = vunpack.c.l.b16 %v352
    %v1357 = vunpack.c.h.b16 %v352
    %v1358 = vunpack.c.l.b16 %v353
    %v1359 = vunpack.c.h.b16 %v353
    %v1360 = vunpack.c.l.b16 %v354
    %v1361 = vunpack.c.h.b16 %v354
    %v1362 = vunpack.c.l.b16 %v355
    %v1363 = vunpack.c.h.b16 %v355
    %v1364 = vunpack.c.l.b16 %v356
    %v1365 = vunpack.c.h.b16 %v356
    %v1366 = vunpack.c.l.b16 %v357
    %v1367 = vunpack.c.h.b16 %v357
    %v1368 = vunpack.c.l.b16 %v358
    %v1369 = vunpack.c.h.b16 %v358
    %v1370 = vunpack.c.l.b16 %v359
    %v1371 = vunpack.c.h.b16 %v359
    %v1372 = vunpack.c.l.b16 %v360
    %v1373 = vunpack.c.h.b16 %v360
    %v1374 = vunpack.c.l.b16 %v361
    %v1375 = vunpack.c.h.b16 %v361
    %v1376 = vunpack.c.l.b16 %v362
    %v1377 = vunpack.c.h.b16 %v362
    %v1378 = vunpack.c.l.b16 %v363
    %v1379 = vunpack.c.h.b16 %v363
    %v1380 = vunpack.c.l.b16 %v364
    %v1381 = vunpack.c.h.b16 %v364
    %v1382 = vunpack.c.l.b16 %v365
    %v1383 = vunpack.c.h.b16 %v365
    %v1384 = vunpack.c.l.b16 %v366
    %v1385 = vunpack.c.h.b16 %v366
    %v1386 = vunpack.c.l.b16 %v367
    %v1387 = vunpack.c.h.b16 %v367
    %v1388 = vunpack.c.l.b16 %v368
    %v1389 = vunpack.c.h.b16 %v368
    %v1390 = vunpack.c.l.b16 %v369
    %v1391 = vunpack.c.h.b16 %v369
    %v1392 = vunpack.c.l.b16 %v370
    %v1393 = vunpack.c.h.b16 %v370
    %v1394 = vunpack.c.l.b16 %v371
    %v1395 = vunpack.c.h.b16 %v371
    %v1396 = vunpack.c.l.b16 %v372
    %v1397 = vunpack.c.h.b16 %v372
    %v1398 = vunpack.c.l.b16 %v373
    %v1399 = vunpack.c.h.b16 %v373
    %v1400 = vunpack.c.l.b16 %v374
    %v1401 = vunpack.c.h.b16 %v374
    %v1402 = vunpack.c.l.b16 %v375
    %v1403 = vunpack.c.h.b16 %v375
    %v1404 = vunpack.c.l.b16 %v376
    %v1405 = vunpack.c.h.b16 %v376
    %v1406 = vunpack.c.l.b16 %v377
    %v1407 = vunpack.c.h.b16 %v377
    %v1408 = vunpack.c.l.b16 %v378
    %v1409 = vunpack.c.h.b16 %v378
    %v1410 = vunpack.c.l.b16 %v379
    %v1411 = vunpack.c.h.b16 %v379
    %v1412 = vunpack.c.l.b16 %v380
    %v1413 = vunpack.c.h.b16 %v380
    %v1414 = vunpack.c.l.b16 %v381
    %v1415 = vunpack.c.h.b16 %v381
    %v1416 = vunpack.c.l.b16 %v382
    %v1417 = vunpack.c.h.b16 %v382
    %v1418 = vunpack.c.l.b16 %v383
    %v1419 = vunpack.c.h.b16 %v383
    %v1420 = vunpack.c.l.b16 %v384
    %v1421 = vunpack.c.h.b16 %v384
    %v1422 = vunpack.c.l.b16 %v385
    %v1423 = vunpack.c.h.b16 %v385
    %v1424 = vunpack.c.l.b16 %v386
    %v1425 = vunpack.c.h.b16 %v386
    %v1426 = vunpack.c.l.b16 %v387
    %v1427 = vunpack.c.h.b16 %v387
    %v1428 = vunpack.c.l.b16 %v388
    %v1429 = vunpack.c.h.b16 %v388
    %v1430 = vunpack.c.l.b16 %v389
    %v1431 = vunpack.c.h.b16 %v389
    %v1432 = vunpack.c.l.b16 %v390
    %v1433 = vunpack.c.h.b16 %v390
    %v1434 = vunpack.c.l.b16 %v391
    %v1435 = vunpack.c.h.b16 %v391
    %v1436 = vunpack.c.l.b16 %v392
    %v1437 = vunpack.c.h.b16 %v392
    %v1438 = vunpack.c.l.b16 %v393
    %v1439 = vunpack.c.h.b16 %v393
    %v1440 = vunpack.c.l.b16 %v394
    %v1441 = vunpack.c.h.b16 %v394
    %v1442 = vunpack.c.l.b16 %v395
    %v1443 = vunpack.c.h.b16 %v395
    %v1444 = vunpack.c.l.b16 %v396
    %v1445 = vunpack.c.h.b16 %v396
    %v1446 = vunpack.c.l.b16 %v397
    %v1447 = vunpack.c.h.b16 %v397
    %v1448 = vunpack.c.l.b16 %v398
    %v1449 = vunpack.c.h.b16 %v398
    %v1450 = vunpack.c.l.b16 %v399
    %v1451 = vunpack.c.h.b16 %v399
    %v1452 = vunpack.c.l.b16 %v400
    %v1453 = vunpack.c.h.b16 %v400
    %v1454 = vunpack.c.l.b16 %v401
    %v1455 = vunpack.c.h.b16 %v401
    %v1456 = vunpack.c.l.b16 %v402
    %v1457 = vunpack.c.h.b16 %v402
    %v1458 = vunpack.c.l.b16 %v403
    %v1459 = vunpack.c.h.b16 %v403
    %v1460 = vunpack.c.l.b16 %v404
    %v1461 = vunpack.c.h.b16 %v404
    %v1462 = vunpack.c.l.b16 %v405
    %v1463 = vunpack.c.h.b16 %v405
    %v1464 = vunpack.c.l.b16 %v406
    %v1465 = vunpack.c.h.b16 %v406
    %v1466 = vunpack.c.l.b16 %v407
    %v1467 = vunpack.c.h.b16 %v407
    %v1468 = vunpack.c.l.b16 %v408
    %v1469 = vunpack.c.h.b16 %v408
    %v1470 = vunpack.c.l.b16 %v409
    %v1471 = vunpack.c.h.b16 %v409
    %v1472 = vunpack.c.l.b16 %v410
    %v1473 = vunpack.c.h.b16 %v410
    %v1474 = vunpack.c.l.b16 %v411
    %v1475 = vunpack.c.h.b16 %v411
    %v1476 = vunpack.c.l.b16 %v412
    %v1477 = vunpack.c.h.b16 %v412
    %v1478 = vunpack.c.l.b16 %v413
    %v1479 = vunpack.c.h.b16 %v413
    %v1480 = vunpack.c.l.b16 %v414
    %v1481 = vunpack.c.h.b16 %v414
    %v1482 = vunpack.c.l.b16 %v415
    %v1483 = vunpack.c.h.b16 %v415
    %v1484 = vunpack.c.l.b16 %v416
    %v1485 = vunpack.c.h.b16 %v416
    %v1486 = vunpack.c.l.b16 %v417
    %v1487 = vunpack.c.h.b16 %v417
    %v1488 = vunpack.c.l.b16 %v418
    %v1489 = vunpack.c.h.b16 %v418
    %v1490 = vunpack.c.l.b16 %v419
    %v1491 = vunpack.c.h.b16 %v419
    %v1492 = vunpack.c.l.b16 %v420
    %v1493 = vunpack.c.h.b16 %v420
    %v1494 = vunpack.c.l.b16 %v421
    %v1495 = vunpack.c.h.b16 %v421
    %v1496 = vunpack.c.l.b16 %v422
    %v1497 = vunpack.c.h.b16 %v422
    %v1498 = vunpack.c.l.b16 %v423
    %v1499 = vunpack.c.h.b16 %v423
    %v1500 = vunpack.c.l.b16 %v424
    %v1501 = vunpack.c.h.b16 %v424
    %v1502 = vunpack.c.l.b16 %v425
    %v1503 = vunpack.c.h.b16 %v425
    %v1504 = vunpack.c.l.b16 %v426
    %v1505 = vunpack.c.h.b16 %v426
    %v1506 = vunpack.c.l.b16 %v427
    %v1507 = vunpack.c.h.b16 %v427
    %v1508 = vunpack.c.l.b16 %v428
    %v1509 = vunpack.c.h.b16 %v428
    %v1510 = vunpack.c.l.b16 %v429
    %v1511 = vunpack.c.h.b16 %v429
    %v1512 = vunpack.c.l.b16 %v430
    %v1513 = vunpack.c.h.b16 %v430
    %v1514 = vunpack.c.l.b16 %v431
    %v1515 = vunpack.c.h.b16 %v431
    %v1516 = vunpack.c.l.b16 %v432
    %v1517 = vunpack.c.h.b16 %v432
    %v1518 = vunpack.c.l.b16 %v433
    %v1519 = vunpack.c.h.b16 %v433
    %v1520 = vunpack.c.l.b16 %v434
    %v1521 = vunpack.c.h.b16 %v434
    %v1522 = vunpack.c.l.b16 %v435
    %v1523 = vunpack.c.h.b16 %v435
    %v1524 = vunpack.c.l.b16 %v436
    %v1525 = vunpack.c.h.b16 %v436
    %v1526 = vunpack.c.l.b16 %v437
    %v1527 = vunpack.c.h.b16 %v437
    %v1528 = vunpack.c.l.b16 %v438
    %v1529 = vunpack.c.h.b16 %v438
    %v1530 = vunpack.c.l.b16 %v439
    %v1531 = vunpack.c.h.b16 %v439
    %v1532 = vunpack.c.l.b16 %v440
    %v1533 = vunpack.c.h.b16 %v440
    %v1534 = vunpack.c.l.b16 %v441
    %v1535 = vunpack.c.h.b16 %v441
    %v1536 = vunpack.c.l.b16 %v442
    %v1537 = vunpack.c.h.b16 %v442
    %v1538 = vunpack.c.l.b16 %v443
    %v1539 = vunpack.c.h.b16 %v443
    %v1540 = vunpack.c.l.b16 %v444
    %v1541 = vunpack.c.h.b16 %v444
    %v1542 = vunpack.c.l.b16 %v445
    %v1543 = vunpack.c.h.b16 %v445
    %v1544 = vunpack.c.l.b16 %v446
    %v1545 = vunpack.c.h.b16 %v446
    %v1546 = vunpack.c.l.b16 %v447
    %v1547 = vunpack.c.h.b16 %v447
    %v1548 = vunpack.c.l.b16 %v448
    %v1549 = vunpack.c.h.b16 %v448
    %v1550 = vunpack.c.l.b16 %v449
    %v1551 = vunpack.c.h.b16 %v449
    %v1552 = vunpack.c.l.b16 %v450
    %v1553 = vunpack.c.h.b16 %v450
    %v1554 = vunpack.c.l.b16 %v451
    %v1555 = vunpack.c.h.b16 %v451
    %v1556 = vunpack.c.l.b16 %v452
    %v1557 = vunpack.c.h.b16 %v452
    %v1558 = vunpack.c.l.b16 %v453
    %v1559 = vunpack.c.h.b16 %v453
    %v1560 = vunpack.c.l.b16 %v454
    %v1561 = vunpack.c.h.b16 %v454
    %v1562 = vunpack.c.l.b16 %v455
    %v1563 = vunpack.c.h.b16 %v455
    %v1564 = vunpack.c.l.b16 %v456
    %v1565 = vunpack.c.h.b16 %v456
    %v1566 = vunpack.c.l.b16 %v457
    %v1567 = vunpack.c.h.b16 %v457
    %v1568 = vunpack.c.l.b16 %v458
    %v1569 = vunpack.c.h.b16 %v458
    %v1570 = vunpack.c.l.b16 %v459
    %v1571 = vunpack.c.h.b16 %v459
    %v1572 = vunpack.c.l.b16 %v460
    %v1573 = vunpack.c.h.b16 %v460
    %v1574 = vunpack.c.l.b16 %v461
    %v1575 = vunpack.c.h.b16 %v461
    %v1576 = vunpack.c.l.b16 %v462
    %v1577 = vunpack.c.h.b16 %v462
    %v1578 = vunpack.c.l.b16 %v463
    %v1579 = vunpack.c.h.b16 %v463
    %v1580 = vunpack.c.l.b16 %v464
    %v1581 = vunpack.c.h.b16 %v464
    %v1582 = vunpack.c.l.b16 %v465
    %v1583 = vunpack.c.h.b16 %v465
    %v1584 = vunpack.c.l.b16 %v466
    %v1585 = vunpack.c.h.b16 %v466
    %v1586 = vunpack.c.l.b16 %v467
    %v1587 = vunpack.c.h.b16 %v467
    %v1588 = vunpack.c.l.b16 %v468
    %v1589 = vunpack.c.h.b16 %v468
    %v1590 = vunpack.c.l.b16 %v469
    %v1591 = vunpack.c.h.b16 %v469
    %v1592 = vunpack.c.l.b16 %v470
    %v1593 = vunpack.c.h.b16 %v470
    %v1594 = vunpack.c.l.b16 %v471
    %v1595 = vunpack.c.h.b16 %v471
    %v1596 = vunpack.c.l.b16 %v472
    %v1597 = vunpack.c.h.b16 %v472
    %v1598 = vunpack.c.l.b16 %v473
    %v1599 = vunpack.c.h.b16 %v473
    %v1600 = vunpack.c.l.b16 %v474
    %v1601 = vunpack.c.h.b16 %v474
    %v1602 = vunpack.c.l.b16 %v475
    %v1603 = vunpack.c.h.b16 %v475
    %v1604 = vunpack.c.l.b16 %v476
    %v1605 = vunpack.c.h.b16 %v476
    %v1606 = vunpack.c.l.b16 %v477
    %v1607 = vunpack.c.h.b16 %v477
    %v1608 = vunpack.c.l.b16 %v478
    %v1609 = vunpack.c.h.b16 %v478
    %v1610 = vunpack.c.l.b16 %v479
    %v1611 = vunpack.c.h.b16 %v479
    %v1612 = vunpack.c.l.b16 %v480
    %v1613 = vunpack.c.h.b16 %v480
    %v1614 = vunpack.c.l.b16 %v481
    %v1615 = vunpack.c.h.b16 %v481
    %v1616 = vunpack.c.l.b16 %v482
    %v1617 = vunpack.c.h.b16 %v482
    %v1618 = vunpack.c.l.b16 %v483
    %v1619 = vunpack.c.h.b16 %v483
    %v1620 = vunpack.c.l.b16 %v484
    %v1621 = vunpack.c.h.b16 %v484
    %v1622 = vunpack.c.l.b16 %v485
    %v1623 = vunpack.c.h.b16 %v485
    %v1624 = vunpack.c.l.b16 %v486
    %v1625 = vunpack.c.h.b16 %v486
    %v1626 = vunpack.c.l.b16 %v487
    %v1627 = vunpack.c.h.b16 %v487
    %v1628 = vunpack.c.l.b16 %v488
    %v1629 = vunpack.c.h.b16 %v488
    %v1630 = vunpack.c.l.b16 %v489
    %v1631 = vunpack.c.h.b16 %v489
    %v1632 = vunpack.c.l.b16 %v490
    %v1633 = vunpack.c.h.b16 %v490
    %v1634 = vunpack.c.l.b16 %v491
    %v1635 = vunpack.c.h.b16 %v491
    %v1636 = vunpack.c.l.b16 %v492
    %v1637 = vunpack.c.h.b16 %v492
    %v1638 = vunpack.c.l.b16 %v493
    %v1639 = vunpack.c.h.b16 %v493
    %v1640 = vunpack.c.l.b16 %v494
    %v1641 = vunpack.c.h.b16 %v494
    %v1642 = vunpack.c.l.b16 %v495
    %v1643 = vunpack.c.h.b16 %v495
    %v1644 = vunpack.c.l.b16 %v496
    %v1645 = vunpack.c.h.b16 %v496
    %v1646 = vunpack.c.l.b16 %v497
    %v1647 = vunpack.c.h.b16 %v497
    %v1648 = vunpack.c.l.b16 %v498
    %v1649 = vunpack.c.h.b16 %v498
    %v1650 = vunpack.c.l.b16 %v499
    %v1651 = vunpack.c.h.b16 %v499
    %v1652 = vunpack.c.l.b16 %v500
    %v1653 = vunpack.c.h.b16 %v500
    %v1654 = vunpack.c.l.b16 %v501
    %v1655 = vunpack.c.h.b16 %v501
    %v1656 = vunpack.c.l.b16 %v502
    %v1657 = vunpack.c.h.b16 %v502
    %v1658 = vunpack.c.l.b16 %v503
    %v1659 = vunpack.c.h.b16 %v503
    %v1660 = vunpack.c.l.b16 %v504
    %v1661 = vunpack.c.h.b16 %v504
    %v1662 = vunpack.c.l.b16 %v505
    %v1663 = vunpack.c.h.b16 %v505
    %v1664 = vunpack.c.l.b16 %v506
    %v1665 = vunpack.c.h.b16 %v506
    %v1666 = vunpack.c.l.b16 %v507
    %v1667 = vunpack.c.h.b16 %v507
    %v1668 = vunpack.c.l.b16 %v508
    %v1669 = vunpack.c.h.b16 %v508
    %v1670 = vunpack.c.l.b16 %v509
    %v1671 = vunpack.c.h.b16 %v509
    %v1672 = vunpack.c.l.b16 %v510
    %v1673 = vunpack.c.h.b16 %v510
    %v1674 = vunpack.c.l.b16 %v511
    %v1675 = vunpack.c.h.b16 %v511
    %v1676 = vunpack.c.l.b16 %v512
    %v1677 = vunpack.c.h.b16 %v512
    %v1678 = vunpack.c.l.b16 %v513
    %v1679 = vunpack.c.h.b16 %v513
    %v1680 = vunpack.c.l.b16 %v514
    %v1681 = vunpack.c.h.b16 %v514
    %v1682 = vunpack.c.l.b16 %v515
    %v1683 = vunpack.c.h.b16 %v515
    %v1684 = vunpack.c.l.b16 %v516
    %v1685 = vunpack.c.h.b16 %v516
    %v1686 = vunpack.c.l.b16 %v517
    %v1687 = vunpack.c.h.b16 %v517
    %v1688 = vunpack.c.l.b16 %v518
    %v1689 = vunpack.c.h.b16 %v518
    %v1690 = vunpack.c.l.b16 %v519
    %v1691 = vunpack.c.h.b16 %v519
    %v1692 = vunpack.c.l.b16 %v520
    %v1693 = vunpack.c.h.b16 %v520
    %v1694 = vunpack.c.l.b16 %v521
    %v1695 = vunpack.c.h.b16 %v521
    %v1696 = vunpack.c.l.b16 %v522
    %v1697 = vunpack.c.h.b16 %v522
    %v1698 = vunpack.c.l.b16 %v523
    %v1699 = vunpack.c.h.b16 %v523
    %v1700 = vunpack.c.l.b16 %v524
    %v1701 = vunpack.c.h.b16 %v524
    %v1702 = vunpack.c.l.b16 %v525
    %v1703 = vunpack.c.h.b16 %v525
    %v1704 = vunpack.c.l.b16 %v526
    %v1705 = vunpack.c.h.b16 %v526
    %v1706 = vunpack.c.l.b16 %v527
    %v1707 = vunpack.c.h.b16 %v527
    %v1708 = vunpack.c.l.b16 %v528
    %v1709 = vunpack.c.h.b16 %v528
    %v1710 = vunpack.c.l.b16 %v529
    %v1711 = vunpack.c.h.b16 %v529
    %v1712 = vunpack.c.l.b16 %v530
    %v1713 = vunpack.c.h.b16 %v530
    %v1714 = vunpack.c.l.b16 %v531
    %v1715 = vunpack.c.h.b16 %v531
    %v1716 = vunpack.c.l.b16 %v532
    %v1717 = vunpack.c.h.b16 %v532
    %v1718 = vunpack.c.l.b16 %v533
    %v1719 = vunpack.c.h.b16 %v533
    %v1720 = vunpack.c.l.b16 %v534
    %v1721 = vunpack.c.h.b16 %v534
    %v1722 = vunpack.c.l.b16 %v535
    %v1723 = vunpack.c.h.b16 %v535
    %v1724 = vunpack.c.l.b16 %v536
    %v1725 = vunpack.c.h.b16 %v536
    %v1726 = vunpack.c.l.b16 %v537
    %v1727 = vunpack.c.h.b16 %v537
    %v1728 = vunpack.c.l.b16 %v538
    %v1729 = vunpack.c.h.b16 %v538
    %v1730 = vunpack.c.l.b16 %v539
    %v1731 = vunpack.c.h.b16 %v539
    %v1732 = vunpack.c.l.b16 %v540
    %v1733 = vunpack.c.h.b16 %v540
    %v1734 = vunpack.c.l.b16 %v541
    %v1735 = vunpack.c.h.b16 %v541
    %v1736 = vunpack.c.l.b16 %v542
    %v1737 = vunpack.c.h.b16 %v542
    %v1738 = vunpack.c.l.b16 %v543
    %v1739 = vunpack.c.h.b16 %v543
    %v1740 = vunpack.c.l.b16 %v544
    %v1741 = vunpack.c.h.b16 %v544
    %v1742 = vunpack.c.l.b16 %v545
    %v1743 = vunpack.c.h.b16 %v545
    %v1744 = vunpack.c.l.b16 %v546
    %v1745 = vunpack.c.h.b16 %v546
    %v1746 = vunpack.c.l.b16 %v547
    %v1747 = vunpack.c.h.b16 %v547
    %v1748 = vunpack.c.l.b16 %v548
    %v1749 = vunpack.c.h.b16 %v548
    %v1750 = vunpack.c.l.b16 %v549
    %v1751 = vunpack.c.h.b16 %v549
    %v1752 = vunpack.c.l.b16 %v550
    %v1753 = vunpack.c.h.b16 %v550
    %v1754 = vunpack.c.l.b16 %v551
    %v1755 = vunpack.c.h.b16 %v551
    %v1756 = vunpack.c.l.b16 %v552
    %v1757 = vunpack.c.h.b16 %v552
    %v1758 = vunpack.c.l.b16 %v553
    %v1759 = vunpack.c.h.b16 %v553
    %v1760 = vunpack.c.l.b16 %v554
    %v1761 = vunpack.c.h.b16 %v554
    %v1762 = vunpack.c.l.b16 %v555
    %v1763 = vunpack.c.h.b16 %v555
    %v1764 = vunpack.c.l.b16 %v556
    %v1765 = vunpack.c.h.b16 %v556
    %v1766 = vunpack.c.l.b16 %v557
    %v1767 = vunpack.c.h.b16 %v557
    %v1768 = vunpack.c.l.b16 %v558
    %v1769 = vunpack.c.h.b16 %v558
    %v1770 = vunpack.c.l.b16 %v559
    %v1771 = vunpack.c.h.b16 %v559
    %v1772 = vunpack.c.l.b16 %v560
    %v1773 = vunpack.c.h.b16 %v560
    %v1774 = vunpack.c.l.b16 %v561
    %v1775 = vunpack.c.h.b16 %v561
    %v1776 = vunpack.c.l.b16 %v562
    %v1777 = vunpack.c.h.b16 %v562
    %v1778 = vunpack.c.l.b16 %v563
    %v1779 = vunpack.c.h.b16 %v563
    %v1780 = vunpack.c.l.b16 %v564
    %v1781 = vunpack.c.h.b16 %v564
    %v1782 = vunpack.c.l.b16 %v565
    %v1783 = vunpack.c.h.b16 %v565
    %v1784 = vpack.c.b16 %v1008, %v1000
    %v1785 = vpack.c.b16 %v1009, %v1001
    %v1786 = vpack.c.b16 %v1010, %v1002
    %v1787 = vpack.c.b16 %v1011, %v1003
    %v1788 = vpack.c.b16 %v1012, %v1004
    %v1789 = vpack.c.b16 %v1013, %v1005
    %v1790 = vpack.c.b16 %v1014, %v1006
    %v1791 = vpack.c.b16 %v1015, %v1007
    %v1792 = vpack.c.b16 %v1024, %v1016
    %v1793 = vpack.c.b16 %v1025, %v1017
    %v1794 = vpack.c.b16 %v1026, %v1018
    %v1795 = vpack.c.b16 %v1027, %v1019
    %v1796 = vpack.c.b16 %v1028, %v1020
    %v1797 = vpack.c.b16 %v1029, %v1021
    %v1798 = vpack.c.b16 %v1030, %v1022
    %v1799 = vpack.c.b16 %v1031, %v1023
    %v1800 = vpack.c.b16 %v1040, %v1032
    %v1801 = vpack.c.b16 %v1041, %v1033
    %v1802 = vpack.c.b16 %v1042, %v1034
    %v1803 = vpack.c.b16 %v1043, %v1035
    %v1804 = vpack.c.b16 %v1044, %v1036
    %v1805 = vpack.c.b16 %v1045, %v1037
    %v1806 = vpack.c.b16 %v1046, %v1038
    %v1807 = vpack.c.b16 %v1047, %v1039
    %v1808 = vpack.c.b16 %v1056, %v1048
    %v1809 = vpack.c.b16 %v1057, %v1049
    %v1810 = vpack.c.b16 %v1058, %v1050
    %v1811 = vpack.c.b16 %v1059, %v1051
    %v1812 = vpack.c.b16 %v1060, %v1052
    %v1813 = vpack.c.b16 %v1061, %v1053
    %v1814 = vpack.c.b16 %v1062, %v1054
    %v1815 = vpack.c.b16 %v1063, %v1055
    %v1816 = vpack.c.b16 %v1072, %v1064
    %v1817 = vpack.c.b16 %v1073, %v1065
    %v1818 = vpack.c.b16 %v1074, %v1066
    %v1819 = vpack.c.b16 %v1075, %v1067
    %v1820 = vpack.c.b16 %v1076, %v1068
    %v1821 = vpack.c.b16 %v1077, %v1069
    %v1822 = vpack.c.b16 %v1078, %v1070
    %v1823 = vpack.c.b16 %v1079, %v1071
    %v1824 = vpack.c.b16 %v1088, %v1080
    %v1825 = vpack.c.b16 %v1089, %v1081
    %v1826 = vpack.c.b16 %v1090, %v1082
    %v1827 = vpack.c.b16 %v1091, %v1083
    %v1828 = vpack.c.b16 %v1092, %v1084
    %v1829 = vpack.c.b16 %v1093, %v1085
    %v1830 = vpack.c.b16 %v1094, %v1086
    %v1831 = vpack.c.b16 %v1095, %v1087
    %v1832 = vpack.c.b16 %v1104, %v1096
    %v1833 = vpack.c.b16 %v1105, %v1097
    %v1834 = vpack.c.b16 %v1106, %v1098
    %v1835 = vpack.c.b16 %v1107, %v1099
    %v1836 = vpack.c.b16 %v1108, %v1100
    %v1837 = vpack.c.b16 %v1109, %v1101
    %v1838 = vpack.c.b16 %v1110, %v1102
    %v1839 = vpack.c.b16 %v1111, %v1103
    %v1840 = vpack.c.b16 %v1120, %v1112
    %v1841 = vpack.c.b16 %v1121, %v1113
    %v1842 = vpack.c.b16 %v1122, %v1114
    %v1843 = vpack.c.b16 %v1123, %v1115
    %v1844 = vpack.c.b16 %v1124, %v1116
    %v1845 = vpack.c.b16 %v1125, %v1117
    %v1846 = vpack.c.b16 %v1126, %v1118
    %v1847 = vpack.c.b16 %v1127, %v1119
    %v1848 = vpack.c.b16 %v1136, %v1128
    %v1849 = vpack.c.b16 %v1137, %v1129
    %v1850 = vpack.c.b16 %v1138, %v1130
    %v1851 = vpack.c.b16 %v1139, %v1131
    %v1852 = vpack.c.b16 %v1140, %v1132
    %v1853 = vpack.c.b16 %v1141, %v1133
    %v1854 = vpack.c.b16 %v1142, %v1134
    %v1855 = vpack.c.b16 %v1143, %v1135
    %v1856 = vpack.c.b16 %v1152, %v1144
    %v1857 = vpack.c.b16 %v1153, %v1145
    %v1858 = vpack.c.b16 %v1154, %v1146
    %v1859 = vpack.c.b16 %v1155, %v1147
    %v1860 = vpack.c.b16 %v1156, %v1148
    %v1861 = vpack.c.b16 %v1157, %v1149
    %v1862 = vpack.c.b16 %v1158, %v1150
    %v1863 = vpack.c.b16 %v1159, %v1151
    %v1864 = vpack.c.b16 %v1168, %v1160
    %v1865 = vpack.c.b16 %v1169, %v1161
    %v1866 = vpack.c.b16 %v1170, %v1162
    %v1867 = vpack.c.b16 %v1171, %v1163
    %v1868 = vpack.c.b16 %v1172, %v1164
    %v1869 = vpack.c.b16 %v1173, %v1165
    %v1870 = vpack.c.b16 %v1174, %v1166
    %v1871 = vpack.c.b16 %v1175, %v1167
    %v1872 = vpack.c.b16 %v1184, %v1176
    %v1873 = vpack.c.b16 %v1185, %v1177
    %v1874 = vpack.c.b16 %v1186, %v1178
    %v1875 = vpack.c.b16 %v1187, %v1179
    %v1876 = vpack.c.b16 %v1188, %v1180
    %v1877 = vpack.c.b16 %v1189, %v1181
    %v1878 = vpack.c.b16 %v1190, %v1182
    %v1879 = vpack.c.b16 %v1191, %v1183
    %v1880 = vpack.c.b16 %v1200, %v1192
    %v1881 = vpack.c.b16 %v1201, %v1193
    %v1882 = vpack.c.b16 %v1202, %v1194
    %v1883 = vpack.c.b16 %v1203, %v1195
    %v1884 = vpack.c.b16 %v1204, %v1196
    %v1885 = vpack.c.b16 %v1205, %v1197
    %v1886 = vpack.c.b16 %v1206, %v1198
    %v1887 = vpack.c.b16 %v1207, %v1199
    %v1888 = vpack.c.b16 %v1216, %v1208
    %v1889 = vpack.c.b16 %v1217, %v1209
    %v1890 = vpack.c.b16 %v1218, %v1210
    %v1891 = vpack.c.b16 %v1219, %v1211
    %v1892 = vpack.c.b16 %v1220, %v1212
    %v1893 = vpack.c.b16 %v1221, %v1213
    %v1894 = vpack.c.b16 %v1222, %v1214
    %v1895 = vpack.c.b16 %v1223, %v1215
    %v1896 = vpack.c.b16 %v1232, %v1224
    %v1897 = vpack.c.b16 %v1233, %v1225
    %v1898 = vpack.c.b16 %v1234, %v1226
    %v1899 = vpack.c.b16 %v1235, %v1227
    %v1900 = vpack.c.b16 %v1236, %v1228
    %v1901 = vpack.c.b16 %v1237, %v1229
    %v1902 = vpack.c.b16 %v1238, %v1230
    %v1903 = vpack.c.b16 %v1239, %v1231
    %v1904 = vpack.c.b16 %v1248, %v1240
    %v1905 = vpack.c.b16 %v1249, %v1241
    %v1906 = vpack.c.b16 %v1250, %v1242
    %v1907 = vpack.c.b16 %v1251, %v1243
    %v1908 = vpack.c.b16 %v1252, %v1244
    %v1909 = vpack.c.b16 %v1253, %v1245
    %v1910 = vpack.c.b16 %v1254, %v1246
    %v1911 = vpack.c.b16 %v1255, %v1247
    %v1912 = vpack.c.b16 %v1264, %v1256
    %v1913 = vpack.c.b16 %v1265, %v1257
    %v1914 = vpack.c.b16 %v1266, %v1258
    %v1915 = vpack.c.b16 %v1267, %v1259
    %v1916 = vpack.c.b16 %v1268, %v1260
    %v1917 = vpack.c.b16 %v1269, %v1261
    %v1918 = vpack.c.b16 %v1270, %v1262
    %v1919 = vpack.c.b16 %v1271, %v1263
    %v1920 = vpack.c.b16 %v1280, %v1272
    %v1921 = vpack.c.b16 %v1281, %v1273
    %v1922 = vpack.c.b16 %v1282, %v1274
    %v1923 = vpack.c.b16 %v1283, %v1275
    %v1924 = vpack.c.b16 %v1284, %v1276
    %v1925 = vpack.c.b16 %v1285, %v1277
    %v1926 = vpack.c.b16 %v1286, %v1278
    %v1927 = vpack.c.b16 %v1287, %v1279
    %v1928 = vpack.c.b16 %v1296, %v1288
    %v1929 = vpack.c.b16 %v1297, %v1289
    %v1930 = vpack.c.b16 %v1298, %v1290
    %v1931 = vpack.c.b16 %v1299, %v1291
    %v1932 = vpack.c.b16 %v1300, %v1292
    %v1933 = vpack.c.b16 %v1301, %v1293
    %v1934 = vpack.c.b16 %v1302, %v1294
    %v1935 = vpack.c.b16 %v1303, %v1295
    %v1936 = vpack.c.b16 %v1312, %v1304
    %v1937 = vpack.c.b16 %v1313, %v1305
    %v1938 = vpack.c.b16 %v1314, %v1306
    %v1939 = vpack.c.b16 %v1315, %v1307
    %v1940 = vpack.c.b16 %v1316, %v1308
    %v1941 = vpack.c.b16 %v1317, %v1309
    %v1942 = vpack.c.b16 %v1318, %v1310
    %v1943 = vpack.c.b16 %v1319, %v1311
    %v1944 = vpack.c.b16 %v1328, %v1320
    %v1945 = vpack.c.b16 %v1329, %v1321
    %v1946 = vpack.c.b16 %v1330, %v1322
    %v1947 = vpack.c.b16 %v1331, %v1323
    %v1948 = vpack.c.b16 %v1332, %v1324
    %v1949 = vpack.c.b16 %v1333, %v1325
    %v1950 = vpack.c.b16 %v1334, %v1326
    %v1951 = vpack.c.b16 %v1335, %v1327
    %v1952 = vpack.c.b16 %v1344, %v1336
    %v1953 = vpack.c.b16 %v1345, %v1337
    %v1954 = vpack.c.b16 %v1346, %v1338
    %v1955 = vpack.c.b16 %v1347, %v1339
    %v1956 = vpack.c.b16 %v1348, %v1340
    %v1957 = vpack.c.b16 %v1349, %v1341
    %v1958 = vpack.c.b16 %v1350, %v1342
    %v1959 = vpack.c.b16 %v1351, %v1343
    %v1960 = vpack.c.b16 %v1360, %v1352
    %v1961 = vpack.c.b16 %v1361, %v1353
    %v1962 = vpack.c.b16 %v1362, %v1354
    %v1963 = vpack.c.b16 %v1363, %v1355
    %v1964 = vpack.c.b16 %v1364, %v1356
    %v1965 = vpack.c.b16 %v1365, %v1357
    %v1966 = vpack.c.b16 %v1366, %v1358
    %v1967 = vpack.c.b16 %v1367, %v1359
    %v1968 = vpack.c.b16 %v1376, %v1368
    %v1969 = vpack.c.b16 %v1377, %v1369
    %v1970 = vpack.c.b16 %v1378, %v1370
    %v1971 = vpack.c.b16 %v1379, %v1371
    %v1972 = vpack.c.b16 %v1380, %v1372
    %v1973 = vpack.c.b16 %v1381, %v1373
    %v1974 = vpack.c.b16 %v1382, %v1374
    %v1975 = vpack.c.b16 %v1383, %v1375
    %v1976 = vpack.c.b16 %v1392, %v1384
    %v1977 = vpack.c.b16 %v1393, %v1385
    %v1978 = vpack.c.b16 %v1394, %v1386
    %v1979 = vpack.c.b16 %v1395, %v1387
    %v1980 = vpack.c.b16 %v1396, %v1388
    %v1981 = vpack.c.b16 %v1397, %v1389
    %v1982 = vpack.c.b16 %v1398, %v1390
    %v1983 = vpack.c.b16 %v1399, %v1391
    %v1984 = vpack.c.b16 %v1408, %v1400
    %v1985 = vpack.c.b16 %v1409, %v1401
    %v1986 = vpack.c.b16 %v1410, %v1402
    %v1987 = vpack.c.b16 %v1411, %v1403
    %v1988 = vpack.c.b16 %v1412, %v1404
    %v1989 = vpack.c.b16 %v1413, %v1405
    %v1990 = vpack.c.b16 %v1414, %v1406
    %v1991 = vpack.c.b16 %v1415, %v1407
    %v1992 = vpack.c.b16 %v1424, %v1416
    %v1993 = vpack.c.b16 %v1425, %v1417
    %v1994 = vpack.c.b16 %v1426, %v1418
    %v1995 = vpack.c.b16 %v1427, %v1419
    %v1996 = vpack.c.b16 %v1428, %v1420
    %v1997 = vpack.c.b16 %v1429, %v1421
    %v1998 = vpack.c.b16 %v1430, %v1422
    %v1999 = vpack.c.b16 %v1431, %v1423
    %v2000 = vpack.c.b16 %v1440, %v1432
    %v2001 = vpack.c.b16 %v1441, %v1433
    %v2002 = vpack.c.b16 %v1442, %v1434
    %v2003 = vpack.c.b16 %v1443, %v1435
    %v2004 = vpack.c.b16 %v1444, %v1436
    %v2005 = vpack.c.b16 %v1445, %v1437
    %v2006 = vpack.c.b16 %v1446, %v1438
    %v2007 = vpack.c.b16 %v1447, %v1439
    %v2008 = vpack.c.b16 %v1456, %v1448
    %v2009 = vpack.c.b16 %v1457, %v1449
    %v2010 = vpack.c.b16 %v1458, %v1450
    %v2011 = vpack.c.b16 %v1459, %v1451
    %v2012 = vpack.c.b16 %v1460, %v1452
    %v2013 = vpack.c.b16 %v1461, %v1453
    %v2014 = vpack.c.b16 %v1462, %v1454
    %v2015 = vpack.c.b16 %v1463, %v1455
    %v2016 = vpack.c.b16 %v1472, %v1464
    %v2017 = vpack.c.b16 %v1473, %v1465
    %v2018 = vpack.c.b16 %v1474, %v1466
    %v2019 = vpack.c.b16 %v1475, %v1467
    %v2020 = vpack.c.b16 %v1476, %v1468
    %v2021 = vpack.c.b16 %v1477, %v1469
    %v2022 = vpack.c.b16 %v1478, %v1470
    %v2023 = vpack.c.b16 %v1479, %v1471
    %v2024 = vpack.c.b16 %v1488, %v1480
    %v2025 = vpack.c.b16 %v1489, %v1481
    %v2026 = vpack.c.b16 %v1490, %v1482
    %v2027 = vpack.c.b16 %v1491, %v1483
    %v2028 = vpack.c.b16 %v1492, %v1484
    %v2029 = vpack.c.b16 %v1493, %v1485
    %v2030 = vpack.c.b16 %v1494, %v1486
    %v2031 = vpack.c.b16 %v1495, %v1487
    %v2032 = vpack.c.b16 %v1504, %v1496
    %v2033 = vpack.c.b16 %v1505, %v1497
    %v2034 = vpack.c.b16 %v1506, %v1498
    %v2035 = vpack.c.b16 %v1507, %v1499
    %v2036 = vpack.c.b16 %v1508, %v1500
    %v2037 = vpack.c.b16 %v1509, %v1501
    %v2038 = vpack.c.b16 %v1510, %v1502
    %v2039 = vpack.c.b16 %v1511, %v1503
    %v2040 = vpack.c.b16 %v1520, %v1512
    %v2041 = vpack.c.b16 %v1521, %v1513
    %v2042 = vpack.c.b16 %v1522, %v1514
    %v2043 = vpack.c.b16 %v1523, %v1515
    %v2044 = vpack.c.b16 %v1524, %v1516
    %v2045 = vpack.c.b16 %v1525, %v1517
    %v2046 = vpack.c.b16 %v1526, %v1518
    %v2047 = vpack.c.b16 %v1527, %v1519
    %v2048 = vpack.c.b16 %v1536, %v1528
    %v2049 = vpack.c.b16 %v1537, %v1529
    %v2050 = vpack.c.b16 %v1538, %v1530
    %v2051 = vpack.c.b16 %v1539, %v1531
    %v2052 = vpack.c.b16 %v1540, %v1532
    %v2053 = vpack.c.b16 %v1541, %v1533
    %v2054 = vpack.c.b16 %v1542, %v1534
    %v2055 = vpack.c.b16 %v1543, %v1535
    %v2056 = vpack.c.b16 %v1552, %v1544
    %v2057 = vpack.c.b16 %v1553, %v1545
    %v2058 = vpack.c.b16 %v1554, %v1546
    %v2059 = vpack.c.b16 %v1555, %v1547
    %v2060 = vpack.c.b16 %v1556, %v1548
    %v2061 = vpack.c.b16 %v1557, %v1549
    %v2062 = vpack.c.b16 %v1558, %v1550
    %v2063 = vpack.c.b16 %v1559, %v1551
    %v2064 = vpack.c.b16 %v1568, %v1560
    %v2065 = vpack.c.b16 %v1569, %v1561
    %v2066 = vpack.c.b16 %v1570, %v1562
    %v2067 = vpack.c.b16 %v1571, %v1563
    %v2068 = vpack.c.b16 %v1572, %v1564
    %v2069 = vpack.c.b16 %v1573, %v1565
    %v2070 = vpack.c.b16 %v1574, %v1566
    %v2071 = vpack.c.b16 %v1575, %v1567
    %v2072 = vpack.c.b16 %v1584, %v1576
    %v2073 = vpack.c.b16 %v1585, %v1577
    %v2074 = vpack.c.b16 %v1586, %v1578
    %v2075 = vpack.c.b16 %v1587, %v1579
    %v2076 = vpack.c.b16 %v1588, %v1580
    %v2077 = vpack.c.b16 %v1589, %v1581
    %v2078 = vpack.c.b16 %v1590, %v1582
    %v2079 = vpack.c.b16 %v1591, %v1583
    %v2080 = vpack.c.b16 %v1600, %v1592
    %v2081 = vpack.c.b16 %v1601, %v1593
    %v2082 = vpack.c.b16 %v1602, %v1594
    %v2083 = vpack.c.b16 %v1603, %v1595
    %v2084 = vpack.c.b16 %v1604, %v1596
    %v2085 = vpack.c.b16 %v1605, %v1597
    %v2086 = vpack.c.b16 %v1606, %v1598
    %v2087 = vpack.c.b16 %v1607, %v1599
    %v2088 = vpack.c.b16 %v1616, %v1608
    %v2089 = vpack.c.b16 %v1617, %v1609
    %v2090 = vpack.c.b16 %v1618, %v1610
    %v2091 = vpack.c.b16 %v1619, %v1611
    %v2092 = vpack.c.b16 %v1620, %v1612
    %v2093 = vpack.c.b16 %v1621, %v1613
    %v2094 = vpack.c.b16 %v1622, %v1614
    %v2095 = vpack.c.b16 %v1623, %v1615
    %v2096 = vpack.c.b16 %v1632, %v1624
    %v2097 = vpack.c.b16 %v1633, %v1625
    %v2098 = vpack.c.b16 %v1634, %v1626
    %v2099 = vpack.c.b16 %v1635, %v1627
    %v2100 = vpack.c.b16 %v1636, %v1628
    %v2101 = vpack.c.b16 %v1637, %v1629
    %v2102 = vpack.c.b16 %v1638, %v1630
    %v2103 = vpack.c.b16 %v1639, %v1631
    %v2104 = vpack.c.b16 %v1648, %v1640
    %v2105 = vpack.c.b16 %v1649, %v1641
    %v2106 = vpack.c.b16 %v1650, %v1642
    %v2107 = vpack.c.b16 %v1651, %v1643
    %v2108 = vpack.c.b16 %v1652, %v1644
    %v2109 = vpack.c.b16 %v1653, %v1645
    %v2110 = vpack.c.b16 %v1654, %v1646
    %v2111 = vpack.c.b16 %v1655, %v1647
    %v2112 = vpack.c.b16 %v1664, %v1656
    %v2113 = vpack.c.b16 %v1665, %v1657
    %v2114 = vpack.c.b16 %v1666, %v1658
    %v2115 = vpack.c.b16 %v1667, %v1659
    %v2116 = vpack.c.b16 %v1668, %v1660
    %v2117 = vpack.c.b16 %v1669, %v1661
    %v2118 = vpack.c.b16 %v1670, %v1662
    %v2119 = vpack.c.b16 %v1671, %v1663
    %v2120 = vpack.c.b16 %v1680, %v1672
    %v2121 = vpack.c.b16 %v1681, %v1673
    %v2122 = vpack.c.b16 %v1682, %v1674
    %v2123 = vpack.c.b16 %v1683, %v1675
    %v2124 = vpack.c.b16 %v1684, %v1676
    %v2125 = vpack.c.b16 %v1685, %v1677
    %v2126 = vpack.c.b16 %v1686, %v1678
    %v2127 = vpack.c.b16 %v1687, %v1679
    %v2128 = vpack.c.b16 %v1696, %v1688
    %v2129 = vpack.c.b16 %v1697, %v1689
    %v2130 = vpack.c.b16 %v1698, %v1690
    %v2131 = vpack.c.b16 %v1699, %v1691
    %v2132 = vpack.c.b16 %v1700, %v1692
    %v2133 = vpack.c.b16 %v1701, %v1693
    %v2134 = vpack.c.b16 %v1702, %v1694
    %v2135 = vpack.c.b16 %v1703, %v1695
    %v2136 = vpack.c.b16 %v1712, %v1704
    %v2137 = vpack.c.b16 %v1713, %v1705
    %v2138 = vpack.c.b16 %v1714, %v1706
    %v2139 = vpack.c.b16 %v1715, %v1707
    %v2140 = vpack.c.b16 %v1716, %v1708
    %v2141 = vpack.c.b16 %v1717, %v1709
    %v2142 = vpack.c.b16 %v1718, %v1710
    %v2143 = vpack.c.b16 %v1719, %v1711
    %v2144 = vpack.c.b16 %v1728, %v1720
    %v2145 = vpack.c.b16 %v1729, %v1721
    %v2146 = vpack.c.b16 %v1730, %v1722
    %v2147 = vpack.c.b16 %v1731, %v1723
    %v2148 = vpack.c.b16 %v1732, %v1724
    %v2149 = vpack.c.b16 %v1733, %v1725
    %v2150 = vpack.c.b16 %v1734, %v1726
    %v2151 = vpack.c.b16 %v1735, %v1727
    %v2152 = vpack.c.b16 %v1744, %v1736
    %v2153 = vpack.c.b16 %v1745, %v1737
    %v2154 = vpack.c.b16 %v1746, %v1738
    %v2155 = vpack.c.b16 %v1747, %v1739
    %v2156 = vpack.c.b16 %v1748, %v1740
    %v2157 = vpack.c.b16 %v1749, %v1741
    %v2158 = vpack.c.b16 %v1750, %v1742
    %v2159 = vpack.c.b16 %v1751, %v1743
    %v2160 = vpack.c.b16 %v1760, %v1752
    %v2161 = vpack.c.b16 %v1761, %v1753
    %v2162 = vpack.c.b16 %v1762, %v1754
    %v2163 = vpack.c.b16 %v1763, %v1755
    %v2164 = vpack.c.b16 %v1764, %v1756
    %v2165 = vpack.c.b16 %v1765, %v1757
    %v2166 = vpack.c.b16 %v1766, %v1758
    %v2167 = vpack.c.b16 %v1767, %v1759
    %v2168 = vpack.c.b16 %v1776, %v1768
    %v2169 = vpack.c.b16 %v1777, %v1769
    %v2170 = vpack.c.b16 %v1778, %v1770
    %v2171 = vpack.c.b16 %v1779, %v1771
    %v2172 = vpack.c.b16 %v1780, %v1772
    %v2173 = vpack.c.b16 %v1781, %v1773
    %v2174 = vpack.c.b16 %v1782, %v1774
    %v2175 = vpack.c.b16 %v1783, %v1775
    %vm2568 = vcmask 130048
    %v2570 = vsel %vm2568, %v173, 0
    %2572 = vmatprep.subr.bf16.mxu0 %v1841
    %2573 = vmatpush1.bf16.msra.mxu0 %v1840
    %2574 = vmatprep.subr.bf16.mxu0 %v1833
    %2575 = vmatpush1.bf16.msra.mxu0 %v1832
    %2576 = vmatprep.subr.bf16.mxu0 %v1825
    %2577 = vmatpush1.bf16.msra.mxu0 %v1824
    %2578 = vmatprep.subr.bf16.mxu0 %v1817
    %2579 = vmatpush1.bf16.msra.mxu0 %v1816
    %2580 = vmatprep.subr.bf16.mxu0 %v1809
    %2581 = vmatpush1.bf16.msra.mxu0 %v1808
    %2582 = vmatprep.subr.bf16.mxu0 %v1801
    %2583 = vmatpush1.bf16.msra.mxu0 %v1800
    %2584 = vmatprep.subr.bf16.mxu0 %v1793
    %2585 = vmatpush1.bf16.msra.mxu0 %v1792
    %2586 = vmatprep.subr.bf16.mxu0 %v1785
    %2587 = vmatpush1.bf16.msra.mxu0 %v1784
    %2588 = vmatprep.subr.bf16.mxu0 %v1905
    %2589 = vmatpush2.bf16.msra.mxu0 %v1904
    %2590 = vmatprep.subr.bf16.mxu0 %v1897
    %2591 = vmatpush2.bf16.msra.mxu0 %v1896
    %2592 = vmatprep.subr.bf16.mxu0 %v1889
    %2593 = vmatpush2.bf16.msra.mxu0 %v1888
    %2594 = vmatprep.subr.bf16.mxu0 %v1881
    %2595 = vmatpush2.bf16.msra.mxu0 %v1880
    %2596 = vmatprep.subr.bf16.mxu0 %v1873
    %2597 = vmatpush2.bf16.msra.mxu0 %v1872
    %2598 = vmatprep.subr.bf16.mxu0 %v1865
    %2599 = vmatpush2.bf16.msra.mxu0 %v1864
    %2600 = vmatprep.subr.bf16.mxu0 %v1857
    %2601 = vmatpush2.bf16.msra.mxu0 %v1856
    %2602 = vmatprep.subr.bf16.mxu0 %v1849
    %2603 = vmatpush2.bf16.msra.mxu0 %v1848
    %2604 = vmatprep.mubr.bf16.mxu0 %v168
    %2605 = vmatmul.mubr.bf16.gmra.mxu0 %v167
    %v2606 = vpop.f32.mrf.mxu0
    %v2607 = vadd.f32 %v571, %v2606
    %v2608 = vpop.f32.mrf.mxu0
    %v2609 = vadd.f32 %v575, %v2608
    %v2610 = vpop.f32.mrf.mxu0
    %v2611 = vpop.f32.mrf.mxu0
    %2612 = vdwg.mxu0
    %2613 = vmatprep.subr.bf16.mxu0 %v1969
    %2614 = vmatpush1.bf16.msra.mxu0 %v1968
    %2615 = vmatprep.subr.bf16.mxu0 %v1961
    %2616 = vmatpush1.bf16.msra.mxu0 %v1960
    %2617 = vmatprep.subr.bf16.mxu0 %v1953
    %2618 = vmatpush1.bf16.msra.mxu0 %v1952
    %2619 = vmatprep.subr.bf16.mxu0 %v1945
    %2620 = vmatpush1.bf16.msra.mxu0 %v1944
    %2621 = vmatprep.subr.bf16.mxu0 %v1937
    %2622 = vmatpush1.bf16.msra.mxu0 %v1936
    %2623 = vmatprep.subr.bf16.mxu0 %v1929
    %2624 = vmatpush1.bf16.msra.mxu0 %v1928
    %2625 = vmatprep.subr.bf16.mxu0 %v1921
    %2626 = vmatpush1.bf16.msra.mxu0 %v1920
    %2627 = vmatprep.subr.bf16.mxu0 %v1913
    %2628 = vmatpush1.bf16.msra.mxu0 %v1912
    %2629 = vmatprep.subr.bf16.mxu0 %v2033
    %2630 = vmatpush2.bf16.msra.mxu0 %v2032
    %2631 = vmatprep.subr.bf16.mxu0 %v2025
    %2632 = vmatpush2.bf16.msra.mxu0 %v2024
    %2633 = vmatprep.subr.bf16.mxu0 %v2017
    %2634 = vmatpush2.bf16.msra.mxu0 %v2016
    %2635 = vmatprep.subr.bf16.mxu0 %v2009
    %2636 = vmatpush2.bf16.msra.mxu0 %v2008
    %2637 = vmatprep.subr.bf16.mxu0 %v2001
    %2638 = vmatpush2.bf16.msra.mxu0 %v2000
    %2639 = vmatprep.subr.bf16.mxu0 %v1993
    %2640 = vmatpush2.bf16.msra.mxu0 %v1992
    %2641 = vmatprep.subr.bf16.mxu0 %v1985
    %2642 = vmatpush2.bf16.msra.mxu0 %v1984
    %2643 = vmatprep.subr.bf16.mxu0 %v1977
    %2644 = vmatpush2.bf16.msra.mxu0 %v1976
    %2645 = vmatprep.mubr.bf16.mxu0 %v170
    %2646 = vmatmul.mubr.bf16.gmra.mxu0 %v169
    %v2647 = vpop.f32.mrf.mxu0
    %v2648 = vadd.f32 %v2607, %v2647
    %v2649 = vpop.f32.mrf.mxu0
    %v2650 = vadd.f32 %v2609, %v2649
    %v2651 = vpop.f32.mrf.mxu0
    %v2652 = vpop.f32.mrf.mxu0
    %2653 = vdwg.mxu0
    %2654 = vmatprep.subr.bf16.mxu0 %v2097
    %2655 = vmatpush1.bf16.msra.mxu0 %v2096
    %2656 = vmatprep.subr.bf16.mxu0 %v2089
    %2657 = vmatpush1.bf16.msra.mxu0 %v2088
    %2658 = vmatprep.subr.bf16.mxu0 %v2081
    %2659 = vmatpush1.bf16.msra.mxu0 %v2080
    %2660 = vmatprep.subr.bf16.mxu0 %v2073
    %2661 = vmatpush1.bf16.msra.mxu0 %v2072
    %2662 = vmatprep.subr.bf16.mxu0 %v2065
    %2663 = vmatpush1.bf16.msra.mxu0 %v2064
    %2664 = vmatprep.subr.bf16.mxu0 %v2057
    %2665 = vmatpush1.bf16.msra.mxu0 %v2056
    %2666 = vmatprep.subr.bf16.mxu0 %v2049
    %2667 = vmatpush1.bf16.msra.mxu0 %v2048
    %2668 = vmatprep.subr.bf16.mxu0 %v2041
    %2669 = vmatpush1.bf16.msra.mxu0 %v2040
    %2670 = vmatprep.subr.bf16.mxu0 %v2161
    %2671 = vmatpush2.bf16.msra.mxu0 %v2160
    %2672 = vmatprep.subr.bf16.mxu0 %v2153
    %2673 = vmatpush2.bf16.msra.mxu0 %v2152
    %2674 = vmatprep.subr.bf16.mxu0 %v2145
    %2675 = vmatpush2.bf16.msra.mxu0 %v2144
    %2676 = vmatprep.subr.bf16.mxu0 %v2137
    %2677 = vmatpush2.bf16.msra.mxu0 %v2136
    %2678 = vmatprep.subr.bf16.mxu0 %v2129
    %2679 = vmatpush2.bf16.msra.mxu0 %v2128
    %2680 = vmatprep.subr.bf16.mxu0 %v2121
    %2681 = vmatpush2.bf16.msra.mxu0 %v2120
    %2682 = vmatprep.subr.bf16.mxu0 %v2113
    %2683 = vmatpush2.bf16.msra.mxu0 %v2112
    %2684 = vmatprep.subr.bf16.mxu0 %v2105
    %2685 = vmatpush2.bf16.msra.mxu0 %v2104
    %2686 = vmatprep.mubr.bf16.mxu0 %v172
    %2687 = vmatmul.mubr.bf16.gmra.mxu0 %v171
    %v2688 = vpop.f32.mrf.mxu0
    %v2689 = vadd.f32 %v2648, %v2688
    %v2690 = vpop.f32.mrf.mxu0
    %v2691 = vadd.f32 %v2650, %v2690
    %v2692 = vpop.f32.mrf.mxu0
    %v2693 = vpop.f32.mrf.mxu0
    %2694 = vdwg.mxu0
    %2695 = vmatprep.subr.bf16.mxu0 0
    %2696 = vmatpush1.bf16.msra.mxu0 0
    %2697 = vmatprep.subr.bf16.mxu0 0
    %2698 = vmatpush1.bf16.msra.mxu0 0
    %2699 = vmatprep.subr.bf16.mxu0 0
    %2700 = vmatpush1.bf16.msra.mxu0 0
    %2701 = vmatprep.subr.bf16.mxu0 0
    %2702 = vmatpush1.bf16.msra.mxu0 0
    %2703 = vmatprep.subr.bf16.mxu0 0
    %2704 = vmatpush1.bf16.msra.mxu0 0
    %2705 = vmatprep.subr.bf16.mxu0 0
    %2706 = vmatpush1.bf16.msra.mxu0 0
    %2707 = vmatprep.subr.bf16.mxu0 0
    %2708 = vmatpush1.bf16.msra.mxu0 0
    %2709 = vmatprep.subr.bf16.mxu0 %v2169
    %2710 = vmatpush1.bf16.msra.mxu0 %v2168
    %2711 = vmatprep.subr.bf16.mxu0 0
    %2712 = vmatpush2.bf16.msra.mxu0 0
    %2713 = vmatprep.subr.bf16.mxu0 0
    %2714 = vmatpush2.bf16.msra.mxu0 0
    %2715 = vmatprep.subr.bf16.mxu0 0
    %2716 = vmatpush2.bf16.msra.mxu0 0
    %2717 = vmatprep.subr.bf16.mxu0 0
    %2718 = vmatpush2.bf16.msra.mxu0 0
    %2719 = vmatprep.subr.bf16.mxu0 0
    %2720 = vmatpush2.bf16.msra.mxu0 0
    %2721 = vmatprep.subr.bf16.mxu0 0
    %2722 = vmatpush2.bf16.msra.mxu0 0
    %2723 = vmatprep.subr.bf16.mxu0 0
    %2724 = vmatpush2.bf16.msra.mxu0 0
    %2725 = vmatprep.subr.bf16.mxu0 0
    %2726 = vmatpush2.bf16.msra.mxu0 0
    %2727 = vmatprep.mubr.bf16.mxu0 0
    %2728 = vmatmul.mubr.bf16.gmra.mxu0 %v2570
    %v2729 = vpop.f32.mrf.mxu0
    %v2730 = vadd.f32 %v2689, %v2729
    %v2731 = vpop.f32.mrf.mxu0
    %v2732 = vadd.f32 %v2691, %v2731
    %v2733 = vpop.f32.mrf.mxu0
    %v2734 = vpop.f32.mrf.mxu0
    %2735 = vdwg.mxu0
    %2736 = vmatprep.subr.bf16.mxu0 %v1843
    %2737 = vmatpush1.bf16.msra.mxu0 %v1842
    %2738 = vmatprep.subr.bf16.mxu0 %v1835
    %2739 = vmatpush1.bf16.msra.mxu0 %v1834
    %2740 = vmatprep.subr.bf16.mxu0 %v1827
    %2741 = vmatpush1.bf16.msra.mxu0 %v1826
    %2742 = vmatprep.subr.bf16.mxu0 %v1819
    %2743 = vmatpush1.bf16.msra.mxu0 %v1818
    %2744 = vmatprep.subr.bf16.mxu0 %v1811
    %2745 = vmatpush1.bf16.msra.mxu0 %v1810
    %2746 = vmatprep.subr.bf16.mxu0 %v1803
    %2747 = vmatpush1.bf16.msra.mxu0 %v1802
    %2748 = vmatprep.subr.bf16.mxu0 %v1795
    %2749 = vmatpush1.bf16.msra.mxu0 %v1794
    %2750 = vmatprep.subr.bf16.mxu0 %v1787
    %2751 = vmatpush1.bf16.msra.mxu0 %v1786
    %2752 = vmatprep.subr.bf16.mxu0 %v1907
    %2753 = vmatpush2.bf16.msra.mxu0 %v1906
    %2754 = vmatprep.subr.bf16.mxu0 %v1899
    %2755 = vmatpush2.bf16.msra.mxu0 %v1898
    %2756 = vmatprep.subr.bf16.mxu0 %v1891
    %2757 = vmatpush2.bf16.msra.mxu0 %v1890
    %2758 = vmatprep.subr.bf16.mxu0 %v1883
    %2759 = vmatpush2.bf16.msra.mxu0 %v1882
    %2760 = vmatprep.subr.bf16.mxu0 %v1875
    %2761 = vmatpush2.bf16.msra.mxu0 %v1874
    %2762 = vmatprep.subr.bf16.mxu0 %v1867
    %2763 = vmatpush2.bf16.msra.mxu0 %v1866
    %2764 = vmatprep.subr.bf16.mxu0 %v1859
    %2765 = vmatpush2.bf16.msra.mxu0 %v1858
    %2766 = vmatprep.subr.bf16.mxu0 %v1851
    %2767 = vmatpush2.bf16.msra.mxu0 %v1850
    %2768 = vmatprep.mubr.bf16.mxu0 %v168
    %2769 = vmatmul.mubr.bf16.gmra.mxu0 %v167
    %v2770 = vpop.f32.mrf.mxu0
    %v2771 = vadd.f32 %v579, %v2770
    %v2772 = vpop.f32.mrf.mxu0
    %v2773 = vadd.f32 %v583, %v2772
    %v2774 = vpop.f32.mrf.mxu0
    %v2775 = vpop.f32.mrf.mxu0
    %2776 = vdwg.mxu0
    %2777 = vmatprep.subr.bf16.mxu0 %v1971
    %2778 = vmatpush1.bf16.msra.mxu0 %v1970
    %2779 = vmatprep.subr.bf16.mxu0 %v1963
    %2780 = vmatpush1.bf16.msra.mxu0 %v1962
    %2781 = vmatprep.subr.bf16.mxu0 %v1955
    %2782 = vmatpush1.bf16.msra.mxu0 %v1954
    %2783 = vmatprep.subr.bf16.mxu0 %v1947
    %2784 = vmatpush1.bf16.msra.mxu0 %v1946
    %2785 = vmatprep.subr.bf16.mxu0 %v1939
    %2786 = vmatpush1.bf16.msra.mxu0 %v1938
    %2787 = vmatprep.subr.bf16.mxu0 %v1931
    %2788 = vmatpush1.bf16.msra.mxu0 %v1930
    %2789 = vmatprep.subr.bf16.mxu0 %v1923
    %2790 = vmatpush1.bf16.msra.mxu0 %v1922
    %2791 = vmatprep.subr.bf16.mxu0 %v1915
    %2792 = vmatpush1.bf16.msra.mxu0 %v1914
    %2793 = vmatprep.subr.bf16.mxu0 %v2035
    %2794 = vmatpush2.bf16.msra.mxu0 %v2034
    %2795 = vmatprep.subr.bf16.mxu0 %v2027
    %2796 = vmatpush2.bf16.msra.mxu0 %v2026
    %2797 = vmatprep.subr.bf16.mxu0 %v2019
    %2798 = vmatpush2.bf16.msra.mxu0 %v2018
    %2799 = vmatprep.subr.bf16.mxu0 %v2011
    %2800 = vmatpush2.bf16.msra.mxu0 %v2010
    %2801 = vmatprep.subr.bf16.mxu0 %v2003
    %2802 = vmatpush2.bf16.msra.mxu0 %v2002
    %2803 = vmatprep.subr.bf16.mxu0 %v1995
    %2804 = vmatpush2.bf16.msra.mxu0 %v1994
    %2805 = vmatprep.subr.bf16.mxu0 %v1987
    %2806 = vmatpush2.bf16.msra.mxu0 %v1986
    %2807 = vmatprep.subr.bf16.mxu0 %v1979
    %2808 = vmatpush2.bf16.msra.mxu0 %v1978
    %2809 = vmatprep.mubr.bf16.mxu0 %v170
    %2810 = vmatmul.mubr.bf16.gmra.mxu0 %v169
    %v2811 = vpop.f32.mrf.mxu0
    %v2812 = vadd.f32 %v2771, %v2811
    %v2813 = vpop.f32.mrf.mxu0
    %v2814 = vadd.f32 %v2773, %v2813
    %v2815 = vpop.f32.mrf.mxu0
    %v2816 = vpop.f32.mrf.mxu0
    %2817 = vdwg.mxu0
    %2818 = vmatprep.subr.bf16.mxu0 %v2099
    %2819 = vmatpush1.bf16.msra.mxu0 %v2098
    %2820 = vmatprep.subr.bf16.mxu0 %v2091
    %2821 = vmatpush1.bf16.msra.mxu0 %v2090
    %2822 = vmatprep.subr.bf16.mxu0 %v2083
    %2823 = vmatpush1.bf16.msra.mxu0 %v2082
    %2824 = vmatprep.subr.bf16.mxu0 %v2075
    %2825 = vmatpush1.bf16.msra.mxu0 %v2074
    %2826 = vmatprep.subr.bf16.mxu0 %v2067
    %2827 = vmatpush1.bf16.msra.mxu0 %v2066
    %2828 = vmatprep.subr.bf16.mxu0 %v2059
    %2829 = vmatpush1.bf16.msra.mxu0 %v2058
    %2830 = vmatprep.subr.bf16.mxu0 %v2051
    %2831 = vmatpush1.bf16.msra.mxu0 %v2050
    %2832 = vmatprep.subr.bf16.mxu0 %v2043
    %2833 = vmatpush1.bf16.msra.mxu0 %v2042
    %2834 = vmatprep.subr.bf16.mxu0 %v2163
    %2835 = vmatpush2.bf16.msra.mxu0 %v2162
    %2836 = vmatprep.subr.bf16.mxu0 %v2155
    %2837 = vmatpush2.bf16.msra.mxu0 %v2154
    %2838 = vmatprep.subr.bf16.mxu0 %v2147
    %2839 = vmatpush2.bf16.msra.mxu0 %v2146
    %2840 = vmatprep.subr.bf16.mxu0 %v2139
    %2841 = vmatpush2.bf16.msra.mxu0 %v2138
    %2842 = vmatprep.subr.bf16.mxu0 %v2131
    %2843 = vmatpush2.bf16.msra.mxu0 %v2130
    %2844 = vmatprep.subr.bf16.mxu0 %v2123
    %2845 = vmatpush2.bf16.msra.mxu0 %v2122
    %2846 = vmatprep.subr.bf16.mxu0 %v2115
    %2847 = vmatpush2.bf16.msra.mxu0 %v2114
    %2848 = vmatprep.subr.bf16.mxu0 %v2107
    %2849 = vmatpush2.bf16.msra.mxu0 %v2106
    %2850 = vmatprep.mubr.bf16.mxu0 %v172
    %2851 = vmatmul.mubr.bf16.gmra.mxu0 %v171
    %v2852 = vpop.f32.mrf.mxu0
    %v2853 = vadd.f32 %v2812, %v2852
    %v2854 = vpop.f32.mrf.mxu0
    %v2855 = vadd.f32 %v2814, %v2854
    %v2856 = vpop.f32.mrf.mxu0
    %v2857 = vpop.f32.mrf.mxu0
    %2858 = vdwg.mxu0
    %2859 = vmatprep.subr.bf16.mxu0 0
    %2860 = vmatpush1.bf16.msra.mxu0 0
    %2861 = vmatprep.subr.bf16.mxu0 0
    %2862 = vmatpush1.bf16.msra.mxu0 0
    %2863 = vmatprep.subr.bf16.mxu0 0
    %2864 = vmatpush1.bf16.msra.mxu0 0
    %2865 = vmatprep.subr.bf16.mxu0 0
    %2866 = vmatpush1.bf16.msra.mxu0 0
    %2867 = vmatprep.subr.bf16.mxu0 0
    %2868 = vmatpush1.bf16.msra.mxu0 0
    %2869 = vmatprep.subr.bf16.mxu0 0
    %2870 = vmatpush1.bf16.msra.mxu0 0
    %2871 = vmatprep.subr.bf16.mxu0 0
    %2872 = vmatpush1.bf16.msra.mxu0 0
    %2873 = vmatprep.subr.bf16.mxu0 %v2171
    %2874 = vmatpush1.bf16.msra.mxu0 %v2170
    %2875 = vmatprep.subr.bf16.mxu0 0
    %2876 = vmatpush2.bf16.msra.mxu0 0
    %2877 = vmatprep.subr.bf16.mxu0 0
    %2878 = vmatpush2.bf16.msra.mxu0 0
    %2879 = vmatprep.subr.bf16.mxu0 0
    %2880 = vmatpush2.bf16.msra.mxu0 0
    %2881 = vmatprep.subr.bf16.mxu0 0
    %2882 = vmatpush2.bf16.msra.mxu0 0
    %2883 = vmatprep.subr.bf16.mxu0 0
    %2884 = vmatpush2.bf16.msra.mxu0 0
    %2885 = vmatprep.subr.bf16.mxu0 0
    %2886 = vmatpush2.bf16.msra.mxu0 0
    %2887 = vmatprep.subr.bf16.mxu0 0
    %2888 = vmatpush2.bf16.msra.mxu0 0
    %2889 = vmatprep.subr.bf16.mxu0 0
    %2890 = vmatpush2.bf16.msra.mxu0 0
    %2891 = vmatprep.mubr.bf16.mxu0 0
    %2892 = vmatmul.mubr.bf16.gmra.mxu0 %v2570
    %v2893 = vpop.f32.mrf.mxu0
    %v2894 = vadd.f32 %v2853, %v2893
    %v2895 = vpop.f32.mrf.mxu0
    %v2896 = vadd.f32 %v2855, %v2895
    %v2897 = vpop.f32.mrf.mxu0
    %v2898 = vpop.f32.mrf.mxu0
    %2899 = vdwg.mxu0
    %2900 = vmatprep.subr.bf16.mxu0 %v1845
    %2901 = vmatpush1.bf16.msra.mxu0 %v1844
    %2902 = vmatprep.subr.bf16.mxu0 %v1837
    %2903 = vmatpush1.bf16.msra.mxu0 %v1836
    %2904 = vmatprep.subr.bf16.mxu0 %v1829
    %2905 = vmatpush1.bf16.msra.mxu0 %v1828
    %2906 = vmatprep.subr.bf16.mxu0 %v1821
    %2907 = vmatpush1.bf16.msra.mxu0 %v1820
    %2908 = vmatprep.subr.bf16.mxu0 %v1813
    %2909 = vmatpush1.bf16.msra.mxu0 %v1812
    %2910 = vmatprep.subr.bf16.mxu0 %v1805
    %2911 = vmatpush1.bf16.msra.mxu0 %v1804
    %2912 = vmatprep.subr.bf16.mxu0 %v1797
    %2913 = vmatpush1.bf16.msra.mxu0 %v1796
    %2914 = vmatprep.subr.bf16.mxu0 %v1789
    %2915 = vmatpush1.bf16.msra.mxu0 %v1788
    %2916 = vmatprep.subr.bf16.mxu0 %v1909
    %2917 = vmatpush2.bf16.msra.mxu0 %v1908
    %2918 = vmatprep.subr.bf16.mxu0 %v1901
    %2919 = vmatpush2.bf16.msra.mxu0 %v1900
    %2920 = vmatprep.subr.bf16.mxu0 %v1893
    %2921 = vmatpush2.bf16.msra.mxu0 %v1892
    %2922 = vmatprep.subr.bf16.mxu0 %v1885
    %2923 = vmatpush2.bf16.msra.mxu0 %v1884
    %2924 = vmatprep.subr.bf16.mxu0 %v1877
    %2925 = vmatpush2.bf16.msra.mxu0 %v1876
    %2926 = vmatprep.subr.bf16.mxu0 %v1869
    %2927 = vmatpush2.bf16.msra.mxu0 %v1868
    %2928 = vmatprep.subr.bf16.mxu0 %v1861
    %2929 = vmatpush2.bf16.msra.mxu0 %v1860
    %2930 = vmatprep.subr.bf16.mxu0 %v1853
    %2931 = vmatpush2.bf16.msra.mxu0 %v1852
    %2932 = vmatprep.mubr.bf16.mxu0 %v168
    %2933 = vmatmul.mubr.bf16.gmra.mxu0 %v167
    %v2934 = vpop.f32.mrf.mxu0
    %v2935 = vadd.f32 %v587, %v2934
    %v2936 = vpop.f32.mrf.mxu0
    %v2937 = vadd.f32 %v591, %v2936
    %v2938 = vpop.f32.mrf.mxu0
    %v2939 = vpop.f32.mrf.mxu0
    %2940 = vdwg.mxu0
    %2941 = vmatprep.subr.bf16.mxu0 %v1973
    %2942 = vmatpush1.bf16.msra.mxu0 %v1972
    %2943 = vmatprep.subr.bf16.mxu0 %v1965
    %2944 = vmatpush1.bf16.msra.mxu0 %v1964
    %2945 = vmatprep.subr.bf16.mxu0 %v1957
    %2946 = vmatpush1.bf16.msra.mxu0 %v1956
    %2947 = vmatprep.subr.bf16.mxu0 %v1949
    %2948 = vmatpush1.bf16.msra.mxu0 %v1948
    %2949 = vmatprep.subr.bf16.mxu0 %v1941
    %2950 = vmatpush1.bf16.msra.mxu0 %v1940
    %2951 = vmatprep.subr.bf16.mxu0 %v1933
    %2952 = vmatpush1.bf16.msra.mxu0 %v1932
    %2953 = vmatprep.subr.bf16.mxu0 %v1925
    %2954 = vmatpush1.bf16.msra.mxu0 %v1924
    %2955 = vmatprep.subr.bf16.mxu0 %v1917
    %2956 = vmatpush1.bf16.msra.mxu0 %v1916
    %2957 = vmatprep.subr.bf16.mxu0 %v2037
    %2958 = vmatpush2.bf16.msra.mxu0 %v2036
    %2959 = vmatprep.subr.bf16.mxu0 %v2029
    %2960 = vmatpush2.bf16.msra.mxu0 %v2028
    %2961 = vmatprep.subr.bf16.mxu0 %v2021
    %2962 = vmatpush2.bf16.msra.mxu0 %v2020
    %2963 = vmatprep.subr.bf16.mxu0 %v2013
    %2964 = vmatpush2.bf16.msra.mxu0 %v2012
    %2965 = vmatprep.subr.bf16.mxu0 %v2005
    %2966 = vmatpush2.bf16.msra.mxu0 %v2004
    %2967 = vmatprep.subr.bf16.mxu0 %v1997
    %2968 = vmatpush2.bf16.msra.mxu0 %v1996
    %2969 = vmatprep.subr.bf16.mxu0 %v1989
    %2970 = vmatpush2.bf16.msra.mxu0 %v1988
    %2971 = vmatprep.subr.bf16.mxu0 %v1981
    %2972 = vmatpush2.bf16.msra.mxu0 %v1980
    %2973 = vmatprep.mubr.bf16.mxu0 %v170
    %2974 = vmatmul.mubr.bf16.gmra.mxu0 %v169
    %v2975 = vpop.f32.mrf.mxu0
    %v2976 = vadd.f32 %v2935, %v2975
    %v2977 = vpop.f32.mrf.mxu0
    %v2978 = vadd.f32 %v2937, %v2977
    %v2979 = vpop.f32.mrf.mxu0
    %v2980 = vpop.f32.mrf.mxu0
    %2981 = vdwg.mxu0
    %2982 = vmatprep.subr.bf16.mxu0 %v2101
    %2983 = vmatpush1.bf16.msra.mxu0 %v2100
    %2984 = vmatprep.subr.bf16.mxu0 %v2093
    %2985 = vmatpush1.bf16.msra.mxu0 %v2092
    %2986 = vmatprep.subr.bf16.mxu0 %v2085
    %2987 = vmatpush1.bf16.msra.mxu0 %v2084
    %2988 = vmatprep.subr.bf16.mxu0 %v2077
    %2989 = vmatpush1.bf16.msra.mxu0 %v2076
    %2990 = vmatprep.subr.bf16.mxu0 %v2069
    %2991 = vmatpush1.bf16.msra.mxu0 %v2068
    %2992 = vmatprep.subr.bf16.mxu0 %v2061
    %2993 = vmatpush1.bf16.msra.mxu0 %v2060
    %2994 = vmatprep.subr.bf16.mxu0 %v2053
    %2995 = vmatpush1.bf16.msra.mxu0 %v2052
    %2996 = vmatprep.subr.bf16.mxu0 %v2045
    %2997 = vmatpush1.bf16.msra.mxu0 %v2044
    %2998 = vmatprep.subr.bf16.mxu0 %v2165
    %2999 = vmatpush2.bf16.msra.mxu0 %v2164
    %3000 = vmatprep.subr.bf16.mxu0 %v2157
    %3001 = vmatpush2.bf16.msra.mxu0 %v2156
    %3002 = vmatprep.subr.bf16.mxu0 %v2149
    %3003 = vmatpush2.bf16.msra.mxu0 %v2148
    %3004 = vmatprep.subr.bf16.mxu0 %v2141
    %3005 = vmatpush2.bf16.msra.mxu0 %v2140
    %3006 = vmatprep.subr.bf16.mxu0 %v2133
    %3007 = vmatpush2.bf16.msra.mxu0 %v2132
    %3008 = vmatprep.subr.bf16.mxu0 %v2125
    %3009 = vmatpush2.bf16.msra.mxu0 %v2124
    %3010 = vmatprep.subr.bf16.mxu0 %v2117
    %3011 = vmatpush2.bf16.msra.mxu0 %v2116
    %3012 = vmatprep.subr.bf16.mxu0 %v2109
    %3013 = vmatpush2.bf16.msra.mxu0 %v2108
    %3014 = vmatprep.mubr.bf16.mxu0 %v172
    %3015 = vmatmul.mubr.bf16.gmra.mxu0 %v171
    %v3016 = vpop.f32.mrf.mxu0
    %v3017 = vadd.f32 %v2976, %v3016
    %v3018 = vpop.f32.mrf.mxu0
    %v3019 = vadd.f32 %v2978, %v3018
    %v3020 = vpop.f32.mrf.mxu0
    %v3021 = vpop.f32.mrf.mxu0
    %3022 = vdwg.mxu0
    %3023 = vmatprep.subr.bf16.mxu0 0
    %3024 = vmatpush1.bf16.msra.mxu0 0
    %3025 = vmatprep.subr.bf16.mxu0 0
    %3026 = vmatpush1.bf16.msra.mxu0 0
    %3027 = vmatprep.subr.bf16.mxu0 0
    %3028 = vmatpush1.bf16.msra.mxu0 0
    %3029 = vmatprep.subr.bf16.mxu0 0
    %3030 = vmatpush1.bf16.msra.mxu0 0
    %3031 = vmatprep.subr.bf16.mxu0 0
    %3032 = vmatpush1.bf16.msra.mxu0 0
    %3033 = vmatprep.subr.bf16.mxu0 0
    %3034 = vmatpush1.bf16.msra.mxu0 0
    %3035 = vmatprep.subr.bf16.mxu0 0
    %3036 = vmatpush1.bf16.msra.mxu0 0
    %3037 = vmatprep.subr.bf16.mxu0 %v2173
    %3038 = vmatpush1.bf16.msra.mxu0 %v2172
    %3039 = vmatprep.subr.bf16.mxu0 0
    %3040 = vmatpush2.bf16.msra.mxu0 0
    %3041 = vmatprep.subr.bf16.mxu0 0
    %3042 = vmatpush2.bf16.msra.mxu0 0
    %3043 = vmatprep.subr.bf16.mxu0 0
    %3044 = vmatpush2.bf16.msra.mxu0 0
    %3045 = vmatprep.subr.bf16.mxu0 0
    %3046 = vmatpush2.bf16.msra.mxu0 0
    %3047 = vmatprep.subr.bf16.mxu0 0
    %3048 = vmatpush2.bf16.msra.mxu0 0
    %3049 = vmatprep.subr.bf16.mxu0 0
    %3050 = vmatpush2.bf16.msra.mxu0 0
    %3051 = vmatprep.subr.bf16.mxu0 0
    %3052 = vmatpush2.bf16.msra.mxu0 0
    %3053 = vmatprep.subr.bf16.mxu0 0
    %3054 = vmatpush2.bf16.msra.mxu0 0
    %3055 = vmatprep.mubr.bf16.mxu0 0
    %3056 = vmatmul.mubr.bf16.gmra.mxu0 %v2570
    %v3057 = vpop.f32.mrf.mxu0
    %v3058 = vadd.f32 %v3017, %v3057
    %v3059 = vpop.f32.mrf.mxu0
    %v3060 = vadd.f32 %v3019, %v3059
    %v3061 = vpop.f32.mrf.mxu0
    %v3062 = vpop.f32.mrf.mxu0
    %3063 = vdwg.mxu0
    %3064 = vmatprep.subr.bf16.mxu0 %v1847
    %3065 = vmatpush1.bf16.msra.mxu0 %v1846
    %3066 = vmatprep.subr.bf16.mxu0 %v1839
    %3067 = vmatpush1.bf16.msra.mxu0 %v1838
    %3068 = vmatprep.subr.bf16.mxu0 %v1831
    %3069 = vmatpush1.bf16.msra.mxu0 %v1830
    %3070 = vmatprep.subr.bf16.mxu0 %v1823
    %3071 = vmatpush1.bf16.msra.mxu0 %v1822
    %3072 = vmatprep.subr.bf16.mxu0 %v1815
    %3073 = vmatpush1.bf16.msra.mxu0 %v1814
    %3074 = vmatprep.subr.bf16.mxu0 %v1807
    %3075 = vmatpush1.bf16.msra.mxu0 %v1806
    %3076 = vmatprep.subr.bf16.mxu0 %v1799
    %3077 = vmatpush1.bf16.msra.mxu0 %v1798
    %3078 = vmatprep.subr.bf16.mxu0 %v1791
    %3079 = vmatpush1.bf16.msra.mxu0 %v1790
    %3080 = vmatprep.subr.bf16.mxu0 %v1911
    %3081 = vmatpush2.bf16.msra.mxu0 %v1910
    %3082 = vmatprep.subr.bf16.mxu0 %v1903
    %3083 = vmatpush2.bf16.msra.mxu0 %v1902
    %3084 = vmatprep.subr.bf16.mxu0 %v1895
    %3085 = vmatpush2.bf16.msra.mxu0 %v1894
    %3086 = vmatprep.subr.bf16.mxu0 %v1887
    %3087 = vmatpush2.bf16.msra.mxu0 %v1886
    %3088 = vmatprep.subr.bf16.mxu0 %v1879
    %3089 = vmatpush2.bf16.msra.mxu0 %v1878
    %3090 = vmatprep.subr.bf16.mxu0 %v1871
    %3091 = vmatpush2.bf16.msra.mxu0 %v1870
    %3092 = vmatprep.subr.bf16.mxu0 %v1863
    %3093 = vmatpush2.bf16.msra.mxu0 %v1862
    %3094 = vmatprep.subr.bf16.mxu0 %v1855
    %3095 = vmatpush2.bf16.msra.mxu0 %v1854
    %3096 = vmatprep.mubr.bf16.mxu0 %v168
    %3097 = vmatmul.mubr.bf16.gmra.mxu0 %v167
    %v3098 = vpop.f32.mrf.mxu0
    %v3099 = vadd.f32 %v595, %v3098
    %v3100 = vpop.f32.mrf.mxu0
    %v3101 = vadd.f32 %v599, %v3100
    %v3102 = vpop.f32.mrf.mxu0
    %v3103 = vpop.f32.mrf.mxu0
    %3104 = vdwg.mxu0
    %3105 = vmatprep.subr.bf16.mxu0 %v1975
    %3106 = vmatpush1.bf16.msra.mxu0 %v1974
    %3107 = vmatprep.subr.bf16.mxu0 %v1967
    %3108 = vmatpush1.bf16.msra.mxu0 %v1966
    %3109 = vmatprep.subr.bf16.mxu0 %v1959
    %3110 = vmatpush1.bf16.msra.mxu0 %v1958
    %3111 = vmatprep.subr.bf16.mxu0 %v1951
    %3112 = vmatpush1.bf16.msra.mxu0 %v1950
    %3113 = vmatprep.subr.bf16.mxu0 %v1943
    %3114 = vmatpush1.bf16.msra.mxu0 %v1942
    %3115 = vmatprep.subr.bf16.mxu0 %v1935
    %3116 = vmatpush1.bf16.msra.mxu0 %v1934
    %3117 = vmatprep.subr.bf16.mxu0 %v1927
    %3118 = vmatpush1.bf16.msra.mxu0 %v1926
    %3119 = vmatprep.subr.bf16.mxu0 %v1919
    %3120 = vmatpush1.bf16.msra.mxu0 %v1918
    %3121 = vmatprep.subr.bf16.mxu0 %v2039
    %3122 = vmatpush2.bf16.msra.mxu0 %v2038
    %3123 = vmatprep.subr.bf16.mxu0 %v2031
    %3124 = vmatpush2.bf16.msra.mxu0 %v2030
    %3125 = vmatprep.subr.bf16.mxu0 %v2023
    %3126 = vmatpush2.bf16.msra.mxu0 %v2022
    %3127 = vmatprep.subr.bf16.mxu0 %v2015
    %3128 = vmatpush2.bf16.msra.mxu0 %v2014
    %3129 = vmatprep.subr.bf16.mxu0 %v2007
    %3130 = vmatpush2.bf16.msra.mxu0 %v2006
    %3131 = vmatprep.subr.bf16.mxu0 %v1999
    %3132 = vmatpush2.bf16.msra.mxu0 %v1998
    %3133 = vmatprep.subr.bf16.mxu0 %v1991
    %3134 = vmatpush2.bf16.msra.mxu0 %v1990
    %3135 = vmatprep.subr.bf16.mxu0 %v1983
    %3136 = vmatpush2.bf16.msra.mxu0 %v1982
    %3137 = vmatprep.mubr.bf16.mxu0 %v170
    %3138 = vmatmul.mubr.bf16.gmra.mxu0 %v169
    %v3139 = vpop.f32.mrf.mxu0
    %v3140 = vadd.f32 %v3099, %v3139
    %v3141 = vpop.f32.mrf.mxu0
    %v3142 = vadd.f32 %v3101, %v3141
    %v3143 = vpop.f32.mrf.mxu0
    %v3144 = vpop.f32.mrf.mxu0
    %3145 = vdwg.mxu0
    %3146 = vmatprep.subr.bf16.mxu0 %v2103
    %3147 = vmatpush1.bf16.msra.mxu0 %v2102
    %3148 = vmatprep.subr.bf16.mxu0 %v2095
    %3149 = vmatpush1.bf16.msra.mxu0 %v2094
    %3150 = vmatprep.subr.bf16.mxu0 %v2087
    %3151 = vmatpush1.bf16.msra.mxu0 %v2086
    %3152 = vmatprep.subr.bf16.mxu0 %v2079
    %3153 = vmatpush1.bf16.msra.mxu0 %v2078
    %3154 = vmatprep.subr.bf16.mxu0 %v2071
    %3155 = vmatpush1.bf16.msra.mxu0 %v2070
    %3156 = vmatprep.subr.bf16.mxu0 %v2063
    %3157 = vmatpush1.bf16.msra.mxu0 %v2062
    %3158 = vmatprep.subr.bf16.mxu0 %v2055
    %3159 = vmatpush1.bf16.msra.mxu0 %v2054
    %3160 = vmatprep.subr.bf16.mxu0 %v2047
    %3161 = vmatpush1.bf16.msra.mxu0 %v2046
    %3162 = vmatprep.subr.bf16.mxu0 %v2167
    %3163 = vmatpush2.bf16.msra.mxu0 %v2166
    %3164 = vmatprep.subr.bf16.mxu0 %v2159
    %3165 = vmatpush2.bf16.msra.mxu0 %v2158
    %3166 = vmatprep.subr.bf16.mxu0 %v2151
    %3167 = vmatpush2.bf16.msra.mxu0 %v2150
    %3168 = vmatprep.subr.bf16.mxu0 %v2143
    %3169 = vmatpush2.bf16.msra.mxu0 %v2142
    %3170 = vmatprep.subr.bf16.mxu0 %v2135
    %3171 = vmatpush2.bf16.msra.mxu0 %v2134
    %3172 = vmatprep.subr.bf16.mxu0 %v2127
    %3173 = vmatpush2.bf16.msra.mxu0 %v2126
    %3174 = vmatprep.subr.bf16.mxu0 %v2119
    %3175 = vmatpush2.bf16.msra.mxu0 %v2118
    %3176 = vmatprep.subr.bf16.mxu0 %v2111
    %3177 = vmatpush2.bf16.msra.mxu0 %v2110
    %3178 = vmatprep.mubr.bf16.mxu0 %v172
    %3179 = vmatmul.mubr.bf16.gmra.mxu0 %v171
    %v3180 = vpop.f32.mrf.mxu0
    %v3181 = vadd.f32 %v3140, %v3180
    %v3182 = vpop.f32.mrf.mxu0
    %v3183 = vadd.f32 %v3142, %v3182
    %v3184 = vpop.f32.mrf.mxu0
    %v3185 = vpop.f32.mrf.mxu0
    %3186 = vdwg.mxu0
    %3187 = vmatprep.subr.bf16.mxu0 0
    %3188 = vmatpush1.bf16.msra.mxu0 0
    %3189 = vmatprep.subr.bf16.mxu0 0
    %3190 = vmatpush1.bf16.msra.mxu0 0
    %3191 = vmatprep.subr.bf16.mxu0 0
    %3192 = vmatpush1.bf16.msra.mxu0 0
    %3193 = vmatprep.subr.bf16.mxu0 0
    %3194 = vmatpush1.bf16.msra.mxu0 0
    %3195 = vmatprep.subr.bf16.mxu0 0
    %3196 = vmatpush1.bf16.msra.mxu0 0
    %3197 = vmatprep.subr.bf16.mxu0 0
    %3198 = vmatpush1.bf16.msra.mxu0 0
    %3199 = vmatprep.subr.bf16.mxu0 0
    %3200 = vmatpush1.bf16.msra.mxu0 0
    %3201 = vmatprep.subr.bf16.mxu0 %v2175
    %3202 = vmatpush1.bf16.msra.mxu0 %v2174
    %3203 = vmatprep.subr.bf16.mxu0 0
    %3204 = vmatpush2.bf16.msra.mxu0 0
    %3205 = vmatprep.subr.bf16.mxu0 0
    %3206 = vmatpush2.bf16.msra.mxu0 0
    %3207 = vmatprep.subr.bf16.mxu0 0
    %3208 = vmatpush2.bf16.msra.mxu0 0
    %3209 = vmatprep.subr.bf16.mxu0 0
    %3210 = vmatpush2.bf16.msra.mxu0 0
    %3211 = vmatprep.subr.bf16.mxu0 0
    %3212 = vmatpush2.bf16.msra.mxu0 0
    %3213 = vmatprep.subr.bf16.mxu0 0
    %3214 = vmatpush2.bf16.msra.mxu0 0
    %3215 = vmatprep.subr.bf16.mxu0 0
    %3216 = vmatpush2.bf16.msra.mxu0 0
    %3217 = vmatprep.subr.bf16.mxu0 0
    %3218 = vmatpush2.bf16.msra.mxu0 0
    %3219 = vmatprep.mubr.bf16.mxu0 0
    %3220 = vmatmul.mubr.bf16.gmra.mxu0 %v2570
    %v3221 = vpop.f32.mrf.mxu0
    %v3222 = vadd.f32 %v3181, %v3221
    %v3223 = vpop.f32.mrf.mxu0
    %v3224 = vadd.f32 %v3183, %v3223
    %v3225 = vpop.f32.mrf.mxu0
    %v3226 = vpop.f32.mrf.mxu0
    %3227 = vdwg.mxu0
    %v3228 = vmax.f32 %v2730, 0.0
    %v3229 = vmax.f32 %v2732, 0.0
    %v3230 = vmax.f32 %v2894, 0.0
    %v3231 = vmax.f32 %v2896, 0.0
    %v3232 = vmax.f32 %v3058, 0.0
    %v3233 = vmax.f32 %v3060, 0.0
    %v3234 = vmax.f32 %v3222, 0.0
    %v3235 = vmax.f32 %v3224, 0.0
    %v3236 = vpack.c.bf16 %v3228, %v3228
    %v3237 = vpack.c.bf16 %v3229, %v3229
    %v3238 = vpack.c.bf16 %v3230, %v3230
    %v3239 = vpack.c.bf16 %v3231, %v3231
    %v3240 = vpack.c.bf16 %v3232, %v3232
    %v3241 = vpack.c.bf16 %v3233, %v3233
    %v3242 = vpack.c.bf16 %v3234, %v3234
    %v3243 = vpack.c.bf16 %v3235, %v3235
    %v3244 = vld [vmem:[#allocation7] sm:$0xf]
    %v3245 = vld [vmem:[#allocation7 + $0x4] sm:$0xf]
    %v3246 = vld [vmem:[#allocation7 + $0x8] sm:$0xf]
    %v3247 = vld [vmem:[#allocation7 + $0xc] sm:$0xf]
    %v3248 = vld [vmem:[#allocation7 + $0x10] sm:$0xf]
    %v3249 = vld [vmem:[#allocation7 + $0x14] sm:$0xf]
    %v3250 = vld [vmem:[#allocation7 + $0x18] sm:$0xf]
    %v3251 = vld [vmem:[#allocation7 + $0x1c] sm:$0xf]
    %v3252 = vld [vmem:[#allocation7 + $0x20] sm:$0xf]
    %v3253 = vld [vmem:[#allocation7 + $0x24] sm:$0xf]
    %v3254 = vld [vmem:[#allocation7 + $0x28] sm:$0xf]
    %v3255 = vld [vmem:[#allocation7 + $0x2c] sm:$0xf]
    %v3256 = vld [vmem:[#allocation7 + $0x30] sm:$0xf]
    %v3257 = vld [vmem:[#allocation7 + $0x34] sm:$0xf]
    %v3258 = vld [vmem:[#allocation7 + $0x38] sm:$0xf]
    %v3259 = vld [vmem:[#allocation7 + $0x3c] sm:$0xf]
    %v3260 = vld [vmem:[#allocation7 + $0x40] sm:$0xf]
    %v3261 = vld [vmem:[#allocation7 + $0x44] sm:$0xf]
    %v3262 = vld [vmem:[#allocation7 + $0x48] sm:$0xf]
    %v3263 = vld [vmem:[#allocation7 + $0x4c] sm:$0xf]
    %v3264 = vld [vmem:[#allocation7 + $0x50] sm:$0xf]
    %v3265 = vld [vmem:[#allocation7 + $0x54] sm:$0xf]
    %v3266 = vld [vmem:[#allocation7 + $0x58] sm:$0xf]
    %v3267 = vld [vmem:[#allocation7 + $0x5c] sm:$0xf]
    %v3268 = vld [vmem:[#allocation7 + $0x60] sm:$0xf]
    %v3269 = vld [vmem:[#allocation7 + $0x64] sm:$0xf]
    %v3270 = vld [vmem:[#allocation7 + $0x68] sm:$0xf]
    %v3271 = vld [vmem:[#allocation7 + $0x6c] sm:$0xf]
    %v3272 = vld [vmem:[#allocation7 + $0x70] sm:$0xf]
    %v3273 = vld [vmem:[#allocation7 + $0x74] sm:$0xf]
    %v3274 = vld [vmem:[#allocation7 + $0x78] sm:$0xf]
    %v3275 = vld [vmem:[#allocation7 + $0x7c] sm:$0xf]
    %v3276 = vld [vmem:[#allocation7 + $0x80] sm:$0xf]
    %v3277 = vld [vmem:[#allocation7 + $0x84] sm:$0xf]
    %v3278 = vld [vmem:[#allocation7 + $0x88] sm:$0xf]
    %v3279 = vld [vmem:[#allocation7 + $0x8c] sm:$0xf]
    %v3280 = vld [vmem:[#allocation7 + $0x90] sm:$0xf]
    %v3281 = vld [vmem:[#allocation7 + $0x94] sm:$0xf]
    %v3282 = vld [vmem:[#allocation7 + $0x98] sm:$0xf]
    %v3283 = vld [vmem:[#allocation7 + $0x9c] sm:$0xf]
    %v3284 = vld [vmem:[#allocation7 + $0xa0] sm:$0xf]
    %v3285 = vld [vmem:[#allocation7 + $0xa4] sm:$0xf]
    %v3286 = vld [vmem:[#allocation7 + $0xa8] sm:$0xf]
    %v3287 = vld [vmem:[#allocation7 + $0xac] sm:$0xf]
    %v3288 = vld [vmem:[#allocation7 + $0xb0] sm:$0xf]
    %v3289 = vld [vmem:[#allocation7 + $0xb4] sm:$0xf]
    %v3290 = vld [vmem:[#allocation7 + $0xb8] sm:$0xf]
    %v3291 = vld [vmem:[#allocation7 + $0xbc] sm:$0xf]
    %v3292 = vld [vmem:[#allocation7 + $0xc0] sm:$0xf]
    %v3293 = vld [vmem:[#allocation7 + $0xc4] sm:$0xf]
    %v3294 = vld [vmem:[#allocation7 + $0xc8] sm:$0xf]
    %v3295 = vld [vmem:[#allocation7 + $0xcc] sm:$0xf]
    %v3296 = vld [vmem:[#allocation7 + $0xd0] sm:$0xf]
    %v3297 = vld [vmem:[#allocation7 + $0xd4] sm:$0xf]
    %v3298 = vld [vmem:[#allocation7 + $0xd8] sm:$0xf]
    %v3299 = vld [vmem:[#allocation7 + $0xdc] sm:$0xf]
    %v3300 = vld [vmem:[#allocation7 + $0xe0] sm:$0xf]
    %v3301 = vld [vmem:[#allocation7 + $0xe4] sm:$0xf]
    %v3302 = vld [vmem:[#allocation7 + $0xe8] sm:$0xf]
    %v3303 = vld [vmem:[#allocation7 + $0xec] sm:$0xf]
    %v3304 = vld [vmem:[#allocation7 + $0xf0] sm:$0xf]
    %v3305 = vld [vmem:[#allocation7 + $0xf4] sm:$0xf]
    %v3306 = vld [vmem:[#allocation7 + $0xf8] sm:$0xf]
    %v3307 = vld [vmem:[#allocation7 + $0xfc] sm:$0xf]
    %v3308 = vld [vmem:[#allocation7 + $0x100] sm:$0xf]
    %v3309 = vld [vmem:[#allocation7 + $0x104] sm:$0xf]
    %v3310 = vld [vmem:[#allocation7 + $0x108] sm:$0xf]
    %v3311 = vld [vmem:[#allocation7 + $0x10c] sm:$0xf]
    %v3312 = vld [vmem:[#allocation7 + $0x110] sm:$0xf]
    %v3313 = vld [vmem:[#allocation7 + $0x114] sm:$0xf]
    %v3314 = vld [vmem:[#allocation7 + $0x118] sm:$0xf]
    %v3315 = vld [vmem:[#allocation7 + $0x11c] sm:$0xf]
    %v3316 = vld [vmem:[#allocation7 + $0x120] sm:$0xf]
    %v3317 = vld [vmem:[#allocation7 + $0x124] sm:$0xf]
    %v3318 = vld [vmem:[#allocation7 + $0x128] sm:$0xf]
    %v3319 = vld [vmem:[#allocation7 + $0x12c] sm:$0xf]
    %v3320 = vld [vmem:[#allocation7 + $0x130] sm:$0xf]
    %v3321 = vld [vmem:[#allocation7 + $0x134] sm:$0xf]
    %v3322 = vld [vmem:[#allocation7 + $0x138] sm:$0xf]
    %v3323 = vld [vmem:[#allocation7 + $0x13c] sm:$0xf]
    %v3324 = vld [vmem:[#allocation7 + $0x140] sm:$0xf]
    %v3325 = vld [vmem:[#allocation7 + $0x144] sm:$0xf]
    %v3326 = vld [vmem:[#allocation7 + $0x148] sm:$0xf]
    %v3327 = vld [vmem:[#allocation7 + $0x14c] sm:$0xf]
    %v3328 = vld [vmem:[#allocation7 + $0x150] sm:$0xf]
    %v3329 = vld [vmem:[#allocation7 + $0x154] sm:$0xf]
    %v3330 = vld [vmem:[#allocation7 + $0x158] sm:$0xf]
    %v3331 = vld [vmem:[#allocation7 + $0x15c] sm:$0xf]
    %v3332 = vld [vmem:[#allocation7 + $0x160] sm:$0xf]
    %v3333 = vld [vmem:[#allocation7 + $0x164] sm:$0xf]
    %v3334 = vld [vmem:[#allocation7 + $0x168] sm:$0xf]
    %v3335 = vld [vmem:[#allocation7 + $0x16c] sm:$0xf]
    %v3336 = vld [vmem:[#allocation7 + $0x170] sm:$0xf]
    %v3337 = vld [vmem:[#allocation7 + $0x174] sm:$0xf]
    %v3338 = vld [vmem:[#allocation7 + $0x178] sm:$0xf]
    %v3339 = vld [vmem:[#allocation7 + $0x17c] sm:$0xf]
    %v3340 = vld [vmem:[#allocation7 + $0x180] sm:$0xf]
    %v3341 = vld [vmem:[#allocation7 + $0x184] sm:$0xf]
    %v3342 = vld [vmem:[#allocation7 + $0x188] sm:$0xf]
    %v3343 = vld [vmem:[#allocation7 + $0x18c] sm:$0xf]
    %v3344 = vld [vmem:[#allocation7 + $0x190] sm:$0xf]
    %v3345 = vld [vmem:[#allocation7 + $0x194] sm:$0xf]
    %v3346 = vld [vmem:[#allocation7 + $0x198] sm:$0xf]
    %v3347 = vld [vmem:[#allocation7 + $0x19c] sm:$0xf]
    %v3348 = vld [vmem:[#allocation7 + $0x1a0] sm:$0xf]
    %v3349 = vld [vmem:[#allocation7 + $0x1a4] sm:$0xf]
    %v3350 = vld [vmem:[#allocation7 + $0x1a8] sm:$0xf]
    %v3351 = vld [vmem:[#allocation7 + $0x1ac] sm:$0xf]
    %v3352 = vld [vmem:[#allocation7 + $0x1b0] sm:$0xf]
    %v3353 = vld [vmem:[#allocation7 + $0x1b4] sm:$0xf]
    %v3354 = vld [vmem:[#allocation7 + $0x1b8] sm:$0xf]
    %v3355 = vld [vmem:[#allocation7 + $0x1bc] sm:$0xf]
    %v3356 = vld [vmem:[#allocation7 + $0x1c0] sm:$0xf]
    %v3357 = vld [vmem:[#allocation7 + $0x1c4] sm:$0xf]
    %v3358 = vld [vmem:[#allocation7 + $0x1c8] sm:$0xf]
    %v3359 = vld [vmem:[#allocation7 + $0x1cc] sm:$0xf]
    %v3360 = vld [vmem:[#allocation7 + $0x1d0] sm:$0xf]
    %v3361 = vld [vmem:[#allocation7 + $0x1d4] sm:$0xf]
    %v3362 = vld [vmem:[#allocation7 + $0x1d8] sm:$0xf]
    %v3363 = vld [vmem:[#allocation7 + $0x1dc] sm:$0xf]
    %v3364 = vld [vmem:[#allocation7 + $0x1e0] sm:$0xf]
    %v3365 = vld [vmem:[#allocation7 + $0x1e4] sm:$0xf]
    %v3366 = vld [vmem:[#allocation7 + $0x1e8] sm:$0xf]
    %v3367 = vld [vmem:[#allocation7 + $0x1ec] sm:$0xf]
    %v3368 = vld [vmem:[#allocation7 + $0x1f0] sm:$0xf]
    %v3369 = vld [vmem:[#allocation7 + $0x1f4] sm:$0xf]
    %v3370 = vld [vmem:[#allocation7 + $0x1f8] sm:$0xf]
    %v3371 = vld [vmem:[#allocation7 + $0x1fc] sm:$0xf]
    %v3372 = vld [vmem:[#allocation8] sm:$0x1]
    %v3374 = vlaneseq
    %v3375 = vshrl.u32 %v3374, 7
    %v3376 = vsub.s32 0, %v3375
    %v3377 = vrot.slane %v3372, %v3376
    %v3507 = vunpack.c.l.b16 %v3244
    %v3508 = vunpack.c.l.b16 %v3245
    %v3509 = vunpack.c.l.b16 %v3246
    %v3510 = vunpack.c.l.b16 %v3247
    %v3511 = vunpack.c.l.b16 %v3248
    %v3512 = vunpack.c.l.b16 %v3249
    %v3513 = vunpack.c.l.b16 %v3250
    %v3514 = vunpack.c.l.b16 %v3251
    %v3515 = vunpack.c.l.b16 %v3252
    %v3516 = vunpack.c.l.b16 %v3253
    %v3517 = vunpack.c.l.b16 %v3254
    %v3518 = vunpack.c.l.b16 %v3255
    %v3519 = vunpack.c.l.b16 %v3256
    %v3520 = vunpack.c.l.b16 %v3257
    %v3521 = vunpack.c.l.b16 %v3258
    %v3522 = vunpack.c.l.b16 %v3259
    %v3523 = vunpack.c.l.b16 %v3260
    %v3524 = vunpack.c.l.b16 %v3261
    %v3525 = vunpack.c.l.b16 %v3262
    %v3526 = vunpack.c.l.b16 %v3263
    %v3527 = vunpack.c.l.b16 %v3264
    %v3528 = vunpack.c.l.b16 %v3265
    %v3529 = vunpack.c.l.b16 %v3266
    %v3530 = vunpack.c.l.b16 %v3267
    %v3531 = vunpack.c.l.b16 %v3268
    %v3532 = vunpack.c.l.b16 %v3269
    %v3533 = vunpack.c.l.b16 %v3270
    %v3534 = vunpack.c.l.b16 %v3271
    %v3535 = vunpack.c.l.b16 %v3272
    %v3536 = vunpack.c.l.b16 %v3273
    %v3537 = vunpack.c.l.b16 %v3274
    %v3538 = vunpack.c.l.b16 %v3275
    %v3539 = vunpack.c.l.b16 %v3276
    %v3540 = vunpack.c.l.b16 %v3277
    %v3541 = vunpack.c.l.b16 %v3278
    %v3542 = vunpack.c.l.b16 %v3279
    %v3543 = vunpack.c.l.b16 %v3280
    %v3544 = vunpack.c.l.b16 %v3281
    %v3545 = vunpack.c.l.b16 %v3282
    %v3546 = vunpack.c.l.b16 %v3283
    %v3547 = vunpack.c.l.b16 %v3284
    %v3548 = vunpack.c.l.b16 %v3285
    %v3549 = vunpack.c.l.b16 %v3286
    %v3550 = vunpack.c.l.b16 %v3287
    %v3551 = vunpack.c.l.b16 %v3288
    %v3552 = vunpack.c.l.b16 %v3289
    %v3553 = vunpack.c.l.b16 %v3290
    %v3554 = vunpack.c.l.b16 %v3291
    %v3555 = vunpack.c.l.b16 %v3292
    %v3556 = vunpack.c.l.b16 %v3293
    %v3557 = vunpack.c.l.b16 %v3294
    %v3558 = vunpack.c.l.b16 %v3295
    %v3559 = vunpack.c.l.b16 %v3296
    %v3560 = vunpack.c.l.b16 %v3297
    %v3561 = vunpack.c.l.b16 %v3298
    %v3562 = vunpack.c.l.b16 %v3299
    %v3563 = vunpack.c.l.b16 %v3300
    %v3564 = vunpack.c.l.b16 %v3301
    %v3565 = vunpack.c.l.b16 %v3302
    %v3566 = vunpack.c.l.b16 %v3303
    %v3567 = vunpack.c.l.b16 %v3304
    %v3568 = vunpack.c.l.b16 %v3305
    %v3569 = vunpack.c.l.b16 %v3306
    %v3570 = vunpack.c.l.b16 %v3307
    %v3571 = vunpack.c.l.b16 %v3308
    %v3572 = vunpack.c.l.b16 %v3309
    %v3573 = vunpack.c.l.b16 %v3310
    %v3574 = vunpack.c.l.b16 %v3311
    %v3575 = vunpack.c.l.b16 %v3312
    %v3576 = vunpack.c.l.b16 %v3313
    %v3577 = vunpack.c.l.b16 %v3314
    %v3578 = vunpack.c.l.b16 %v3315
    %v3579 = vunpack.c.l.b16 %v3316
    %v3580 = vunpack.c.l.b16 %v3317
    %v3581 = vunpack.c.l.b16 %v3318
    %v3582 = vunpack.c.l.b16 %v3319
    %v3583 = vunpack.c.l.b16 %v3320
    %v3584 = vunpack.c.l.b16 %v3321
    %v3585 = vunpack.c.l.b16 %v3322
    %v3586 = vunpack.c.l.b16 %v3323
    %v3587 = vunpack.c.l.b16 %v3324
    %v3588 = vunpack.c.l.b16 %v3325
    %v3589 = vunpack.c.l.b16 %v3326
    %v3590 = vunpack.c.l.b16 %v3327
    %v3591 = vunpack.c.l.b16 %v3328
    %v3592 = vunpack.c.l.b16 %v3329
    %v3593 = vunpack.c.l.b16 %v3330
    %v3594 = vunpack.c.l.b16 %v3331
    %v3595 = vunpack.c.l.b16 %v3332
    %v3596 = vunpack.c.l.b16 %v3333
    %v3597 = vunpack.c.l.b16 %v3334
    %v3598 = vunpack.c.l.b16 %v3335
    %v3599 = vunpack.c.l.b16 %v3336
    %v3600 = vunpack.c.l.b16 %v3337
    %v3601 = vunpack.c.l.b16 %v3338
    %v3602 = vunpack.c.l.b16 %v3339
    %v3603 = vunpack.c.l.b16 %v3340
    %v3604 = vunpack.c.l.b16 %v3341
    %v3605 = vunpack.c.l.b16 %v3342
    %v3606 = vunpack.c.l.b16 %v3343
    %v3607 = vunpack.c.l.b16 %v3344
    %v3608 = vunpack.c.l.b16 %v3345
    %v3609 = vunpack.c.l.b16 %v3346
    %v3610 = vunpack.c.l.b16 %v3347
    %v3611 = vunpack.c.l.b16 %v3348
    %v3612 = vunpack.c.l.b16 %v3349
    %v3613 = vunpack.c.l.b16 %v3350
    %v3614 = vunpack.c.l.b16 %v3351
    %v3615 = vunpack.c.l.b16 %v3352
    %v3616 = vunpack.c.l.b16 %v3353
    %v3617 = vunpack.c.l.b16 %v3354
    %v3618 = vunpack.c.l.b16 %v3355
    %v3619 = vunpack.c.l.b16 %v3356
    %v3620 = vunpack.c.l.b16 %v3357
    %v3621 = vunpack.c.l.b16 %v3358
    %v3622 = vunpack.c.l.b16 %v3359
    %v3623 = vunpack.c.l.b16 %v3360
    %v3624 = vunpack.c.l.b16 %v3361
    %v3625 = vunpack.c.l.b16 %v3362
    %v3626 = vunpack.c.l.b16 %v3363
    %v3627 = vunpack.c.l.b16 %v3364
    %v3628 = vunpack.c.l.b16 %v3365
    %v3629 = vunpack.c.l.b16 %v3366
    %v3630 = vunpack.c.l.b16 %v3367
    %v3631 = vunpack.c.l.b16 %v3368
    %v3632 = vunpack.c.l.b16 %v3369
    %v3633 = vunpack.c.l.b16 %v3370
    %v3634 = vunpack.c.l.b16 %v3371
    %v3635 = vpack.c.b16 %v3508, %v3507
    %v3636 = vpack.c.b16 %v3510, %v3509
    %v3637 = vpack.c.b16 %v3512, %v3511
    %v3638 = vpack.c.b16 %v3514, %v3513
    %v3639 = vpack.c.b16 %v3516, %v3515
    %v3640 = vpack.c.b16 %v3518, %v3517
    %v3641 = vpack.c.b16 %v3520, %v3519
    %v3642 = vpack.c.b16 %v3522, %v3521
    %v3643 = vpack.c.b16 %v3524, %v3523
    %v3644 = vpack.c.b16 %v3526, %v3525
    %v3645 = vpack.c.b16 %v3528, %v3527
    %v3646 = vpack.c.b16 %v3530, %v3529
    %v3647 = vpack.c.b16 %v3532, %v3531
    %v3648 = vpack.c.b16 %v3534, %v3533
    %v3649 = vpack.c.b16 %v3536, %v3535
    %v3650 = vpack.c.b16 %v3538, %v3537
    %v3651 = vpack.c.b16 %v3540, %v3539
    %v3652 = vpack.c.b16 %v3542, %v3541
    %v3653 = vpack.c.b16 %v3544, %v3543
    %v3654 = vpack.c.b16 %v3546, %v3545
    %v3655 = vpack.c.b16 %v3548, %v3547
    %v3656 = vpack.c.b16 %v3550, %v3549
    %v3657 = vpack.c.b16 %v3552, %v3551
    %v3658 = vpack.c.b16 %v3554, %v3553
    %v3659 = vpack.c.b16 %v3556, %v3555
    %v3660 = vpack.c.b16 %v3558, %v3557
    %v3661 = vpack.c.b16 %v3560, %v3559
    %v3662 = vpack.c.b16 %v3562, %v3561
    %v3663 = vpack.c.b16 %v3564, %v3563
    %v3664 = vpack.c.b16 %v3566, %v3565
    %v3665 = vpack.c.b16 %v3568, %v3567
    %v3666 = vpack.c.b16 %v3570, %v3569
    %v3667 = vpack.c.b16 %v3572, %v3571
    %v3668 = vpack.c.b16 %v3574, %v3573
    %v3669 = vpack.c.b16 %v3576, %v3575
    %v3670 = vpack.c.b16 %v3578, %v3577
    %v3671 = vpack.c.b16 %v3580, %v3579
    %v3672 = vpack.c.b16 %v3582, %v3581
    %v3673 = vpack.c.b16 %v3584, %v3583
    %v3674 = vpack.c.b16 %v3586, %v3585
    %v3675 = vpack.c.b16 %v3588, %v3587
    %v3676 = vpack.c.b16 %v3590, %v3589
    %v3677 = vpack.c.b16 %v3592, %v3591
    %v3678 = vpack.c.b16 %v3594, %v3593
    %v3679 = vpack.c.b16 %v3596, %v3595
    %v3680 = vpack.c.b16 %v3598, %v3597
    %v3681 = vpack.c.b16 %v3600, %v3599
    %v3682 = vpack.c.b16 %v3602, %v3601
    %v3683 = vpack.c.b16 %v3604, %v3603
    %v3684 = vpack.c.b16 %v3606, %v3605
    %v3685 = vpack.c.b16 %v3608, %v3607
    %v3686 = vpack.c.b16 %v3610, %v3609
    %v3687 = vpack.c.b16 %v3612, %v3611
    %v3688 = vpack.c.b16 %v3614, %v3613
    %v3689 = vpack.c.b16 %v3616, %v3615
    %v3690 = vpack.c.b16 %v3618, %v3617
    %v3691 = vpack.c.b16 %v3620, %v3619
    %v3692 = vpack.c.b16 %v3622, %v3621
    %v3693 = vpack.c.b16 %v3624, %v3623
    %v3694 = vpack.c.b16 %v3626, %v3625
    %v3695 = vpack.c.b16 %v3628, %v3627
    %v3696 = vpack.c.b16 %v3630, %v3629
    %v3697 = vpack.c.b16 %v3632, %v3631
    %v3698 = vpack.c.b16 %v3634, %v3633
    %3763 = vmatprep.subr.bf16.mxu0 0
    %3764 = vmatpush1.bf16.msra.mxu0 %v3642
    %3765 = vmatprep.subr.bf16.mxu0 0
    %3766 = vmatpush1.bf16.msra.mxu0 %v3641
    %3767 = vmatprep.subr.bf16.mxu0 0
    %3768 = vmatpush1.bf16.msra.mxu0 %v3640
    %3769 = vmatprep.subr.bf16.mxu0 0
    %3770 = vmatpush1.bf16.msra.mxu0 %v3639
    %3771 = vmatprep.subr.bf16.mxu0 0
    %3772 = vmatpush1.bf16.msra.mxu0 %v3638
    %3773 = vmatprep.subr.bf16.mxu0 0
    %3774 = vmatpush1.bf16.msra.mxu0 %v3637
    %3775 = vmatprep.subr.bf16.mxu0 0
    %3776 = vmatpush1.bf16.msra.mxu0 %v3636
    %3777 = vmatprep.subr.bf16.mxu0 0
    %3778 = vmatpush1.bf16.msra.mxu0 %v3635
    %3779 = vmatprep.subr.bf16.mxu0 0
    %3780 = vmatpush2.bf16.msra.mxu0 %v3650
    %3781 = vmatprep.subr.bf16.mxu0 0
    %3782 = vmatpush2.bf16.msra.mxu0 %v3649
    %3783 = vmatprep.subr.bf16.mxu0 0
    %3784 = vmatpush2.bf16.msra.mxu0 %v3648
    %3785 = vmatprep.subr.bf16.mxu0 0
    %3786 = vmatpush2.bf16.msra.mxu0 %v3647
    %3787 = vmatprep.subr.bf16.mxu0 0
    %3788 = vmatpush2.bf16.msra.mxu0 %v3646
    %3789 = vmatprep.subr.bf16.mxu0 0
    %3790 = vmatpush2.bf16.msra.mxu0 %v3645
    %3791 = vmatprep.subr.bf16.mxu0 0
    %3792 = vmatpush2.bf16.msra.mxu0 %v3644
    %3793 = vmatprep.subr.bf16.mxu0 0
    %3794 = vmatpush2.bf16.msra.mxu0 %v3643
    %3795 = vmatprep.mubr.bf16.mxu0 %v3237
    %3796 = vmatmul.mubr.bf16.gmra.mxu0 %v3236
    %v3797 = vpop.f32.mrf.mxu0
    %v3798 = vadd.f32 %v3377, %v3797
    %v3799 = vpop.f32.mrf.mxu0
    %v3800 = vpop.f32.mrf.mxu0
    %v3801 = vpop.f32.mrf.mxu0
    %3802 = vdwg.mxu0
    %3803 = vmatprep.subr.bf16.mxu0 0
    %3804 = vmatpush1.bf16.msra.mxu0 %v3658
    %3805 = vmatprep.subr.bf16.mxu0 0
    %3806 = vmatpush1.bf16.msra.mxu0 %v3657
    %3807 = vmatprep.subr.bf16.mxu0 0
    %3808 = vmatpush1.bf16.msra.mxu0 %v3656
    %3809 = vmatprep.subr.bf16.mxu0 0
    %3810 = vmatpush1.bf16.msra.mxu0 %v3655
    %3811 = vmatprep.subr.bf16.mxu0 0
    %3812 = vmatpush1.bf16.msra.mxu0 %v3654
    %3813 = vmatprep.subr.bf16.mxu0 0
    %3814 = vmatpush1.bf16.msra.mxu0 %v3653
    %3815 = vmatprep.subr.bf16.mxu0 0
    %3816 = vmatpush1.bf16.msra.mxu0 %v3652
    %3817 = vmatprep.subr.bf16.mxu0 0
    %3818 = vmatpush1.bf16.msra.mxu0 %v3651
    %3819 = vmatprep.subr.bf16.mxu0 0
    %3820 = vmatpush2.bf16.msra.mxu0 %v3666
    %3821 = vmatprep.subr.bf16.mxu0 0
    %3822 = vmatpush2.bf16.msra.mxu0 %v3665
    %3823 = vmatprep.subr.bf16.mxu0 0
    %3824 = vmatpush2.bf16.msra.mxu0 %v3664
    %3825 = vmatprep.subr.bf16.mxu0 0
    %3826 = vmatpush2.bf16.msra.mxu0 %v3663
    %3827 = vmatprep.subr.bf16.mxu0 0
    %3828 = vmatpush2.bf16.msra.mxu0 %v3662
    %3829 = vmatprep.subr.bf16.mxu0 0
    %3830 = vmatpush2.bf16.msra.mxu0 %v3661
    %3831 = vmatprep.subr.bf16.mxu0 0
    %3832 = vmatpush2.bf16.msra.mxu0 %v3660
    %3833 = vmatprep.subr.bf16.mxu0 0
    %3834 = vmatpush2.bf16.msra.mxu0 %v3659
    %3835 = vmatprep.mubr.bf16.mxu0 %v3239
    %3836 = vmatmul.mubr.bf16.gmra.mxu0 %v3238
    %v3837 = vpop.f32.mrf.mxu0
    %v3838 = vadd.f32 %v3798, %v3837
    %v3839 = vpop.f32.mrf.mxu0
    %v3840 = vpop.f32.mrf.mxu0
    %v3841 = vpop.f32.mrf.mxu0
    %3842 = vdwg.mxu0
    %3843 = vmatprep.subr.bf16.mxu0 0
    %3844 = vmatpush1.bf16.msra.mxu0 %v3674
    %3845 = vmatprep.subr.bf16.mxu0 0
    %3846 = vmatpush1.bf16.msra.mxu0 %v3673
    %3847 = vmatprep.subr.bf16.mxu0 0
    %3848 = vmatpush1.bf16.msra.mxu0 %v3672
    %3849 = vmatprep.subr.bf16.mxu0 0
    %3850 = vmatpush1.bf16.msra.mxu0 %v3671
    %3851 = vmatprep.subr.bf16.mxu0 0
    %3852 = vmatpush1.bf16.msra.mxu0 %v3670
    %3853 = vmatprep.subr.bf16.mxu0 0
    %3854 = vmatpush1.bf16.msra.mxu0 %v3669
    %3855 = vmatprep.subr.bf16.mxu0 0
    %3856 = vmatpush1.bf16.msra.mxu0 %v3668
    %3857 = vmatprep.subr.bf16.mxu0 0
    %3858 = vmatpush1.bf16.msra.mxu0 %v3667
    %3859 = vmatprep.subr.bf16.mxu0 0
    %3860 = vmatpush2.bf16.msra.mxu0 %v3682
    %3861 = vmatprep.subr.bf16.mxu0 0
    %3862 = vmatpush2.bf16.msra.mxu0 %v3681
    %3863 = vmatprep.subr.bf16.mxu0 0
    %3864 = vmatpush2.bf16.msra.mxu0 %v3680
    %3865 = vmatprep.subr.bf16.mxu0 0
    %3866 = vmatpush2.bf16.msra.mxu0 %v3679
    %3867 = vmatprep.subr.bf16.mxu0 0
    %3868 = vmatpush2.bf16.msra.mxu0 %v3678
    %3869 = vmatprep.subr.bf16.mxu0 0
    %3870 = vmatpush2.bf16.msra.mxu0 %v3677
    %3871 = vmatprep.subr.bf16.mxu0 0
    %3872 = vmatpush2.bf16.msra.mxu0 %v3676
    %3873 = vmatprep.subr.bf16.mxu0 0
    %3874 = vmatpush2.bf16.msra.mxu0 %v3675
    %3875 = vmatprep.mubr.bf16.mxu0 %v3241
    %3876 = vmatmul.mubr.bf16.gmra.mxu0 %v3240
    %v3877 = vpop.f32.mrf.mxu0
    %v3878 = vadd.f32 %v3838, %v3877
    %v3879 = vpop.f32.mrf.mxu0
    %v3880 = vpop.f32.mrf.mxu0
    %v3881 = vpop.f32.mrf.mxu0
    %3882 = vdwg.mxu0
    %3883 = vmatprep.subr.bf16.mxu0 0
    %3884 = vmatpush1.bf16.msra.mxu0 %v3690
    %3885 = vmatprep.subr.bf16.mxu0 0
    %3886 = vmatpush1.bf16.msra.mxu0 %v3689
    %3887 = vmatprep.subr.bf16.mxu0 0
    %3888 = vmatpush1.bf16.msra.mxu0 %v3688
    %3889 = vmatprep.subr.bf16.mxu0 0
    %3890 = vmatpush1.bf16.msra.mxu0 %v3687
    %3891 = vmatprep.subr.bf16.mxu0 0
    %3892 = vmatpush1.bf16.msra.mxu0 %v3686
    %3893 = vmatprep.subr.bf16.mxu0 0
    %3894 = vmatpush1.bf16.msra.mxu0 %v3685
    %3895 = vmatprep.subr.bf16.mxu0 0
    %3896 = vmatpush1.bf16.msra.mxu0 %v3684
    %3897 = vmatprep.subr.bf16.mxu0 0
    %3898 = vmatpush1.bf16.msra.mxu0 %v3683
    %3899 = vmatprep.subr.bf16.mxu0 0
    %3900 = vmatpush2.bf16.msra.mxu0 %v3698
    %3901 = vmatprep.subr.bf16.mxu0 0
    %3902 = vmatpush2.bf16.msra.mxu0 %v3697
    %3903 = vmatprep.subr.bf16.mxu0 0
    %3904 = vmatpush2.bf16.msra.mxu0 %v3696
    %3905 = vmatprep.subr.bf16.mxu0 0
    %3906 = vmatpush2.bf16.msra.mxu0 %v3695
    %3907 = vmatprep.subr.bf16.mxu0 0
    %3908 = vmatpush2.bf16.msra.mxu0 %v3694
    %3909 = vmatprep.subr.bf16.mxu0 0
    %3910 = vmatpush2.bf16.msra.mxu0 %v3693
    %3911 = vmatprep.subr.bf16.mxu0 0
    %3912 = vmatpush2.bf16.msra.mxu0 %v3692
    %3913 = vmatprep.subr.bf16.mxu0 0
    %3914 = vmatpush2.bf16.msra.mxu0 %v3691
    %3915 = vmatprep.mubr.bf16.mxu0 %v3243
    %3916 = vmatmul.mubr.bf16.gmra.mxu0 %v3242
    %v3917 = vpop.f32.mrf.mxu0
    %v3918 = vadd.f32 %v3878, %v3917
    %v3919 = vpop.f32.mrf.mxu0
    %v3920 = vpop.f32.mrf.mxu0
    %v3921 = vpop.f32.mrf.mxu0
    %3922 = vdwg.mxu0
    %3923 = vst [vmem:[#allocation10] sm:$0xff] %v3918
    // Predicated region
    $region38: #{net1_forward.1} parent=1 // pred_check
      _
    $region39: #{net1_forward.1} parent=1 // pred_check_branch
      %3925 = sbr.rel (0) target = $region41
    $region40: #{net1_forward.1} parent=1 // pred_region
      %s3927 = ssub.s32 128, 32
      %3928 = vsyncadd [#allocation4], %s3927
      %s3929 = sshll.u32 [#allocation10], 4
      %s3930 = int_to_ptr.vmem [resolvable:$true] %s3929
      %3935 = dma.vmem_to_hbm [thread:$0]  %s3930, 32, %s5, [#allocation4], 32, 32, 2
    $region41: #{net1_forward.1} parent=1 // pred_fallthru
      _
    // Predicated region
    $region42: #{net1_forward.1} parent=1 // pred_check
      _
    $region43: #{net1_forward.1} parent=1 // pred_check_branch
      %3937 = sbr.rel (0) target = $region45
    $region44: #{net1_forward.1} parent=1 // pred_region
      %3938 = dma.done [#allocation4], 128
    $region45: #{net1_forward.1} parent=1 // pred_fallthru
      _
    %3939 = vsyncpa [#allocation3], 1
    %3940 = vsyncpa [#allocation6], 1
    %3941 = vsyncpa [#allocation9], 1
    %3942 = vsyncpa [#allocation4], 1

</llo_original>
